<compile_context>
chip_gen: v6e
topology: v6e:2x2x1
jax: 0.10.0
libtpu: 0.0.40
codegen_flags: <defaults>
</compile_context>

<pallas_src>
import functools

import jax
import jax.numpy as jnp
from jax.experimental import pallas as pl
from jax.experimental.pallas import tpu as pltpu

D_MODEL = 64
NHEAD = 4
DIM_FF = 128
NUM_LAYERS = 2
LN_EPS = 1e-5
NEG_INF = -1e30
OUT_LANE_PAD = 128   # lane-pad classifier output; sliced back to num_classes outside


def _layer_norm(h, gamma, beta):
    mu = jnp.mean(h, axis=-1, keepdims=True)
    var = jnp.mean((h - mu) ** 2, axis=-1, keepdims=True)
    return (h - mu) * jax.lax.rsqrt(var + LN_EPS) * gamma + beta


def _tail_layout(desc_dim, d_model):
    """Row layout of the packed descriptor-MLP / classifier slab (lanes = 128)."""
    layout = {}
    off = 0
    for name, nrows, ncols in (
            ('wd1', desc_dim, 32), ('bd1', 1, 32),
            ('wd2', 32, 32), ('bd2', 1, 32),
            ('wc1s', d_model, 64), ('wc1d', 32, 64), ('bc1', 1, 64),
            ('wc2', 64, OUT_LANE_PAD), ('bc2', 1, OUT_LANE_PAD)):
        layout[name] = (off, off + nrows, ncols)
        off += nrows
    padded_rows = ((off + 7) // 8) * 8
    return layout, padded_rows


# --------------------------------------------------------------------------
# Fused Pallas kernel: per batch element, 2 encoder layers + pool + heads
# --------------------------------------------------------------------------
def m3t_kernel(x_ref, keep_ref, desc_ref,
               wqkv_ref, bqkv_ref, wo_ref, w1_ref, w2_ref,
               vec_ref, tail_ref, out_ref):
    _, S, D = x_ref.shape
    L = wqkv_ref.shape[0]
    H = NHEAD
    Dh = D // H
    FF = w1_ref.shape[2]
    desc_dim = desc_ref.shape[2]

    x = x_ref[0]                         # (S, D) f32, this sequence
    keep = keep_ref[0]                   # (1, S) f32, 1.0 = real token
    key_ok = keep > 0.5                  # (1, S) bool, key-padding mask (cols)

    for l in range(L):                   # static layer loop; x stays in vregs/VMEM
        vec_l = vec_ref[l]               # (8, 128) packed per-layer vectors
        bo = vec_l[0:1, :D]
        g1 = vec_l[1:2, :D]
        be1 = vec_l[2:3, :D]
        bf1 = vec_l[3:4, :FF]
        bf2 = vec_l[4:5, :D]
        g2 = vec_l[5:6, :D]
        be2 = vec_l[6:7, :D]

        # ---- fused QKV projection: one (S,D)@(D,3D) bf16 matmul -------------
        xb = x.astype(jnp.bfloat16)
        qkv = jnp.dot(xb, wqkv_ref[l],
                      preferred_element_type=jnp.float32) + bqkv_ref[l]   # (S, 3D)

        # ---- per-head attention (static loop), 1/sqrt(Dh) folded into wq ----
        heads = []
        for h in range(H):
            qh = qkv[:, h * Dh:(h + 1) * Dh].astype(jnp.bfloat16)
            kh = qkv[:, D + h * Dh:D + (h + 1) * Dh].astype(jnp.bfloat16)
            vh = qkv[:, 2 * D + h * Dh:2 * D + (h + 1) * Dh].astype(jnp.bfloat16)
            s = jax.lax.dot_general(qh, kh, (((1,), (1,)), ((), ())),
                                    preferred_element_type=jnp.float32)   # (S, S)
            s = jnp.where(key_ok, s, NEG_INF)          # key-padding mask (columns)
            s = s - jnp.max(s, axis=-1, keepdims=True)
            p = jnp.exp(s)
            p = p * pl.reciprocal(jnp.sum(p, axis=-1, keepdims=True), approx=True)
            heads.append(jnp.dot(p.astype(jnp.bfloat16), vh,
                                 preferred_element_type=jnp.float32))     # (S, Dh)

        # ---- fused out-projection: one (S,D)@(D,D) matmul --------------------
        ctx = jnp.concatenate(heads, axis=-1)                              # (S, D)
        attn = jnp.dot(ctx.astype(jnp.bfloat16), wo_ref[l],
                       preferred_element_type=jnp.float32) + bo

        x1 = _layer_norm(x + attn, g1, be1)                                # post-LN 1

        # ---- FFN (ReLU); dropout identity in eval mode -----------------------
        ff = jnp.maximum(jnp.dot(x1.astype(jnp.bfloat16), w1_ref[l],
                                 preferred_element_type=jnp.float32) + bf1, 0.0)
        ff = jnp.dot(ff.astype(jnp.bfloat16), w2_ref[l],
                     preferred_element_type=jnp.float32) + bf2

        x = _layer_norm(x1 + ff, g2, be2)                                  # post-LN 2

    # ---- masked mean pooling built in-kernel from the keep vector -----------
    seq_sum = jnp.dot(keep, x, preferred_element_type=jnp.float32)         # (1, D)
    cnt = jnp.sum(keep, axis=-1, keepdims=True)                            # (1, 1)
    seq_feat = seq_sum / cnt

    # ---- descriptor MLP + classifier from the packed tail slab --------------
    layout, _ = _tail_layout(desc_dim, D)

    def tslice(name):
        r0, r1, c = layout[name]
        return tail_ref[r0:r1, 0:c]

    desc = desc_ref[0]                                                     # (1, desc_dim)
    d1 = jnp.maximum(jnp.dot(desc, tslice('wd1'),
                             preferred_element_type=jnp.float32) + tslice('bd1'), 0.0)
    d2 = jnp.dot(d1, tslice('wd2'),
                 preferred_element_type=jnp.float32) + tslice('bd2')       # (1, 32)

    # concat([seq, desc]) @ W == seq @ W_seq + desc @ W_desc
    hc = (jnp.dot(seq_feat, tslice('wc1s'), preferred_element_type=jnp.float32)
          + jnp.dot(d2, tslice('wc1d'), preferred_element_type=jnp.float32)
          + tslice('bc1'))
    hc = jnp.maximum(hc, 0.0)
    # TODO(synk): nn.Dropout(0.1) is identity in eval mode; no stochastic path.
    out_ref[0] = (jnp.dot(hc, tslice('wc2'), preferred_element_type=jnp.float32)
                  + tslice('bc2'))                                         # (1, 128)


# --------------------------------------------------------------------------
# Parameter init (natural x @ W layout) and packing into kernel layout
# --------------------------------------------------------------------------
def init_params(key, vocab_size, desc_dim, num_classes,
                d_model=D_MODEL, num_layers=NUM_LAYERS, dim_ff=DIM_FF, max_len=100):
    keys = iter(jax.random.split(key, 64))

    def nrm(shape, scale=0.05):
        return scale * jax.random.normal(next(keys), shape, jnp.float32)

    params = {
        'emb': nrm((vocab_size, d_model), 1.0),   # nn.Embedding weight
        'pos': nrm((max_len, d_model), 1.0),      # pos_encoding Parameter
        'layers': [],
    }
    for _ in range(num_layers):
        params['layers'].append(dict(
            wq=nrm((d_model, d_model)), bq=nrm((1, d_model)),
            wk=nrm((d_model, d_model)), bk=nrm((1, d_model)),
            wv=nrm((d_model, d_model)), bv=nrm((1, d_model)),
            wo=nrm((d_model, d_model)), bo=nrm((1, d_model)),
            ln1_g=jnp.ones((1, d_model), jnp.float32),
            ln1_b=jnp.zeros((1, d_model), jnp.float32),
            w1=nrm((d_model, dim_ff)), b1=nrm((1, dim_ff)),
            w2=nrm((dim_ff, d_model)), b2=nrm((1, d_model)),
            ln2_g=jnp.ones((1, d_model), jnp.float32),
            ln2_b=jnp.zeros((1, d_model), jnp.float32),
        ))
    params['wd1'] = nrm((desc_dim, 32)); params['bd1'] = nrm((1, 32))
    params['wd2'] = nrm((32, 32));       params['bd2'] = nrm((1, 32))
    params['wc1s'] = nrm((d_model, 64))  # classifier L1 rows acting on seq features
    params['wc1d'] = nrm((32, 64))       # classifier L1 rows acting on desc features
    params['bc1'] = nrm((1, 64))
    params['wc2'] = nrm((64, num_classes)); params['bc2'] = nrm((1, num_classes))
    return params


def pack_params(params):
    """One-time repack: fused QKV (scale folded in), bf16 weights, packed vector slabs."""
    layers = params['layers']
    L = len(layers)
    D = layers[0]['wq'].shape[0]
    Dh = D // NHEAD
    FF = layers[0]['w1'].shape[1]
    scale = 1.0 / (Dh ** 0.5)

    wqkv = jnp.stack([jnp.concatenate([lp['wq'] * scale, lp['wk'], lp['wv']], axis=1)
                      for lp in layers]).astype(jnp.bfloat16)              # (L, D, 3D)
    bqkv = jnp.stack([jnp.concatenate([lp['bq'] * scale, lp['bk'], lp['bv']], axis=1)
                      for lp in layers]).astype(jnp.float32)               # (L, 1, 3D)
    wo = jnp.stack([lp['wo'] for lp in layers]).astype(jnp.bfloat16)       # (L, D, D)
    w1 = jnp.stack([lp['w1'] for lp in layers]).astype(jnp.bfloat16)       # (L, D, FF)
    w2 = jnp.stack([lp['w2'] for lp in layers]).astype(jnp.bfloat16)       # (L, FF, D)

    # all per-layer 1-D params in one lane-dense (L, 8, 128) slab
    vec = jnp.zeros((L, 8, 128), jnp.float32)
    for l, lp in enumerate(layers):
        vec = vec.at[l, 0, :D].set(lp['bo'][0])
        vec = vec.at[l, 1, :D].set(lp['ln1_g'][0])
        vec = vec.at[l, 2, :D].set(lp['ln1_b'][0])
        vec = vec.at[l, 3, :FF].set(lp['b1'][0])
        vec = vec.at[l, 4, :D].set(lp['b2'][0])
        vec = vec.at[l, 5, :D].set(lp['ln2_g'][0])
        vec = vec.at[l, 6, :D].set(lp['ln2_b'][0])

    # descriptor MLP + classifier packed into one (rows, 128) slab
    desc_dim = params['wd1'].shape[0]
    layout, rows = _tail_layout(desc_dim, D)
    tail = jnp.zeros((rows, 128), jnp.float32)
    for name, arr in (('wd1', params['wd1']), ('bd1', params['bd1']),
                      ('wd2', params['wd2']), ('bd2', params['bd2']),
                      ('wc1s', params['wc1s']), ('wc1d', params['wc1d']),
                      ('bc1', params['bc1']), ('wc2', params['wc2']),
                      ('bc2', params['bc2'])):
        r0, _, _ = layout[name]
        tail = tail.at[r0:r0 + arr.shape[0], :arr.shape[1]].set(arr.astype(jnp.float32))

    return dict(emb=params['emb'], pos=params['pos'],
                wqkv=wqkv, bqkv=bqkv, wo=wo, w1=w1, w2=w2, vec=vec, tail=tail)


# --------------------------------------------------------------------------
# Full forward (glue in plain JAX: embedding gather, pos-add, keep vector)
# --------------------------------------------------------------------------
@functools.partial(jax.jit, static_argnames=('num_classes',))
def simplified_m3t_forward(kp, sequences, descriptors, *, num_classes):
    B, S = sequences.shape
    D = kp['emb'].shape[1]
    L = kp['wqkv'].shape[0]
    FF = kp['w1'].shape[2]
    desc_dim = descriptors.shape[1]
    Dh = D // NHEAD

    # embedding lookup + positional encoding (gather stays outside the kernel)
    x0 = (kp['emb'][sequences] + kp['pos'][:S][None, :, :]).astype(jnp.float32)  # (B,S,D)

    # PyTorch semantics: a row is "padding" iff (embedding + pos) sums to exactly 0
    pad = jnp.sum(x0, axis=-1) == 0.0                   # (B, S) bool, True = pad
    keep = (~pad).astype(jnp.float32).reshape(B, 1, S)  # O(S) keep vector per sequence
    desc3 = descriptors.astype(jnp.float32).reshape(B, 1, desc_dim)

    args = (x0, keep, desc3, kp['wqkv'], kp['bqkv'], kp['wo'],
            kp['w1'], kp['w2'], kp['vec'], kp['tail'])

    # advisory cost estimate for the XLA scheduler
    per_layer = (2 * S * D * 3 * D + NHEAD * (2 * S * S * Dh + 2 * S * S * Dh)
                 + 2 * S * D * D + 2 * S * D * FF + 2 * S * FF * D)
    per_seq = (L * per_layer + 2 * S * D
               + 2 * desc_dim * 32 + 2 * 32 * 32
               + 2 * D * 64 + 2 * 32 * 64 + 2 * 64 * OUT_LANE_PAD)
    bytes_accessed = (sum(int(a.size) * a.dtype.itemsize for a in args)
                      + B * OUT_LANE_PAD * 4)
    cost = pl.CostEstimate(flops=int(B * per_seq),
                           transcendentals=int(B * L * NHEAD * S * S),
                           bytes_accessed=int(bytes_accessed))

    vec_rows = kp['vec'].shape[1]
    tail_rows = kp['tail'].shape[0]

    out = pl.pallas_call(
        m3t_kernel,
        out_shape=jax.ShapeDtypeStruct((B, 1, OUT_LANE_PAD), jnp.float32),
        grid=(B,),
        in_specs=[
            pl.BlockSpec((1, S, D), lambda b: (b, 0, 0)),                  # x (per seq)
            pl.BlockSpec((1, 1, S), lambda b: (b, 0, 0)),                  # keep vector
            pl.BlockSpec((1, 1, desc_dim), lambda b: (b, 0, 0)),           # descriptors
            pl.BlockSpec((L, D, 3 * D), lambda b: (0, 0, 0)),              # fused QKV w
            pl.BlockSpec((L, 1, 3 * D), lambda b: (0, 0, 0)),              # fused QKV b
            pl.BlockSpec((L, D, D), lambda b: (0, 0, 0)),                  # out-proj w
            pl.BlockSpec((L, D, FF), lambda b: (0, 0, 0)),                 # ffn w1
            pl.BlockSpec((L, FF, D), lambda b: (0, 0, 0)),                 # ffn w2
            pl.BlockSpec((L, vec_rows, 128), lambda b: (0, 0, 0)),         # packed vectors
            pl.BlockSpec((tail_rows, 128), lambda b: (0, 0)),              # desc/cls slab
        ],
        out_specs=pl.BlockSpec((1, 1, OUT_LANE_PAD), lambda b: (b, 0, 0)),
        compiler_params=pltpu.CompilerParams(
            dimension_semantics=("parallel",),          # v7x: split batch over 2 TCs
            vmem_limit_bytes=32 * 1024 * 1024),
        cost_estimate=cost,
    )(*args)
    return out[:, 0, :num_classes]


if __name__ == "__main__":
    vocab_size, desc_dim, num_classes = 20, 10, 3
    B, S = 2, 8

    root = jax.random.PRNGKey(0)
    k_params, k_seq, k_desc = jax.random.split(root, 3)

    params = init_params(k_params, vocab_size, desc_dim, num_classes)
    kparams = pack_params(params)   # one-time repack into kernel layout (outside jit)

    sequences = jax.random.randint(k_seq, (B, S), 1, vocab_size, dtype=jnp.int32)
    descriptors = jax.random.normal(k_desc, (B, desc_dim), jnp.float32)

    logits = simplified_m3t_forward(kparams, sequences, descriptors,
                                    num_classes=num_classes)
    jax.block_until_ready(logits)
    assert logits.shape == (B, num_classes)
    print("KERNEL_OK")
</pallas_src>

<mosaic_0001>
module attributes {stable_mosaic.version = 11 : i64} {
  func.func @m3t_kernel(%arg0: i32, %arg1: memref<1x8x64xf32, #tpu.memory_space<vmem>>, %arg2: memref<1x1x8xf32, #tpu.memory_space<vmem>>, %arg3: memref<1x1x10xf32, #tpu.memory_space<vmem>>, %arg4: memref<2x64x192xbf16, #tpu.memory_space<vmem>>, %arg5: memref<2x1x192xf32, #tpu.memory_space<vmem>>, %arg6: memref<2x64x64xbf16, #tpu.memory_space<vmem>>, %arg7: memref<2x64x128xbf16, #tpu.memory_space<vmem>>, %arg8: memref<2x128x64xbf16, #tpu.memory_space<vmem>>, %arg9: memref<2x8x128xf32, #tpu.memory_space<vmem>>, %arg10: memref<208x128xf32, #tpu.memory_space<vmem>>, %arg11: memref<1x1x128xf32, #tpu.memory_space<vmem>>) attributes {dimension_semantics = [#tpu.dimension_semantics<parallel>], iteration_bounds = array<i64: 2>, scalar_prefetch = 0 : i64, scratch_operands = 0 : i64, tpu.core_type = #tpu.core_type<tc>, window_params = [{transform_indices = @transform_0, window_bounds = array<i64: 1, 8, 64>}, {transform_indices = @transform_1, window_bounds = array<i64: 1, 1, 8>}, {transform_indices = @transform_2, window_bounds = array<i64: 1, 1, 10>}, {pipeline_mode = #tpu.pipeline_mode<synchronous>, transform_indices = @transform_3, window_bounds = array<i64: 2, 64, 192>}, {pipeline_mode = #tpu.pipeline_mode<synchronous>, transform_indices = @transform_4, window_bounds = array<i64: 2, 1, 192>}, {pipeline_mode = #tpu.pipeline_mode<synchronous>, transform_indices = @transform_5, window_bounds = array<i64: 2, 64, 64>}, {pipeline_mode = #tpu.pipeline_mode<synchronous>, transform_indices = @transform_6, window_bounds = array<i64: 2, 64, 128>}, {pipeline_mode = #tpu.pipeline_mode<synchronous>, transform_indices = @transform_7, window_bounds = array<i64: 2, 128, 64>}, {pipeline_mode = #tpu.pipeline_mode<synchronous>, transform_indices = @transform_8, window_bounds = array<i64: 2, 8, 128>}, {pipeline_mode = #tpu.pipeline_mode<synchronous>, transform_indices = @transform_9, window_bounds = array<i64: 208, 128>}, {transform_indices = @transform_10, window_bounds = array<i64: 1, 1, 128>}]} {
    %c0 = arith.constant 0 : index
    %c0_0 = arith.constant 0 : index
    %c0_1 = arith.constant 0 : index
    %0 = vector.load %arg1[%c0, %c0_0, %c0_1] : memref<1x8x64xf32, #tpu.memory_space<vmem>>, vector<1x8x64xf32>
    %1 = vector.shape_cast %0 : vector<1x8x64xf32> to vector<8x64xf32>
    %c0_2 = arith.constant 0 : index
    %c0_3 = arith.constant 0 : index
    %c0_4 = arith.constant 0 : index
    %2 = vector.load %arg2[%c0_2, %c0_3, %c0_4] : memref<1x1x8xf32, #tpu.memory_space<vmem>>, vector<1x1x8xf32>
    %3 = vector.shape_cast %2 : vector<1x1x8xf32> to vector<1x8xf32>
    %cst = arith.constant 5.000000e-01 : f32
    %4 = vector.broadcast %cst : f32 to vector<1x8xf32>
    %5 = arith.cmpf ogt, %3, %4 : vector<1x8xf32>
    %c0_5 = arith.constant 0 : index
    %c0_6 = arith.constant 0 : index
    %c0_7 = arith.constant 0 : index
    %6 = vector.load %arg9[%c0_5, %c0_6, %c0_7] : memref<2x8x128xf32, #tpu.memory_space<vmem>>, vector<1x8x128xf32>
    %7 = vector.shape_cast %6 : vector<1x8x128xf32> to vector<8x128xf32>
    %8 = vector.extract_strided_slice %7 {offsets = [0, 0], sizes = [1, 64], strides = [1, 1]} : vector<8x128xf32> to vector<1x64xf32>
    %9 = vector.extract_strided_slice %7 {offsets = [1, 0], sizes = [1, 64], strides = [1, 1]} : vector<8x128xf32> to vector<1x64xf32>
    %10 = vector.extract_strided_slice %7 {offsets = [2, 0], sizes = [1, 64], strides = [1, 1]} : vector<8x128xf32> to vector<1x64xf32>
    %11 = vector.extract_strided_slice %7 {offsets = [3, 0], sizes = [1, 128], strides = [1, 1]} : vector<8x128xf32> to vector<1x128xf32>
    %12 = vector.extract_strided_slice %7 {offsets = [4, 0], sizes = [1, 64], strides = [1, 1]} : vector<8x128xf32> to vector<1x64xf32>
    %13 = vector.extract_strided_slice %7 {offsets = [5, 0], sizes = [1, 64], strides = [1, 1]} : vector<8x128xf32> to vector<1x64xf32>
    %14 = vector.extract_strided_slice %7 {offsets = [6, 0], sizes = [1, 64], strides = [1, 1]} : vector<8x128xf32> to vector<1x64xf32>
    %15 = arith.truncf %1 : vector<8x64xf32> to vector<8x64xbf16>
    %c0_8 = arith.constant 0 : index
    %c0_9 = arith.constant 0 : index
    %c0_10 = arith.constant 0 : index
    %16 = vector.load %arg4[%c0_8, %c0_9, %c0_10] : memref<2x64x192xbf16, #tpu.memory_space<vmem>>, vector<1x64x192xbf16>
    %17 = vector.shape_cast %16 : vector<1x64x192xbf16> to vector<64x192xbf16>
    %cst_11 = arith.constant dense<0.000000e+00> : vector<8x192xf32>
    %18 = tpu.matmul %15, %17, %cst_11 {dimension_numbers = #tpu.dot_dimension_numbers<[1], [0], [0], [1], [0, 0, 1, 1], [], []>} : vector<8x64xbf16>, vector<64x192xbf16>, vector<8x192xf32> -> vector<8x192xf32>
    %c0_12 = arith.constant 0 : index
    %c0_13 = arith.constant 0 : index
    %c0_14 = arith.constant 0 : index
    %19 = vector.load %arg5[%c0_12, %c0_13, %c0_14] : memref<2x1x192xf32, #tpu.memory_space<vmem>>, vector<1x1x192xf32>
    %20 = vector.shape_cast %19 : vector<1x1x192xf32> to vector<1x192xf32>
    %21 = vector.broadcast %20 : vector<1x192xf32> to vector<8x192xf32>
    %22 = arith.addf %18, %21 : vector<8x192xf32>
    %23 = vector.extract_strided_slice %22 {offsets = [0, 0], sizes = [8, 16], strides = [1, 1]} : vector<8x192xf32> to vector<8x16xf32>
    %24 = arith.truncf %23 : vector<8x16xf32> to vector<8x16xbf16>
    %25 = vector.extract_strided_slice %22 {offsets = [0, 64], sizes = [8, 16], strides = [1, 1]} : vector<8x192xf32> to vector<8x16xf32>
    %26 = arith.truncf %25 : vector<8x16xf32> to vector<8x16xbf16>
    %27 = vector.extract_strided_slice %22 {offsets = [0, 128], sizes = [8, 16], strides = [1, 1]} : vector<8x192xf32> to vector<8x16xf32>
    %28 = arith.truncf %27 : vector<8x16xf32> to vector<8x16xbf16>
    %cst_15 = arith.constant dense<0.000000e+00> : vector<8x8xf32>
    %29 = tpu.matmul %24, %26, %cst_15 {dimension_numbers = #tpu.dot_dimension_numbers<[1], [1], [0], [0], [0, 0, 1, 0], [], []>} : vector<8x16xbf16>, vector<8x16xbf16>, vector<8x8xf32> -> vector<8x8xf32>
    %cst_16 = arith.constant -1.000000e+30 : f32
    %30 = vector.shape_cast %5 : vector<1x8xi1> to vector<1x8xi1>
    %31 = vector.broadcast %30 : vector<1x8xi1> to vector<8x8xi1>
    %32 = vector.broadcast %cst_16 : f32 to vector<8x8xf32>
    %33 = arith.select %31, %29, %32 : vector<8x8xi1>, vector<8x8xf32>
    %cst_17 = arith.constant dense<0xFF800000> : vector<8xf32>
    %34 = vector.multi_reduction <maximumf>, %33, %cst_17 [1] : vector<8x8xf32> to vector<8xf32>
    %35 = vector.shape_cast %34 : vector<8xf32> to vector<8x1xf32>
    %36 = vector.broadcast %35 : vector<8x1xf32> to vector<8x8xf32>
    %37 = arith.subf %33, %36 : vector<8x8xf32>
    %38 = math.exp %37 : vector<8x8xf32>
    %cst_18 = arith.constant dense<0.000000e+00> : vector<8xf32>
    %39 = vector.multi_reduction <add>, %38, %cst_18 [1] : vector<8x8xf32> to vector<8xf32>
    %40 = vector.shape_cast %39 : vector<8xf32> to vector<8x1xf32>
    %41 = tpu.reciprocal %40 {approx = true} : vector<8x1xf32> -> vector<8x1xf32>
    %42 = vector.broadcast %41 : vector<8x1xf32> to vector<8x8xf32>
    %43 = arith.mulf %38, %42 : vector<8x8xf32>
    %44 = arith.truncf %43 : vector<8x8xf32> to vector<8x8xbf16>
    %cst_19 = arith.constant dense<0.000000e+00> : vector<8x16xf32>
    %45 = tpu.matmul %44, %28, %cst_19 {dimension_numbers = #tpu.dot_dimension_numbers<[1], [0], [0], [1], [0, 0, 1, 1], [], []>} : vector<8x8xbf16>, vector<8x16xbf16>, vector<8x16xf32> -> vector<8x16xf32>
    %46 = vector.extract_strided_slice %22 {offsets = [0, 16], sizes = [8, 16], strides = [1, 1]} : vector<8x192xf32> to vector<8x16xf32>
    %47 = arith.truncf %46 : vector<8x16xf32> to vector<8x16xbf16>
    %48 = vector.extract_strided_slice %22 {offsets = [0, 80], sizes = [8, 16], strides = [1, 1]} : vector<8x192xf32> to vector<8x16xf32>
    %49 = arith.truncf %48 : vector<8x16xf32> to vector<8x16xbf16>
    %50 = vector.extract_strided_slice %22 {offsets = [0, 144], sizes = [8, 16], strides = [1, 1]} : vector<8x192xf32> to vector<8x16xf32>
    %51 = arith.truncf %50 : vector<8x16xf32> to vector<8x16xbf16>
    %cst_20 = arith.constant dense<0.000000e+00> : vector<8x8xf32>
    %52 = tpu.matmul %47, %49, %cst_20 {dimension_numbers = #tpu.dot_dimension_numbers<[1], [1], [0], [0], [0, 0, 1, 0], [], []>} : vector<8x16xbf16>, vector<8x16xbf16>, vector<8x8xf32> -> vector<8x8xf32>
    %cst_21 = arith.constant -1.000000e+30 : f32
    %53 = vector.shape_cast %5 : vector<1x8xi1> to vector<1x8xi1>
    %54 = vector.broadcast %53 : vector<1x8xi1> to vector<8x8xi1>
    %55 = vector.broadcast %cst_21 : f32 to vector<8x8xf32>
    %56 = arith.select %54, %52, %55 : vector<8x8xi1>, vector<8x8xf32>
    %cst_22 = arith.constant dense<0xFF800000> : vector<8xf32>
    %57 = vector.multi_reduction <maximumf>, %56, %cst_22 [1] : vector<8x8xf32> to vector<8xf32>
    %58 = vector.shape_cast %57 : vector<8xf32> to vector<8x1xf32>
    %59 = vector.broadcast %58 : vector<8x1xf32> to vector<8x8xf32>
    %60 = arith.subf %56, %59 : vector<8x8xf32>
    %61 = math.exp %60 : vector<8x8xf32>
    %cst_23 = arith.constant dense<0.000000e+00> : vector<8xf32>
    %62 = vector.multi_reduction <add>, %61, %cst_23 [1] : vector<8x8xf32> to vector<8xf32>
    %63 = vector.shape_cast %62 : vector<8xf32> to vector<8x1xf32>
    %64 = tpu.reciprocal %63 {approx = true} : vector<8x1xf32> -> vector<8x1xf32>
    %65 = vector.broadcast %64 : vector<8x1xf32> to vector<8x8xf32>
    %66 = arith.mulf %61, %65 : vector<8x8xf32>
    %67 = arith.truncf %66 : vector<8x8xf32> to vector<8x8xbf16>
    %cst_24 = arith.constant dense<0.000000e+00> : vector<8x16xf32>
    %68 = tpu.matmul %67, %51, %cst_24 {dimension_numbers = #tpu.dot_dimension_numbers<[1], [0], [0], [1], [0, 0, 1, 1], [], []>} : vector<8x8xbf16>, vector<8x16xbf16>, vector<8x16xf32> -> vector<8x16xf32>
    %69 = vector.extract_strided_slice %22 {offsets = [0, 32], sizes = [8, 16], strides = [1, 1]} : vector<8x192xf32> to vector<8x16xf32>
    %70 = arith.truncf %69 : vector<8x16xf32> to vector<8x16xbf16>
    %71 = vector.extract_strided_slice %22 {offsets = [0, 96], sizes = [8, 16], strides = [1, 1]} : vector<8x192xf32> to vector<8x16xf32>
    %72 = arith.truncf %71 : vector<8x16xf32> to vector<8x16xbf16>
    %73 = vector.extract_strided_slice %22 {offsets = [0, 160], sizes = [8, 16], strides = [1, 1]} : vector<8x192xf32> to vector<8x16xf32>
    %74 = arith.truncf %73 : vector<8x16xf32> to vector<8x16xbf16>
    %cst_25 = arith.constant dense<0.000000e+00> : vector<8x8xf32>
    %75 = tpu.matmul %70, %72, %cst_25 {dimension_numbers = #tpu.dot_dimension_numbers<[1], [1], [0], [0], [0, 0, 1, 0], [], []>} : vector<8x16xbf16>, vector<8x16xbf16>, vector<8x8xf32> -> vector<8x8xf32>
    %cst_26 = arith.constant -1.000000e+30 : f32
    %76 = vector.shape_cast %5 : vector<1x8xi1> to vector<1x8xi1>
    %77 = vector.broadcast %76 : vector<1x8xi1> to vector<8x8xi1>
    %78 = vector.broadcast %cst_26 : f32 to vector<8x8xf32>
    %79 = arith.select %77, %75, %78 : vector<8x8xi1>, vector<8x8xf32>
    %cst_27 = arith.constant dense<0xFF800000> : vector<8xf32>
    %80 = vector.multi_reduction <maximumf>, %79, %cst_27 [1] : vector<8x8xf32> to vector<8xf32>
    %81 = vector.shape_cast %80 : vector<8xf32> to vector<8x1xf32>
    %82 = vector.broadcast %81 : vector<8x1xf32> to vector<8x8xf32>
    %83 = arith.subf %79, %82 : vector<8x8xf32>
    %84 = math.exp %83 : vector<8x8xf32>
    %cst_28 = arith.constant dense<0.000000e+00> : vector<8xf32>
    %85 = vector.multi_reduction <add>, %84, %cst_28 [1] : vector<8x8xf32> to vector<8xf32>
    %86 = vector.shape_cast %85 : vector<8xf32> to vector<8x1xf32>
    %87 = tpu.reciprocal %86 {approx = true} : vector<8x1xf32> -> vector<8x1xf32>
    %88 = vector.broadcast %87 : vector<8x1xf32> to vector<8x8xf32>
    %89 = arith.mulf %84, %88 : vector<8x8xf32>
    %90 = arith.truncf %89 : vector<8x8xf32> to vector<8x8xbf16>
    %cst_29 = arith.constant dense<0.000000e+00> : vector<8x16xf32>
    %91 = tpu.matmul %90, %74, %cst_29 {dimension_numbers = #tpu.dot_dimension_numbers<[1], [0], [0], [1], [0, 0, 1, 1], [], []>} : vector<8x8xbf16>, vector<8x16xbf16>, vector<8x16xf32> -> vector<8x16xf32>
    %92 = vector.extract_strided_slice %22 {offsets = [0, 48], sizes = [8, 16], strides = [1, 1]} : vector<8x192xf32> to vector<8x16xf32>
    %93 = arith.truncf %92 : vector<8x16xf32> to vector<8x16xbf16>
    %94 = vector.extract_strided_slice %22 {offsets = [0, 112], sizes = [8, 16], strides = [1, 1]} : vector<8x192xf32> to vector<8x16xf32>
    %95 = arith.truncf %94 : vector<8x16xf32> to vector<8x16xbf16>
    %96 = vector.extract_strided_slice %22 {offsets = [0, 176], sizes = [8, 16], strides = [1, 1]} : vector<8x192xf32> to vector<8x16xf32>
    %97 = arith.truncf %96 : vector<8x16xf32> to vector<8x16xbf16>
    %cst_30 = arith.constant dense<0.000000e+00> : vector<8x8xf32>
    %98 = tpu.matmul %93, %95, %cst_30 {dimension_numbers = #tpu.dot_dimension_numbers<[1], [1], [0], [0], [0, 0, 1, 0], [], []>} : vector<8x16xbf16>, vector<8x16xbf16>, vector<8x8xf32> -> vector<8x8xf32>
    %cst_31 = arith.constant -1.000000e+30 : f32
    %99 = vector.shape_cast %5 : vector<1x8xi1> to vector<1x8xi1>
    %100 = vector.broadcast %99 : vector<1x8xi1> to vector<8x8xi1>
    %101 = vector.broadcast %cst_31 : f32 to vector<8x8xf32>
    %102 = arith.select %100, %98, %101 : vector<8x8xi1>, vector<8x8xf32>
    %cst_32 = arith.constant dense<0xFF800000> : vector<8xf32>
    %103 = vector.multi_reduction <maximumf>, %102, %cst_32 [1] : vector<8x8xf32> to vector<8xf32>
    %104 = vector.shape_cast %103 : vector<8xf32> to vector<8x1xf32>
    %105 = vector.broadcast %104 : vector<8x1xf32> to vector<8x8xf32>
    %106 = arith.subf %102, %105 : vector<8x8xf32>
    %107 = math.exp %106 : vector<8x8xf32>
    %cst_33 = arith.constant dense<0.000000e+00> : vector<8xf32>
    %108 = vector.multi_reduction <add>, %107, %cst_33 [1] : vector<8x8xf32> to vector<8xf32>
    %109 = vector.shape_cast %108 : vector<8xf32> to vector<8x1xf32>
    %110 = tpu.reciprocal %109 {approx = true} : vector<8x1xf32> -> vector<8x1xf32>
    %111 = vector.broadcast %110 : vector<8x1xf32> to vector<8x8xf32>
    %112 = arith.mulf %107, %111 : vector<8x8xf32>
    %113 = arith.truncf %112 : vector<8x8xf32> to vector<8x8xbf16>
    %cst_34 = arith.constant dense<0.000000e+00> : vector<8x16xf32>
    %114 = tpu.matmul %113, %97, %cst_34 {dimension_numbers = #tpu.dot_dimension_numbers<[1], [0], [0], [1], [0, 0, 1, 1], [], []>} : vector<8x8xbf16>, vector<8x16xbf16>, vector<8x16xf32> -> vector<8x16xf32>
    %115 = tpu.concatenate %45, %68, %91, %114 in 1 : vector<8x16xf32>, vector<8x16xf32>, vector<8x16xf32>, vector<8x16xf32> -> vector<8x64xf32>
    %116 = arith.truncf %115 : vector<8x64xf32> to vector<8x64xbf16>
    %c0_35 = arith.constant 0 : index
    %c0_36 = arith.constant 0 : index
    %c0_37 = arith.constant 0 : index
    %117 = vector.load %arg6[%c0_35, %c0_36, %c0_37] : memref<2x64x64xbf16, #tpu.memory_space<vmem>>, vector<1x64x64xbf16>
    %118 = vector.shape_cast %117 : vector<1x64x64xbf16> to vector<64x64xbf16>
    %cst_38 = arith.constant dense<0.000000e+00> : vector<8x64xf32>
    %119 = tpu.matmul %116, %118, %cst_38 {dimension_numbers = #tpu.dot_dimension_numbers<[1], [0], [0], [1], [0, 0, 1, 1], [], []>} : vector<8x64xbf16>, vector<64x64xbf16>, vector<8x64xf32> -> vector<8x64xf32>
    %120 = vector.broadcast %8 : vector<1x64xf32> to vector<8x64xf32>
    %121 = arith.addf %119, %120 : vector<8x64xf32>
    %122 = arith.addf %1, %121 : vector<8x64xf32>
    %cst_39 = arith.constant dense<0.000000e+00> : vector<8xf32>
    %123 = vector.multi_reduction <add>, %122, %cst_39 [1] : vector<8x64xf32> to vector<8xf32>
    %124 = vector.shape_cast %123 : vector<8xf32> to vector<8x1xf32>
    %cst_40 = arith.constant 6.400000e+01 : f32
    %125 = vector.broadcast %cst_40 : f32 to vector<8x1xf32>
    %126 = arith.divf %124, %125 : vector<8x1xf32>
    %127 = vector.broadcast %126 : vector<8x1xf32> to vector<8x64xf32>
    %128 = arith.subf %122, %127 : vector<8x64xf32>
    %129 = arith.mulf %128, %128 : vector<8x64xf32>
    %cst_41 = arith.constant dense<0.000000e+00> : vector<8xf32>
    %130 = vector.multi_reduction <add>, %129, %cst_41 [1] : vector<8x64xf32> to vector<8xf32>
    %131 = vector.shape_cast %130 : vector<8xf32> to vector<8x1xf32>
    %cst_42 = arith.constant 6.400000e+01 : f32
    %132 = vector.broadcast %cst_42 : f32 to vector<8x1xf32>
    %133 = arith.divf %131, %132 : vector<8x1xf32>
    %134 = vector.broadcast %126 : vector<8x1xf32> to vector<8x64xf32>
    %135 = arith.subf %122, %134 : vector<8x64xf32>
    %cst_43 = arith.constant 9.99999974E-6 : f32
    %136 = vector.broadcast %cst_43 : f32 to vector<8x1xf32>
    %137 = arith.addf %133, %136 : vector<8x1xf32>
    %138 = math.rsqrt %137 : vector<8x1xf32>
    %139 = vector.broadcast %138 : vector<8x1xf32> to vector<8x64xf32>
    %140 = arith.mulf %135, %139 : vector<8x64xf32>
    %141 = vector.broadcast %9 : vector<1x64xf32> to vector<8x64xf32>
    %142 = arith.mulf %140, %141 : vector<8x64xf32>
    %143 = vector.broadcast %10 : vector<1x64xf32> to vector<8x64xf32>
    %144 = arith.addf %142, %143 : vector<8x64xf32>
    %145 = arith.truncf %144 : vector<8x64xf32> to vector<8x64xbf16>
    %c0_44 = arith.constant 0 : index
    %c0_45 = arith.constant 0 : index
    %c0_46 = arith.constant 0 : index
    %146 = vector.load %arg7[%c0_44, %c0_45, %c0_46] : memref<2x64x128xbf16, #tpu.memory_space<vmem>>, vector<1x64x128xbf16>
    %147 = vector.shape_cast %146 : vector<1x64x128xbf16> to vector<64x128xbf16>
    %cst_47 = arith.constant dense<0.000000e+00> : vector<8x128xf32>
    %148 = tpu.matmul %145, %147, %cst_47 {dimension_numbers = #tpu.dot_dimension_numbers<[1], [0], [0], [1], [0, 0, 1, 1], [], []>} : vector<8x64xbf16>, vector<64x128xbf16>, vector<8x128xf32> -> vector<8x128xf32>
    %149 = vector.broadcast %11 : vector<1x128xf32> to vector<8x128xf32>
    %150 = arith.addf %148, %149 : vector<8x128xf32>
    %cst_48 = arith.constant 0.000000e+00 : f32
    %151 = vector.broadcast %cst_48 : f32 to vector<8x128xf32>
    %152 = arith.maximumf %150, %151 : vector<8x128xf32>
    %153 = arith.truncf %152 : vector<8x128xf32> to vector<8x128xbf16>
    %c0_49 = arith.constant 0 : index
    %c0_50 = arith.constant 0 : index
    %c0_51 = arith.constant 0 : index
    %154 = vector.load %arg8[%c0_49, %c0_50, %c0_51] : memref<2x128x64xbf16, #tpu.memory_space<vmem>>, vector<1x128x64xbf16>
    %155 = vector.shape_cast %154 : vector<1x128x64xbf16> to vector<128x64xbf16>
    %cst_52 = arith.constant dense<0.000000e+00> : vector<8x64xf32>
    %156 = tpu.matmul %153, %155, %cst_52 {dimension_numbers = #tpu.dot_dimension_numbers<[1], [0], [0], [1], [0, 0, 1, 1], [], []>} : vector<8x128xbf16>, vector<128x64xbf16>, vector<8x64xf32> -> vector<8x64xf32>
    %157 = vector.broadcast %12 : vector<1x64xf32> to vector<8x64xf32>
    %158 = arith.addf %156, %157 : vector<8x64xf32>
    %159 = arith.addf %144, %158 : vector<8x64xf32>
    %cst_53 = arith.constant dense<0.000000e+00> : vector<8xf32>
    %160 = vector.multi_reduction <add>, %159, %cst_53 [1] : vector<8x64xf32> to vector<8xf32>
    %161 = vector.shape_cast %160 : vector<8xf32> to vector<8x1xf32>
    %cst_54 = arith.constant 6.400000e+01 : f32
    %162 = vector.broadcast %cst_54 : f32 to vector<8x1xf32>
    %163 = arith.divf %161, %162 : vector<8x1xf32>
    %164 = vector.broadcast %163 : vector<8x1xf32> to vector<8x64xf32>
    %165 = arith.subf %159, %164 : vector<8x64xf32>
    %166 = arith.mulf %165, %165 : vector<8x64xf32>
    %cst_55 = arith.constant dense<0.000000e+00> : vector<8xf32>
    %167 = vector.multi_reduction <add>, %166, %cst_55 [1] : vector<8x64xf32> to vector<8xf32>
    %168 = vector.shape_cast %167 : vector<8xf32> to vector<8x1xf32>
    %cst_56 = arith.constant 6.400000e+01 : f32
    %169 = vector.broadcast %cst_56 : f32 to vector<8x1xf32>
    %170 = arith.divf %168, %169 : vector<8x1xf32>
    %171 = vector.broadcast %163 : vector<8x1xf32> to vector<8x64xf32>
    %172 = arith.subf %159, %171 : vector<8x64xf32>
    %cst_57 = arith.constant 9.99999974E-6 : f32
    %173 = vector.broadcast %cst_57 : f32 to vector<8x1xf32>
    %174 = arith.addf %170, %173 : vector<8x1xf32>
    %175 = math.rsqrt %174 : vector<8x1xf32>
    %176 = vector.broadcast %175 : vector<8x1xf32> to vector<8x64xf32>
    %177 = arith.mulf %172, %176 : vector<8x64xf32>
    %178 = vector.broadcast %13 : vector<1x64xf32> to vector<8x64xf32>
    %179 = arith.mulf %177, %178 : vector<8x64xf32>
    %180 = vector.broadcast %14 : vector<1x64xf32> to vector<8x64xf32>
    %181 = arith.addf %179, %180 : vector<8x64xf32>
    %c1 = arith.constant 1 : index
    %c0_58 = arith.constant 0 : index
    %c0_59 = arith.constant 0 : index
    %182 = vector.load %arg9[%c1, %c0_58, %c0_59] : memref<2x8x128xf32, #tpu.memory_space<vmem>>, vector<1x8x128xf32>
    %183 = vector.shape_cast %182 : vector<1x8x128xf32> to vector<8x128xf32>
    %184 = vector.extract_strided_slice %183 {offsets = [0, 0], sizes = [1, 64], strides = [1, 1]} : vector<8x128xf32> to vector<1x64xf32>
    %185 = vector.extract_strided_slice %183 {offsets = [1, 0], sizes = [1, 64], strides = [1, 1]} : vector<8x128xf32> to vector<1x64xf32>
    %186 = vector.extract_strided_slice %183 {offsets = [2, 0], sizes = [1, 64], strides = [1, 1]} : vector<8x128xf32> to vector<1x64xf32>
    %187 = vector.extract_strided_slice %183 {offsets = [3, 0], sizes = [1, 128], strides = [1, 1]} : vector<8x128xf32> to vector<1x128xf32>
    %188 = vector.extract_strided_slice %183 {offsets = [4, 0], sizes = [1, 64], strides = [1, 1]} : vector<8x128xf32> to vector<1x64xf32>
    %189 = vector.extract_strided_slice %183 {offsets = [5, 0], sizes = [1, 64], strides = [1, 1]} : vector<8x128xf32> to vector<1x64xf32>
    %190 = vector.extract_strided_slice %183 {offsets = [6, 0], sizes = [1, 64], strides = [1, 1]} : vector<8x128xf32> to vector<1x64xf32>
    %191 = arith.truncf %181 : vector<8x64xf32> to vector<8x64xbf16>
    %c1_60 = arith.constant 1 : index
    %c0_61 = arith.constant 0 : index
    %c0_62 = arith.constant 0 : index
    %192 = vector.load %arg4[%c1_60, %c0_61, %c0_62] : memref<2x64x192xbf16, #tpu.memory_space<vmem>>, vector<1x64x192xbf16>
    %193 = vector.shape_cast %192 : vector<1x64x192xbf16> to vector<64x192xbf16>
    %cst_63 = arith.constant dense<0.000000e+00> : vector<8x192xf32>
    %194 = tpu.matmul %191, %193, %cst_63 {dimension_numbers = #tpu.dot_dimension_numbers<[1], [0], [0], [1], [0, 0, 1, 1], [], []>} : vector<8x64xbf16>, vector<64x192xbf16>, vector<8x192xf32> -> vector<8x192xf32>
    %c1_64 = arith.constant 1 : index
    %c0_65 = arith.constant 0 : index
    %c0_66 = arith.constant 0 : index
    %195 = vector.load %arg5[%c1_64, %c0_65, %c0_66] : memref<2x1x192xf32, #tpu.memory_space<vmem>>, vector<1x1x192xf32>
    %196 = vector.shape_cast %195 : vector<1x1x192xf32> to vector<1x192xf32>
    %197 = vector.broadcast %196 : vector<1x192xf32> to vector<8x192xf32>
    %198 = arith.addf %194, %197 : vector<8x192xf32>
    %199 = vector.extract_strided_slice %198 {offsets = [0, 0], sizes = [8, 16], strides = [1, 1]} : vector<8x192xf32> to vector<8x16xf32>
    %200 = arith.truncf %199 : vector<8x16xf32> to vector<8x16xbf16>
    %201 = vector.extract_strided_slice %198 {offsets = [0, 64], sizes = [8, 16], strides = [1, 1]} : vector<8x192xf32> to vector<8x16xf32>
    %202 = arith.truncf %201 : vector<8x16xf32> to vector<8x16xbf16>
    %203 = vector.extract_strided_slice %198 {offsets = [0, 128], sizes = [8, 16], strides = [1, 1]} : vector<8x192xf32> to vector<8x16xf32>
    %204 = arith.truncf %203 : vector<8x16xf32> to vector<8x16xbf16>
    %cst_67 = arith.constant dense<0.000000e+00> : vector<8x8xf32>
    %205 = tpu.matmul %200, %202, %cst_67 {dimension_numbers = #tpu.dot_dimension_numbers<[1], [1], [0], [0], [0, 0, 1, 0], [], []>} : vector<8x16xbf16>, vector<8x16xbf16>, vector<8x8xf32> -> vector<8x8xf32>
    %cst_68 = arith.constant -1.000000e+30 : f32
    %206 = vector.shape_cast %5 : vector<1x8xi1> to vector<1x8xi1>
    %207 = vector.broadcast %206 : vector<1x8xi1> to vector<8x8xi1>
    %208 = vector.broadcast %cst_68 : f32 to vector<8x8xf32>
    %209 = arith.select %207, %205, %208 : vector<8x8xi1>, vector<8x8xf32>
    %cst_69 = arith.constant dense<0xFF800000> : vector<8xf32>
    %210 = vector.multi_reduction <maximumf>, %209, %cst_69 [1] : vector<8x8xf32> to vector<8xf32>
    %211 = vector.shape_cast %210 : vector<8xf32> to vector<8x1xf32>
    %212 = vector.broadcast %211 : vector<8x1xf32> to vector<8x8xf32>
    %213 = arith.subf %209, %212 : vector<8x8xf32>
    %214 = math.exp %213 : vector<8x8xf32>
    %cst_70 = arith.constant dense<0.000000e+00> : vector<8xf32>
    %215 = vector.multi_reduction <add>, %214, %cst_70 [1] : vector<8x8xf32> to vector<8xf32>
    %216 = vector.shape_cast %215 : vector<8xf32> to vector<8x1xf32>
    %217 = tpu.reciprocal %216 {approx = true} : vector<8x1xf32> -> vector<8x1xf32>
    %218 = vector.broadcast %217 : vector<8x1xf32> to vector<8x8xf32>
    %219 = arith.mulf %214, %218 : vector<8x8xf32>
    %220 = arith.truncf %219 : vector<8x8xf32> to vector<8x8xbf16>
    %cst_71 = arith.constant dense<0.000000e+00> : vector<8x16xf32>
    %221 = tpu.matmul %220, %204, %cst_71 {dimension_numbers = #tpu.dot_dimension_numbers<[1], [0], [0], [1], [0, 0, 1, 1], [], []>} : vector<8x8xbf16>, vector<8x16xbf16>, vector<8x16xf32> -> vector<8x16xf32>
    %222 = vector.extract_strided_slice %198 {offsets = [0, 16], sizes = [8, 16], strides = [1, 1]} : vector<8x192xf32> to vector<8x16xf32>
    %223 = arith.truncf %222 : vector<8x16xf32> to vector<8x16xbf16>
    %224 = vector.extract_strided_slice %198 {offsets = [0, 80], sizes = [8, 16], strides = [1, 1]} : vector<8x192xf32> to vector<8x16xf32>
    %225 = arith.truncf %224 : vector<8x16xf32> to vector<8x16xbf16>
    %226 = vector.extract_strided_slice %198 {offsets = [0, 144], sizes = [8, 16], strides = [1, 1]} : vector<8x192xf32> to vector<8x16xf32>
    %227 = arith.truncf %226 : vector<8x16xf32> to vector<8x16xbf16>
    %cst_72 = arith.constant dense<0.000000e+00> : vector<8x8xf32>
    %228 = tpu.matmul %223, %225, %cst_72 {dimension_numbers = #tpu.dot_dimension_numbers<[1], [1], [0], [0], [0, 0, 1, 0], [], []>} : vector<8x16xbf16>, vector<8x16xbf16>, vector<8x8xf32> -> vector<8x8xf32>
    %cst_73 = arith.constant -1.000000e+30 : f32
    %229 = vector.shape_cast %5 : vector<1x8xi1> to vector<1x8xi1>
    %230 = vector.broadcast %229 : vector<1x8xi1> to vector<8x8xi1>
    %231 = vector.broadcast %cst_73 : f32 to vector<8x8xf32>
    %232 = arith.select %230, %228, %231 : vector<8x8xi1>, vector<8x8xf32>
    %cst_74 = arith.constant dense<0xFF800000> : vector<8xf32>
    %233 = vector.multi_reduction <maximumf>, %232, %cst_74 [1] : vector<8x8xf32> to vector<8xf32>
    %234 = vector.shape_cast %233 : vector<8xf32> to vector<8x1xf32>
    %235 = vector.broadcast %234 : vector<8x1xf32> to vector<8x8xf32>
    %236 = arith.subf %232, %235 : vector<8x8xf32>
    %237 = math.exp %236 : vector<8x8xf32>
    %cst_75 = arith.constant dense<0.000000e+00> : vector<8xf32>
    %238 = vector.multi_reduction <add>, %237, %cst_75 [1] : vector<8x8xf32> to vector<8xf32>
    %239 = vector.shape_cast %238 : vector<8xf32> to vector<8x1xf32>
    %240 = tpu.reciprocal %239 {approx = true} : vector<8x1xf32> -> vector<8x1xf32>
    %241 = vector.broadcast %240 : vector<8x1xf32> to vector<8x8xf32>
    %242 = arith.mulf %237, %241 : vector<8x8xf32>
    %243 = arith.truncf %242 : vector<8x8xf32> to vector<8x8xbf16>
    %cst_76 = arith.constant dense<0.000000e+00> : vector<8x16xf32>
    %244 = tpu.matmul %243, %227, %cst_76 {dimension_numbers = #tpu.dot_dimension_numbers<[1], [0], [0], [1], [0, 0, 1, 1], [], []>} : vector<8x8xbf16>, vector<8x16xbf16>, vector<8x16xf32> -> vector<8x16xf32>
    %245 = vector.extract_strided_slice %198 {offsets = [0, 32], sizes = [8, 16], strides = [1, 1]} : vector<8x192xf32> to vector<8x16xf32>
    %246 = arith.truncf %245 : vector<8x16xf32> to vector<8x16xbf16>
    %247 = vector.extract_strided_slice %198 {offsets = [0, 96], sizes = [8, 16], strides = [1, 1]} : vector<8x192xf32> to vector<8x16xf32>
    %248 = arith.truncf %247 : vector<8x16xf32> to vector<8x16xbf16>
    %249 = vector.extract_strided_slice %198 {offsets = [0, 160], sizes = [8, 16], strides = [1, 1]} : vector<8x192xf32> to vector<8x16xf32>
    %250 = arith.truncf %249 : vector<8x16xf32> to vector<8x16xbf16>
    %cst_77 = arith.constant dense<0.000000e+00> : vector<8x8xf32>
    %251 = tpu.matmul %246, %248, %cst_77 {dimension_numbers = #tpu.dot_dimension_numbers<[1], [1], [0], [0], [0, 0, 1, 0], [], []>} : vector<8x16xbf16>, vector<8x16xbf16>, vector<8x8xf32> -> vector<8x8xf32>
    %cst_78 = arith.constant -1.000000e+30 : f32
    %252 = vector.shape_cast %5 : vector<1x8xi1> to vector<1x8xi1>
    %253 = vector.broadcast %252 : vector<1x8xi1> to vector<8x8xi1>
    %254 = vector.broadcast %cst_78 : f32 to vector<8x8xf32>
    %255 = arith.select %253, %251, %254 : vector<8x8xi1>, vector<8x8xf32>
    %cst_79 = arith.constant dense<0xFF800000> : vector<8xf32>
    %256 = vector.multi_reduction <maximumf>, %255, %cst_79 [1] : vector<8x8xf32> to vector<8xf32>
    %257 = vector.shape_cast %256 : vector<8xf32> to vector<8x1xf32>
    %258 = vector.broadcast %257 : vector<8x1xf32> to vector<8x8xf32>
    %259 = arith.subf %255, %258 : vector<8x8xf32>
    %260 = math.exp %259 : vector<8x8xf32>
    %cst_80 = arith.constant dense<0.000000e+00> : vector<8xf32>
    %261 = vector.multi_reduction <add>, %260, %cst_80 [1] : vector<8x8xf32> to vector<8xf32>
    %262 = vector.shape_cast %261 : vector<8xf32> to vector<8x1xf32>
    %263 = tpu.reciprocal %262 {approx = true} : vector<8x1xf32> -> vector<8x1xf32>
    %264 = vector.broadcast %263 : vector<8x1xf32> to vector<8x8xf32>
    %265 = arith.mulf %260, %264 : vector<8x8xf32>
    %266 = arith.truncf %265 : vector<8x8xf32> to vector<8x8xbf16>
    %cst_81 = arith.constant dense<0.000000e+00> : vector<8x16xf32>
    %267 = tpu.matmul %266, %250, %cst_81 {dimension_numbers = #tpu.dot_dimension_numbers<[1], [0], [0], [1], [0, 0, 1, 1], [], []>} : vector<8x8xbf16>, vector<8x16xbf16>, vector<8x16xf32> -> vector<8x16xf32>
    %268 = vector.extract_strided_slice %198 {offsets = [0, 48], sizes = [8, 16], strides = [1, 1]} : vector<8x192xf32> to vector<8x16xf32>
    %269 = arith.truncf %268 : vector<8x16xf32> to vector<8x16xbf16>
    %270 = vector.extract_strided_slice %198 {offsets = [0, 112], sizes = [8, 16], strides = [1, 1]} : vector<8x192xf32> to vector<8x16xf32>
    %271 = arith.truncf %270 : vector<8x16xf32> to vector<8x16xbf16>
    %272 = vector.extract_strided_slice %198 {offsets = [0, 176], sizes = [8, 16], strides = [1, 1]} : vector<8x192xf32> to vector<8x16xf32>
    %273 = arith.truncf %272 : vector<8x16xf32> to vector<8x16xbf16>
    %cst_82 = arith.constant dense<0.000000e+00> : vector<8x8xf32>
    %274 = tpu.matmul %269, %271, %cst_82 {dimension_numbers = #tpu.dot_dimension_numbers<[1], [1], [0], [0], [0, 0, 1, 0], [], []>} : vector<8x16xbf16>, vector<8x16xbf16>, vector<8x8xf32> -> vector<8x8xf32>
    %cst_83 = arith.constant -1.000000e+30 : f32
    %275 = vector.shape_cast %5 : vector<1x8xi1> to vector<1x8xi1>
    %276 = vector.broadcast %275 : vector<1x8xi1> to vector<8x8xi1>
    %277 = vector.broadcast %cst_83 : f32 to vector<8x8xf32>
    %278 = arith.select %276, %274, %277 : vector<8x8xi1>, vector<8x8xf32>
    %cst_84 = arith.constant dense<0xFF800000> : vector<8xf32>
    %279 = vector.multi_reduction <maximumf>, %278, %cst_84 [1] : vector<8x8xf32> to vector<8xf32>
    %280 = vector.shape_cast %279 : vector<8xf32> to vector<8x1xf32>
    %281 = vector.broadcast %280 : vector<8x1xf32> to vector<8x8xf32>
    %282 = arith.subf %278, %281 : vector<8x8xf32>
    %283 = math.exp %282 : vector<8x8xf32>
    %cst_85 = arith.constant dense<0.000000e+00> : vector<8xf32>
    %284 = vector.multi_reduction <add>, %283, %cst_85 [1] : vector<8x8xf32> to vector<8xf32>
    %285 = vector.shape_cast %284 : vector<8xf32> to vector<8x1xf32>
    %286 = tpu.reciprocal %285 {approx = true} : vector<8x1xf32> -> vector<8x1xf32>
    %287 = vector.broadcast %286 : vector<8x1xf32> to vector<8x8xf32>
    %288 = arith.mulf %283, %287 : vector<8x8xf32>
    %289 = arith.truncf %288 : vector<8x8xf32> to vector<8x8xbf16>
    %cst_86 = arith.constant dense<0.000000e+00> : vector<8x16xf32>
    %290 = tpu.matmul %289, %273, %cst_86 {dimension_numbers = #tpu.dot_dimension_numbers<[1], [0], [0], [1], [0, 0, 1, 1], [], []>} : vector<8x8xbf16>, vector<8x16xbf16>, vector<8x16xf32> -> vector<8x16xf32>
    %291 = tpu.concatenate %221, %244, %267, %290 in 1 : vector<8x16xf32>, vector<8x16xf32>, vector<8x16xf32>, vector<8x16xf32> -> vector<8x64xf32>
    %292 = arith.truncf %291 : vector<8x64xf32> to vector<8x64xbf16>
    %c1_87 = arith.constant 1 : index
    %c0_88 = arith.constant 0 : index
    %c0_89 = arith.constant 0 : index
    %293 = vector.load %arg6[%c1_87, %c0_88, %c0_89] : memref<2x64x64xbf16, #tpu.memory_space<vmem>>, vector<1x64x64xbf16>
    %294 = vector.shape_cast %293 : vector<1x64x64xbf16> to vector<64x64xbf16>
    %cst_90 = arith.constant dense<0.000000e+00> : vector<8x64xf32>
    %295 = tpu.matmul %292, %294, %cst_90 {dimension_numbers = #tpu.dot_dimension_numbers<[1], [0], [0], [1], [0, 0, 1, 1], [], []>} : vector<8x64xbf16>, vector<64x64xbf16>, vector<8x64xf32> -> vector<8x64xf32>
    %296 = vector.broadcast %184 : vector<1x64xf32> to vector<8x64xf32>
    %297 = arith.addf %295, %296 : vector<8x64xf32>
    %298 = arith.addf %181, %297 : vector<8x64xf32>
    %cst_91 = arith.constant dense<0.000000e+00> : vector<8xf32>
    %299 = vector.multi_reduction <add>, %298, %cst_91 [1] : vector<8x64xf32> to vector<8xf32>
    %300 = vector.shape_cast %299 : vector<8xf32> to vector<8x1xf32>
    %cst_92 = arith.constant 6.400000e+01 : f32
    %301 = vector.broadcast %cst_92 : f32 to vector<8x1xf32>
    %302 = arith.divf %300, %301 : vector<8x1xf32>
    %303 = vector.broadcast %302 : vector<8x1xf32> to vector<8x64xf32>
    %304 = arith.subf %298, %303 : vector<8x64xf32>
    %305 = arith.mulf %304, %304 : vector<8x64xf32>
    %cst_93 = arith.constant dense<0.000000e+00> : vector<8xf32>
    %306 = vector.multi_reduction <add>, %305, %cst_93 [1] : vector<8x64xf32> to vector<8xf32>
    %307 = vector.shape_cast %306 : vector<8xf32> to vector<8x1xf32>
    %cst_94 = arith.constant 6.400000e+01 : f32
    %308 = vector.broadcast %cst_94 : f32 to vector<8x1xf32>
    %309 = arith.divf %307, %308 : vector<8x1xf32>
    %310 = vector.broadcast %302 : vector<8x1xf32> to vector<8x64xf32>
    %311 = arith.subf %298, %310 : vector<8x64xf32>
    %cst_95 = arith.constant 9.99999974E-6 : f32
    %312 = vector.broadcast %cst_95 : f32 to vector<8x1xf32>
    %313 = arith.addf %309, %312 : vector<8x1xf32>
    %314 = math.rsqrt %313 : vector<8x1xf32>
    %315 = vector.broadcast %314 : vector<8x1xf32> to vector<8x64xf32>
    %316 = arith.mulf %311, %315 : vector<8x64xf32>
    %317 = vector.broadcast %185 : vector<1x64xf32> to vector<8x64xf32>
    %318 = arith.mulf %316, %317 : vector<8x64xf32>
    %319 = vector.broadcast %186 : vector<1x64xf32> to vector<8x64xf32>
    %320 = arith.addf %318, %319 : vector<8x64xf32>
    %321 = arith.truncf %320 : vector<8x64xf32> to vector<8x64xbf16>
    %c1_96 = arith.constant 1 : index
    %c0_97 = arith.constant 0 : index
    %c0_98 = arith.constant 0 : index
    %322 = vector.load %arg7[%c1_96, %c0_97, %c0_98] : memref<2x64x128xbf16, #tpu.memory_space<vmem>>, vector<1x64x128xbf16>
    %323 = vector.shape_cast %322 : vector<1x64x128xbf16> to vector<64x128xbf16>
    %cst_99 = arith.constant dense<0.000000e+00> : vector<8x128xf32>
    %324 = tpu.matmul %321, %323, %cst_99 {dimension_numbers = #tpu.dot_dimension_numbers<[1], [0], [0], [1], [0, 0, 1, 1], [], []>} : vector<8x64xbf16>, vector<64x128xbf16>, vector<8x128xf32> -> vector<8x128xf32>
    %325 = vector.broadcast %187 : vector<1x128xf32> to vector<8x128xf32>
    %326 = arith.addf %324, %325 : vector<8x128xf32>
    %cst_100 = arith.constant 0.000000e+00 : f32
    %327 = vector.broadcast %cst_100 : f32 to vector<8x128xf32>
    %328 = arith.maximumf %326, %327 : vector<8x128xf32>
    %329 = arith.truncf %328 : vector<8x128xf32> to vector<8x128xbf16>
    %c1_101 = arith.constant 1 : index
    %c0_102 = arith.constant 0 : index
    %c0_103 = arith.constant 0 : index
    %330 = vector.load %arg8[%c1_101, %c0_102, %c0_103] : memref<2x128x64xbf16, #tpu.memory_space<vmem>>, vector<1x128x64xbf16>
    %331 = vector.shape_cast %330 : vector<1x128x64xbf16> to vector<128x64xbf16>
    %cst_104 = arith.constant dense<0.000000e+00> : vector<8x64xf32>
    %332 = tpu.matmul %329, %331, %cst_104 {dimension_numbers = #tpu.dot_dimension_numbers<[1], [0], [0], [1], [0, 0, 1, 1], [], []>} : vector<8x128xbf16>, vector<128x64xbf16>, vector<8x64xf32> -> vector<8x64xf32>
    %333 = vector.broadcast %188 : vector<1x64xf32> to vector<8x64xf32>
    %334 = arith.addf %332, %333 : vector<8x64xf32>
    %335 = arith.addf %320, %334 : vector<8x64xf32>
    %cst_105 = arith.constant dense<0.000000e+00> : vector<8xf32>
    %336 = vector.multi_reduction <add>, %335, %cst_105 [1] : vector<8x64xf32> to vector<8xf32>
    %337 = vector.shape_cast %336 : vector<8xf32> to vector<8x1xf32>
    %cst_106 = arith.constant 6.400000e+01 : f32
    %338 = vector.broadcast %cst_106 : f32 to vector<8x1xf32>
    %339 = arith.divf %337, %338 : vector<8x1xf32>
    %340 = vector.broadcast %339 : vector<8x1xf32> to vector<8x64xf32>
    %341 = arith.subf %335, %340 : vector<8x64xf32>
    %342 = arith.mulf %341, %341 : vector<8x64xf32>
    %cst_107 = arith.constant dense<0.000000e+00> : vector<8xf32>
    %343 = vector.multi_reduction <add>, %342, %cst_107 [1] : vector<8x64xf32> to vector<8xf32>
    %344 = vector.shape_cast %343 : vector<8xf32> to vector<8x1xf32>
    %cst_108 = arith.constant 6.400000e+01 : f32
    %345 = vector.broadcast %cst_108 : f32 to vector<8x1xf32>
    %346 = arith.divf %344, %345 : vector<8x1xf32>
    %347 = vector.broadcast %339 : vector<8x1xf32> to vector<8x64xf32>
    %348 = arith.subf %335, %347 : vector<8x64xf32>
    %cst_109 = arith.constant 9.99999974E-6 : f32
    %349 = vector.broadcast %cst_109 : f32 to vector<8x1xf32>
    %350 = arith.addf %346, %349 : vector<8x1xf32>
    %351 = math.rsqrt %350 : vector<8x1xf32>
    %352 = vector.broadcast %351 : vector<8x1xf32> to vector<8x64xf32>
    %353 = arith.mulf %348, %352 : vector<8x64xf32>
    %354 = vector.broadcast %189 : vector<1x64xf32> to vector<8x64xf32>
    %355 = arith.mulf %353, %354 : vector<8x64xf32>
    %356 = vector.broadcast %190 : vector<1x64xf32> to vector<8x64xf32>
    %357 = arith.addf %355, %356 : vector<8x64xf32>
    %cst_110 = arith.constant dense<0.000000e+00> : vector<1x64xf32>
    %358 = tpu.matmul %3, %357, %cst_110 {dimension_numbers = #tpu.dot_dimension_numbers<[1], [0], [0], [1], [0, 0, 1, 1], [], []>} : vector<1x8xf32>, vector<8x64xf32>, vector<1x64xf32> -> vector<1x64xf32>
    %cst_111 = arith.constant dense<0.000000e+00> : vector<1xf32>
    %359 = vector.multi_reduction <add>, %3, %cst_111 [1] : vector<1x8xf32> to vector<1xf32>
    %360 = vector.shape_cast %359 : vector<1xf32> to vector<1x1xf32>
    %361 = vector.broadcast %360 : vector<1x1xf32> to vector<1x64xf32>
    %362 = arith.divf %358, %361 : vector<1x64xf32>
    %c0_112 = arith.constant 0 : index
    %c0_113 = arith.constant 0 : index
    %c0_114 = arith.constant 0 : index
    %363 = vector.load %arg3[%c0_112, %c0_113, %c0_114] : memref<1x1x10xf32, #tpu.memory_space<vmem>>, vector<1x1x10xf32>
    %364 = vector.shape_cast %363 : vector<1x1x10xf32> to vector<1x10xf32>
    %c0_115 = arith.constant 0 : index
    %c0_116 = arith.constant 0 : index
    %365 = vector.load %arg10[%c0_115, %c0_116] : memref<208x128xf32, #tpu.memory_space<vmem>>, vector<10x32xf32>
    %cst_117 = arith.constant dense<0.000000e+00> : vector<1x32xf32>
    %366 = tpu.matmul %364, %365, %cst_117 {dimension_numbers = #tpu.dot_dimension_numbers<[1], [0], [0], [1], [0, 0, 1, 1], [], []>} : vector<1x10xf32>, vector<10x32xf32>, vector<1x32xf32> -> vector<1x32xf32>
    %c10 = arith.constant 10 : index
    %c0_118 = arith.constant 0 : index
    %367 = vector.load %arg10[%c10, %c0_118] : memref<208x128xf32, #tpu.memory_space<vmem>>, vector<1x32xf32>
    %368 = arith.addf %366, %367 : vector<1x32xf32>
    %cst_119 = arith.constant 0.000000e+00 : f32
    %369 = vector.broadcast %cst_119 : f32 to vector<1x32xf32>
    %370 = arith.maximumf %368, %369 : vector<1x32xf32>
    %c11 = arith.constant 11 : index
    %c0_120 = arith.constant 0 : index
    %371 = vector.load %arg10[%c11, %c0_120] : memref<208x128xf32, #tpu.memory_space<vmem>>, vector<32x32xf32>
    %cst_121 = arith.constant dense<0.000000e+00> : vector<1x32xf32>
    %372 = tpu.matmul %370, %371, %cst_121 {dimension_numbers = #tpu.dot_dimension_numbers<[1], [0], [0], [1], [0, 0, 1, 1], [], []>} : vector<1x32xf32>, vector<32x32xf32>, vector<1x32xf32> -> vector<1x32xf32>
    %c43 = arith.constant 43 : index
    %c0_122 = arith.constant 0 : index
    %373 = vector.load %arg10[%c43, %c0_122] : memref<208x128xf32, #tpu.memory_space<vmem>>, vector<1x32xf32>
    %374 = arith.addf %372, %373 : vector<1x32xf32>
    %c44 = arith.constant 44 : index
    %c0_123 = arith.constant 0 : index
    %375 = vector.load %arg10[%c44, %c0_123] : memref<208x128xf32, #tpu.memory_space<vmem>>, vector<64x64xf32>
    %cst_124 = arith.constant dense<0.000000e+00> : vector<1x64xf32>
    %376 = tpu.matmul %362, %375, %cst_124 {dimension_numbers = #tpu.dot_dimension_numbers<[1], [0], [0], [1], [0, 0, 1, 1], [], []>} : vector<1x64xf32>, vector<64x64xf32>, vector<1x64xf32> -> vector<1x64xf32>
    %c108 = arith.constant 108 : index
    %c0_125 = arith.constant 0 : index
    %377 = vector.load %arg10[%c108, %c0_125] : memref<208x128xf32, #tpu.memory_space<vmem>>, vector<32x64xf32>
    %cst_126 = arith.constant dense<0.000000e+00> : vector<1x64xf32>
    %378 = tpu.matmul %374, %377, %cst_126 {dimension_numbers = #tpu.dot_dimension_numbers<[1], [0], [0], [1], [0, 0, 1, 1], [], []>} : vector<1x32xf32>, vector<32x64xf32>, vector<1x64xf32> -> vector<1x64xf32>
    %379 = arith.addf %376, %378 : vector<1x64xf32>
    %c140 = arith.constant 140 : index
    %c0_127 = arith.constant 0 : index
    %380 = vector.load %arg10[%c140, %c0_127] : memref<208x128xf32, #tpu.memory_space<vmem>>, vector<1x64xf32>
    %381 = arith.addf %379, %380 : vector<1x64xf32>
    %cst_128 = arith.constant 0.000000e+00 : f32
    %382 = vector.broadcast %cst_128 : f32 to vector<1x64xf32>
    %383 = arith.maximumf %381, %382 : vector<1x64xf32>
    %c141 = arith.constant 141 : index
    %c0_129 = arith.constant 0 : index
    %384 = vector.load %arg10[%c141, %c0_129] : memref<208x128xf32, #tpu.memory_space<vmem>>, vector<64x128xf32>
    %cst_130 = arith.constant dense<0.000000e+00> : vector<1x128xf32>
    %385 = tpu.matmul %383, %384, %cst_130 {dimension_numbers = #tpu.dot_dimension_numbers<[1], [0], [0], [1], [0, 0, 1, 1], [], []>} : vector<1x64xf32>, vector<64x128xf32>, vector<1x128xf32> -> vector<1x128xf32>
    %c205 = arith.constant 205 : index
    %c0_131 = arith.constant 0 : index
    %386 = vector.load %arg10[%c205, %c0_131] : memref<208x128xf32, #tpu.memory_space<vmem>>, vector<1x128xf32>
    %387 = arith.addf %385, %386 : vector<1x128xf32>
    %c0_132 = arith.constant 0 : index
    %c0_133 = arith.constant 0 : index
    %c0_134 = arith.constant 0 : index
    %388 = vector.load %arg11[%c0_132, %c0_133, %c0_134] : memref<1x1x128xf32, #tpu.memory_space<vmem>>, vector<1x1x128xf32>
    %389 = vector.shape_cast %388 : vector<1x1x128xf32> to vector<1x128xf32>
    %390 = vector.shape_cast %387 : vector<1x128xf32> to vector<1x1x128xf32>
    tpu.vector_store %arg11[%c0_132, %c0_133, %c0_134], %390 {strides = array<i32>} : memref<1x1x128xf32, #tpu.memory_space<vmem>>, vector<1x1x128xf32>,
    return
  }
  func.func @transform_0(%arg0: i32) -> (i32, i32, i32) {
    %c0_i32 = arith.constant 0 : i32
    %c0_i32_0 = arith.constant 0 : i32
    %c0_i32_1 = arith.constant 0 : i32
    return %arg0, %c0_i32, %c0_i32_0 : i32, i32, i32
  }
  func.func @transform_1(%arg0: i32) -> (i32, i32, i32) {
    %c0_i32 = arith.constant 0 : i32
    %c0_i32_0 = arith.constant 0 : i32
    %c0_i32_1 = arith.constant 0 : i32
    return %arg0, %c0_i32, %c0_i32_0 : i32, i32, i32
  }
  func.func @transform_2(%arg0: i32) -> (i32, i32, i32) {
    %c0_i32 = arith.constant 0 : i32
    %c0_i32_0 = arith.constant 0 : i32
    %c0_i32_1 = arith.constant 0 : i32
    return %arg0, %c0_i32, %c0_i32_0 : i32, i32, i32
  }
  func.func @transform_3(%arg0: i32) -> (i32, i32, i32) {
    %c0_i32 = arith.constant 0 : i32
    %c0_i32_0 = arith.constant 0 : i32
    %c0_i32_1 = arith.constant 0 : i32
    %c0_i32_2 = arith.constant 0 : i32
    return %c0_i32, %c0_i32_0, %c0_i32_1 : i32, i32, i32
  }
  func.func @transform_4(%arg0: i32) -> (i32, i32, i32) {
    %c0_i32 = arith.constant 0 : i32
    %c0_i32_0 = arith.constant 0 : i32
    %c0_i32_1 = arith.constant 0 : i32
    %c0_i32_2 = arith.constant 0 : i32
    return %c0_i32, %c0_i32_0, %c0_i32_1 : i32, i32, i32
  }
  func.func @transform_5(%arg0: i32) -> (i32, i32, i32) {
    %c0_i32 = arith.constant 0 : i32
    %c0_i32_0 = arith.constant 0 : i32
    %c0_i32_1 = arith.constant 0 : i32
    %c0_i32_2 = arith.constant 0 : i32
    return %c0_i32, %c0_i32_0, %c0_i32_1 : i32, i32, i32
  }
  func.func @transform_6(%arg0: i32) -> (i32, i32, i32) {
    %c0_i32 = arith.constant 0 : i32
    %c0_i32_0 = arith.constant 0 : i32
    %c0_i32_1 = arith.constant 0 : i32
    %c0_i32_2 = arith.constant 0 : i32
    return %c0_i32, %c0_i32_0, %c0_i32_1 : i32, i32, i32
  }
  func.func @transform_7(%arg0: i32) -> (i32, i32, i32) {
    %c0_i32 = arith.constant 0 : i32
    %c0_i32_0 = arith.constant 0 : i32
    %c0_i32_1 = arith.constant 0 : i32
    %c0_i32_2 = arith.constant 0 : i32
    return %c0_i32, %c0_i32_0, %c0_i32_1 : i32, i32, i32
  }
  func.func @transform_8(%arg0: i32) -> (i32, i32, i32) {
    %c0_i32 = arith.constant 0 : i32
    %c0_i32_0 = arith.constant 0 : i32
    %c0_i32_1 = arith.constant 0 : i32
    %c0_i32_2 = arith.constant 0 : i32
    return %c0_i32, %c0_i32_0, %c0_i32_1 : i32, i32, i32
  }
  func.func @transform_9(%arg0: i32) -> (i32, i32) {
    %c0_i32 = arith.constant 0 : i32
    %c0_i32_0 = arith.constant 0 : i32
    %c0_i32_1 = arith.constant 0 : i32
    return %c0_i32, %c0_i32_0 : i32, i32
  }
  func.func @transform_10(%arg0: i32) -> (i32, i32, i32) {
    %c0_i32 = arith.constant 0 : i32
    %c0_i32_0 = arith.constant 0 : i32
    %c0_i32_1 = arith.constant 0 : i32
    return %arg0, %c0_i32, %c0_i32_0 : i32, i32, i32
  }
}

</mosaic_0001>

<llo_original>
// kernel: simplified_m3t_forward.1
$region0: #{simplified_m3t_forward.1}
  #allocation0 [shape = 'u32[]', space=smem, size = 0x4, offset = 0x4, fixed_abs, tag = 'smem constant byte address 0x4 - core index']
  #allocation1 [shape = 'u32[144,128]{1,0:T(1,128)}', space=vmem, size = 0x12000, scoped, tag = 'internal scratch']
  %s0 = inlined_call_operand.vmem [shape: f32[2,8,64], index: 0, kind: input, shape index: {}]
  %s1 = inlined_call_operand.vmem [shape: f32[2,1,8], index: 1, kind: input, shape index: {}]
  %s2 = inlined_call_operand.vmem [shape: f32[2,1,10], index: 2, kind: input, shape index: {}]
  %s3 = inlined_call_operand.vmem [shape: bf16[2,64,192], index: 3, kind: input, shape index: {}]
  %s4 = inlined_call_operand.hbm [shape: f32[2,1,192], index: 4, kind: input, shape index: {}]
  %s5 = inlined_call_operand.vmem [shape: bf16[2,64,64], index: 5, kind: input, shape index: {}]
  %s6 = inlined_call_operand.vmem [shape: bf16[2,64,128], index: 6, kind: input, shape index: {}]
  %s7 = inlined_call_operand.vmem [shape: bf16[2,128,64], index: 7, kind: input, shape index: {}]
  %s8 = inlined_call_operand.vmem [shape: f32[2,8,128], index: 8, kind: input, shape index: {}]
  %s9 = inlined_call_operand.vmem [shape: f32[208,128], index: 9, kind: input, shape index: {}]
  %s10 = inlined_call_operand.hbm [shape: f32[2,1,128], index: 10, kind: output, shape index: {}]
  %s11 = sld [smem:[#allocation0]]
  $region77: #{simplified_m3t_forward.1} parent=0
    _
  %s13 = ssub.s32 1, %s11
  %s14 = scalar_select 0, %s13, %s11
  $region1: #{simplified_m3t_forward.1} parent=0
    #allocation2 [shape = 'u8[2048]{0}', space=vmem, size = 0x800, scoped, tag = 'input window, operand 4, single buffered']
    #allocation3 [shape = 's32[2]{0}', space=sflag, size = 0x8, scoped, tag = 'scoped memory for simplified_m3t_forward.1']
    #allocation4 [shape = 's32[2]{0}', space=sflag, size = 0x8, scoped, tag = 'scoped memory for simplified_m3t_forward.1']
    #allocation5 [shape = 'u8[1024]{0}', space=vmem, size = 0x400, scoped, tag = 'output window, operand 0']
    %15 = vsyncpa [#allocation3], 0
    %16 = vsyncpa [#allocation4], 0
    %s17 = scalar_lea.sflag [#allocation4], 1
    %18 = vsyncpa %s17, 0
    loop: start=0, step=1, limit=4
    $region2: #{simplified_m3t_forward.1} parent=1 // loop_pre_header
      _
    $region3: #{simplified_m3t_forward.1} parent=1 // loop_header
      %s20 = sphi 0, %s24
      %p21 = scmp.ge.s32.totalorder %s20, 4
      %s30 = sphi 0, %s32
      %s33 = sphi 0, %s30
      %s34 = sphi 0, %s33
      %s50 = sphi 0, %s34
      %s56 = sphi 0, %s58
      %s59 = sphi 0, %s56
      %s60 = sphi 0, %s59
      %s76 = sphi 0, %s60
      %s82 = sphi 0, %s84
      %s85 = sphi 0, %s82
      %s86 = sphi 0, %s85
      %s102 = sphi 0, %s86
      %s106 = sphi 0, %s106
      %s108 = sphi 0, %s106
      %s109 = sphi 0, %s108
      %s123 = sphi 0, %s109
      %s127 = sphi 0, %s127
      %s129 = sphi 0, %s127
      %s130 = sphi 0, %s129
      %s144 = sphi 0, %s130
      %s148 = sphi 0, %s148
      %s150 = sphi 0, %s148
      %s151 = sphi 0, %s150
      %s165 = sphi 0, %s151
      %s169 = sphi 0, %s169
      %s171 = sphi 0, %s169
      %s172 = sphi 0, %s171
      %s186 = sphi 0, %s172
      %s190 = sphi 0, %s190
      %s192 = sphi 0, %s190
      %s193 = sphi 0, %s192
      %s207 = sphi 0, %s193
      %s211 = sphi 0, %s211
      %s213 = sphi 0, %s211
      %s214 = sphi 0, %s213
      %s228 = sphi 0, %s214
      %s232 = sphi 0, %s232
      %s234 = sphi 0, %s232
      %s235 = sphi 0, %s234
      %s249 = sphi 0, %s235
      %s255 = sphi 0, %s257
      %s258 = sphi 0, %s255
      %s259 = sphi 0, %s258
      %s275 = sphi 0, %s259
    $region4: #{simplified_m3t_forward.1} parent=1 // loop_header_branch
      %23 = sbr.rel (%p21) target = $region8
    $region5: #{simplified_m3t_forward.1} parent=1 // loop_body
      %s25 = ssub.s32 %s20, 1
      %s26 = ssub.s32 %s20, 2
      %s27 = sadd.s32 %s20, 1
      %s28 = ssub.s32 %s20, %s27
      %p29 = scmp.eq.s32.totalorder %s28, 0
      %s31 = sadd.s32 %s30, 1
      %s32 = scalar_select %p29, %s30, %s31
      %p35 = pneg %p29
      %p36 = scmp.eq.s32.totalorder %s20, 1
      %p37 = por %p35, %p36
      %p38 = scmp.ne.s32.totalorder %s30, %s33
      %p39 = scmp.eq.s32.totalorder %s20, 0
      %p40 = por %p38, %p39
      %p41 = scmp.ne.s32.totalorder %s30, %s33
      %p42 = scmp.eq.s32.totalorder %s25, 1
      %p43 = por %p41, %p42
      %p44 = scmp.ne.s32.totalorder %s33, %s34
      %p45 = scmp.eq.s32.totalorder %s25, 0
      %p46 = por %p44, %p45
      %p47 = scmp.ne.s32.totalorder %s33, %s34
      %p48 = scmp.eq.s32.totalorder %s26, 1
      %p49 = por %p47, %p48
      %p51 = scmp.ne.s32.totalorder %s34, %s50
      %p52 = scmp.eq.s32.totalorder %s26, 0
      %p53 = por %p51, %p52
      %s54 = ssub.s32 %s20, %s27
      %p55 = scmp.eq.s32.totalorder %s54, 0
      %s57 = sadd.s32 %s56, 1
      %s58 = scalar_select %p55, %s56, %s57
      %p61 = pneg %p55
      %p62 = scmp.eq.s32.totalorder %s20, 1
      %p63 = por %p61, %p62
      %p64 = scmp.ne.s32.totalorder %s56, %s59
      %p65 = scmp.eq.s32.totalorder %s20, 0
      %p66 = por %p64, %p65
      %p67 = scmp.ne.s32.totalorder %s56, %s59
      %p68 = scmp.eq.s32.totalorder %s25, 1
      %p69 = por %p67, %p68
      %p70 = scmp.ne.s32.totalorder %s59, %s60
      %p71 = scmp.eq.s32.totalorder %s25, 0
      %p72 = por %p70, %p71
      %p73 = scmp.ne.s32.totalorder %s59, %s60
      %p74 = scmp.eq.s32.totalorder %s26, 1
      %p75 = por %p73, %p74
      %p77 = scmp.ne.s32.totalorder %s60, %s76
      %p78 = scmp.eq.s32.totalorder %s26, 0
      %p79 = por %p77, %p78
      %s80 = ssub.s32 %s20, %s27
      %p81 = scmp.eq.s32.totalorder %s80, 0
      %s83 = sadd.s32 %s82, 1
      %s84 = scalar_select %p81, %s82, %s83
      %p87 = pneg %p81
      %p88 = scmp.eq.s32.totalorder %s20, 1
      %p89 = por %p87, %p88
      %p90 = scmp.ne.s32.totalorder %s82, %s85
      %p91 = scmp.eq.s32.totalorder %s20, 0
      %p92 = por %p90, %p91
      %p93 = scmp.ne.s32.totalorder %s82, %s85
      %p94 = scmp.eq.s32.totalorder %s25, 1
      %p95 = por %p93, %p94
      %p96 = scmp.ne.s32.totalorder %s85, %s86
      %p97 = scmp.eq.s32.totalorder %s25, 0
      %p98 = por %p96, %p97
      %p99 = scmp.ne.s32.totalorder %s85, %s86
      %p100 = scmp.eq.s32.totalorder %s26, 1
      %p101 = por %p99, %p100
      %p103 = scmp.ne.s32.totalorder %s86, %s102
      %p104 = scmp.eq.s32.totalorder %s26, 0
      %p105 = por %p103, %p104
      %s107 = sadd.s32 %s106, 1
      %p110 = scmp.eq.s32.totalorder %s20, 1
      %p111 = scmp.ne.s32.totalorder %s106, %s108
      %p112 = scmp.eq.s32.totalorder %s20, 0
      %p113 = por %p111, %p112
      %p114 = scmp.ne.s32.totalorder %s106, %s108
      %p115 = scmp.eq.s32.totalorder %s25, 1
      %p116 = por %p114, %p115
      %p117 = scmp.ne.s32.totalorder %s108, %s109
      %p118 = scmp.eq.s32.totalorder %s25, 0
      %p119 = por %p117, %p118
      %p120 = scmp.ne.s32.totalorder %s108, %s109
      %p121 = scmp.eq.s32.totalorder %s26, 1
      %p122 = por %p120, %p121
      %p124 = scmp.ne.s32.totalorder %s109, %s123
      %p125 = scmp.eq.s32.totalorder %s26, 0
      %p126 = por %p124, %p125
      %s128 = sadd.s32 %s127, 1
      %p131 = scmp.eq.s32.totalorder %s20, 1
      %p132 = scmp.ne.s32.totalorder %s127, %s129
      %p133 = scmp.eq.s32.totalorder %s20, 0
      %p134 = por %p132, %p133
      %p135 = scmp.ne.s32.totalorder %s127, %s129
      %p136 = scmp.eq.s32.totalorder %s25, 1
      %p137 = por %p135, %p136
      %p138 = scmp.ne.s32.totalorder %s129, %s130
      %p139 = scmp.eq.s32.totalorder %s25, 0
      %p140 = por %p138, %p139
      %p141 = scmp.ne.s32.totalorder %s129, %s130
      %p142 = scmp.eq.s32.totalorder %s26, 1
      %p143 = por %p141, %p142
      %p145 = scmp.ne.s32.totalorder %s130, %s144
      %p146 = scmp.eq.s32.totalorder %s26, 0
      %p147 = por %p145, %p146
      %s149 = sadd.s32 %s148, 1
      %p152 = scmp.eq.s32.totalorder %s20, 1
      %p153 = scmp.ne.s32.totalorder %s148, %s150
      %p154 = scmp.eq.s32.totalorder %s20, 0
      %p155 = por %p153, %p154
      %p156 = scmp.ne.s32.totalorder %s148, %s150
      %p157 = scmp.eq.s32.totalorder %s25, 1
      %p158 = por %p156, %p157
      %p159 = scmp.ne.s32.totalorder %s150, %s151
      %p160 = scmp.eq.s32.totalorder %s25, 0
      %p161 = por %p159, %p160
      %p162 = scmp.ne.s32.totalorder %s150, %s151
      %p163 = scmp.eq.s32.totalorder %s26, 1
      %p164 = por %p162, %p163
      %p166 = scmp.ne.s32.totalorder %s151, %s165
      %p167 = scmp.eq.s32.totalorder %s26, 0
      %p168 = por %p166, %p167
      %s170 = sadd.s32 %s169, 1
      %p173 = scmp.eq.s32.totalorder %s20, 1
      %p174 = scmp.ne.s32.totalorder %s169, %s171
      %p175 = scmp.eq.s32.totalorder %s20, 0
      %p176 = por %p174, %p175
      %p177 = scmp.ne.s32.totalorder %s169, %s171
      %p178 = scmp.eq.s32.totalorder %s25, 1
      %p179 = por %p177, %p178
      %p180 = scmp.ne.s32.totalorder %s171, %s172
      %p181 = scmp.eq.s32.totalorder %s25, 0
      %p182 = por %p180, %p181
      %p183 = scmp.ne.s32.totalorder %s171, %s172
      %p184 = scmp.eq.s32.totalorder %s26, 1
      %p185 = por %p183, %p184
      %p187 = scmp.ne.s32.totalorder %s172, %s186
      %p188 = scmp.eq.s32.totalorder %s26, 0
      %p189 = por %p187, %p188
      %s191 = sadd.s32 %s190, 1
      %p194 = scmp.eq.s32.totalorder %s20, 1
      %p195 = scmp.ne.s32.totalorder %s190, %s192
      %p196 = scmp.eq.s32.totalorder %s20, 0
      %p197 = por %p195, %p196
      %p198 = scmp.ne.s32.totalorder %s190, %s192
      %p199 = scmp.eq.s32.totalorder %s25, 1
      %p200 = por %p198, %p199
      %p201 = scmp.ne.s32.totalorder %s192, %s193
      %p202 = scmp.eq.s32.totalorder %s25, 0
      %p203 = por %p201, %p202
      %p204 = scmp.ne.s32.totalorder %s192, %s193
      %p205 = scmp.eq.s32.totalorder %s26, 1
      %p206 = por %p204, %p205
      %p208 = scmp.ne.s32.totalorder %s193, %s207
      %p209 = scmp.eq.s32.totalorder %s26, 0
      %p210 = por %p208, %p209
      %s212 = sadd.s32 %s211, 1
      %p215 = scmp.eq.s32.totalorder %s20, 1
      %p216 = scmp.ne.s32.totalorder %s211, %s213
      %p217 = scmp.eq.s32.totalorder %s20, 0
      %p218 = por %p216, %p217
      %p219 = scmp.ne.s32.totalorder %s211, %s213
      %p220 = scmp.eq.s32.totalorder %s25, 1
      %p221 = por %p219, %p220
      %p222 = scmp.ne.s32.totalorder %s213, %s214
      %p223 = scmp.eq.s32.totalorder %s25, 0
      %p224 = por %p222, %p223
      %p225 = scmp.ne.s32.totalorder %s213, %s214
      %p226 = scmp.eq.s32.totalorder %s26, 1
      %p227 = por %p225, %p226
      %p229 = scmp.ne.s32.totalorder %s214, %s228
      %p230 = scmp.eq.s32.totalorder %s26, 0
      %p231 = por %p229, %p230
      %s233 = sadd.s32 %s232, 1
      %p236 = scmp.eq.s32.totalorder %s20, 1
      %p237 = scmp.ne.s32.totalorder %s232, %s234
      %p238 = scmp.eq.s32.totalorder %s20, 0
      %p239 = por %p237, %p238
      %p240 = scmp.ne.s32.totalorder %s232, %s234
      %p241 = scmp.eq.s32.totalorder %s25, 1
      %p242 = por %p240, %p241
      %p243 = scmp.ne.s32.totalorder %s234, %s235
      %p244 = scmp.eq.s32.totalorder %s25, 0
      %p245 = por %p243, %p244
      %p246 = scmp.ne.s32.totalorder %s234, %s235
      %p247 = scmp.eq.s32.totalorder %s26, 1
      %p248 = por %p246, %p247
      %p250 = scmp.ne.s32.totalorder %s235, %s249
      %p251 = scmp.eq.s32.totalorder %s26, 0
      %p252 = por %p250, %p251
      %s253 = ssub.s32 %s20, %s27
      %p254 = scmp.eq.s32.totalorder %s253, 0
      %s256 = sadd.s32 %s255, 1
      %s257 = scalar_select %p254, %s255, %s256
      %p260 = pneg %p254
      %p261 = scmp.eq.s32.totalorder %s20, 1
      %p262 = por %p260, %p261
      %p263 = scmp.ne.s32.totalorder %s255, %s258
      %p264 = scmp.eq.s32.totalorder %s20, 0
      %p265 = por %p263, %p264
      %p266 = scmp.ne.s32.totalorder %s255, %s258
      %p267 = scmp.eq.s32.totalorder %s25, 1
      %p268 = por %p266, %p267
      %p269 = scmp.ne.s32.totalorder %s258, %s259
      %p270 = scmp.eq.s32.totalorder %s25, 0
      %p271 = por %p269, %p270
      %p272 = scmp.ne.s32.totalorder %s258, %s259
      %p273 = scmp.eq.s32.totalorder %s26, 1
      %p274 = por %p272, %p273
      %p276 = scmp.ne.s32.totalorder %s259, %s275
      %p277 = scmp.eq.s32.totalorder %s26, 0
      %p278 = por %p276, %p277
      %p279 = scmp.le.s32.totalorder 1, %s20
      %p280 = scmp.lt.s32.totalorder %s20, 3
      %p281 = pnand %p279, %p280
      %p282 = pneg %p281
      // Predicated region
      $region9: #{simplified_m3t_forward.1} parent=5 // pred_check
        _
      $region10: #{simplified_m3t_forward.1} parent=5 // pred_check_branch
        %284 = sbr.rel (%p281) target = $region12
      $region11: #{simplified_m3t_forward.1} parent=5 // pred_region
        %s285 = ssub.s32 %s20, 1
        // Predicated region
        $region13: #{simplified_m3t_forward.1} parent=11 // pred_check
          %p286 = pneg %p119
        $region14: #{simplified_m3t_forward.1} parent=11 // pred_check_branch
          %288 = sbr.rel (%p286) target = $region16
        $region15: #{simplified_m3t_forward.1} parent=11 // pred_region
          _
        $region16: #{simplified_m3t_forward.1} parent=11 // pred_fallthru
          _
        // Predicated region
        $region17: #{simplified_m3t_forward.1} parent=11 // pred_check
          %p289 = pneg %p140
        $region18: #{simplified_m3t_forward.1} parent=11 // pred_check_branch
          %291 = sbr.rel (%p289) target = $region20
        $region19: #{simplified_m3t_forward.1} parent=11 // pred_region
          %s293 = ssub.s32 64, 64
          %294 = vsyncadd [#allocation3], %s293
          %s295 = sshll.u32 [#allocation2], 4
          %s296 = int_to_ptr.vmem [resolvable:$true] %s295
          %301 = dma.hbm_to_vmem [thread:$0]  %s4, 64, %s296, [#allocation3], 32, 32, 2
        $region20: #{simplified_m3t_forward.1} parent=11 // pred_fallthru
          _
        // Predicated region
        $region21: #{simplified_m3t_forward.1} parent=11 // pred_check
          %p302 = pneg %p161
        $region22: #{simplified_m3t_forward.1} parent=11 // pred_check_branch
          %304 = sbr.rel (%p302) target = $region24
        $region23: #{simplified_m3t_forward.1} parent=11 // pred_region
          _
        $region24: #{simplified_m3t_forward.1} parent=11 // pred_fallthru
          _
        // Predicated region
        $region25: #{simplified_m3t_forward.1} parent=11 // pred_check
          %p305 = pneg %p182
        $region26: #{simplified_m3t_forward.1} parent=11 // pred_check_branch
          %307 = sbr.rel (%p305) target = $region28
        $region27: #{simplified_m3t_forward.1} parent=11 // pred_region
          _
        $region28: #{simplified_m3t_forward.1} parent=11 // pred_fallthru
          _
        // Predicated region
        $region29: #{simplified_m3t_forward.1} parent=11 // pred_check
          %p308 = pneg %p203
        $region30: #{simplified_m3t_forward.1} parent=11 // pred_check_branch
          %310 = sbr.rel (%p308) target = $region32
        $region31: #{simplified_m3t_forward.1} parent=11 // pred_region
          _
        $region32: #{simplified_m3t_forward.1} parent=11 // pred_fallthru
          _
        // Predicated region
        $region33: #{simplified_m3t_forward.1} parent=11 // pred_check
          %p311 = pneg %p224
        $region34: #{simplified_m3t_forward.1} parent=11 // pred_check_branch
          %313 = sbr.rel (%p311) target = $region36
        $region35: #{simplified_m3t_forward.1} parent=11 // pred_region
          _
        $region36: #{simplified_m3t_forward.1} parent=11 // pred_fallthru
          _
        // Predicated region
        $region37: #{simplified_m3t_forward.1} parent=11 // pred_check
          %p314 = pneg %p245
        $region38: #{simplified_m3t_forward.1} parent=11 // pred_check_branch
          %316 = sbr.rel (%p314) target = $region40
        $region39: #{simplified_m3t_forward.1} parent=11 // pred_region
          _
        $region40: #{simplified_m3t_forward.1} parent=11 // pred_fallthru
          _
      $region12: #{simplified_m3t_forward.1} parent=5 // pred_fallthru
        _
      %p317 = scmp.lt.s32.totalorder %s20, 2
      // Predicated region
      $region41: #{simplified_m3t_forward.1} parent=5 // pred_check
        %p318 = pneg %p317
      $region42: #{simplified_m3t_forward.1} parent=5 // pred_check_branch
        %320 = sbr.rel (%p318) target = $region44
      $region43: #{simplified_m3t_forward.1} parent=5 // pred_region
        // Predicated region
        $region45: #{simplified_m3t_forward.1} parent=43 // pred_check
          %p321 = pneg %p40
        $region46: #{simplified_m3t_forward.1} parent=43 // pred_check_branch
          %323 = sbr.rel (%p321) target = $region48
        $region47: #{simplified_m3t_forward.1} parent=43 // pred_region
          %p324 = scmp.lt.s32.totalorder %s20, 1
          %s325 = scalar_select %p324, %s20, 1
          %s326 = smul.addr %s325, 8
          %s327 = scalar_lea.vmem %s0, %s326
        $region48: #{simplified_m3t_forward.1} parent=43 // pred_fallthru
          _
        // Predicated region
        $region49: #{simplified_m3t_forward.1} parent=43 // pred_check
          %p328 = pneg %p66
        $region50: #{simplified_m3t_forward.1} parent=43 // pred_check_branch
          %330 = sbr.rel (%p328) target = $region52
        $region51: #{simplified_m3t_forward.1} parent=43 // pred_region
          %p331 = scmp.lt.s32.totalorder %s20, 1
          %s332 = scalar_select %p331, %s20, 1
          %s333 = scalar_lea.vmem %s1, %s332
        $region52: #{simplified_m3t_forward.1} parent=43 // pred_fallthru
          _
        // Predicated region
        $region53: #{simplified_m3t_forward.1} parent=43 // pred_check
          %p334 = pneg %p92
        $region54: #{simplified_m3t_forward.1} parent=43 // pred_check_branch
          %336 = sbr.rel (%p334) target = $region56
        $region55: #{simplified_m3t_forward.1} parent=43 // pred_region
          %p337 = scmp.lt.s32.totalorder %s20, 1
          %s338 = scalar_select %p337, %s20, 1
          %s339 = scalar_lea.vmem %s2, %s338
        $region56: #{simplified_m3t_forward.1} parent=43 // pred_fallthru
          _
      $region44: #{simplified_m3t_forward.1} parent=5 // pred_fallthru
        _
      %p340 = scmp.le.s32.totalorder 1, %s20
      %p341 = scmp.lt.s32.totalorder %s20, 3
      %p342 = pnand %p340, %p341
      %p343 = pneg %p342
      // Predicated region
      $region57: #{simplified_m3t_forward.1} parent=5 // pred_check
        _
      $region58: #{simplified_m3t_forward.1} parent=5 // pred_check_branch
        %345 = sbr.rel (%p342) target = $region60
      $region59: #{simplified_m3t_forward.1} parent=5 // pred_region
        %s346 = ssub.s32 %s20, 1
        // Predicated region
        $region61: #{simplified_m3t_forward.1} parent=59 // pred_check
          %p347 = pneg %p140
        $region62: #{simplified_m3t_forward.1} parent=59 // pred_check_branch
          %349 = sbr.rel (%p347) target = $region64
        $region63: #{simplified_m3t_forward.1} parent=59 // pred_region
          %350 = dma.done [#allocation3], 64
        $region64: #{simplified_m3t_forward.1} parent=59 // pred_fallthru
          _
        %p351 = scmp.lt.s32.totalorder %s25, 1
        %s352 = scalar_select %p351, %s25, 1
        %s353 = smul.addr %s352, 8
        %s354 = scalar_lea.vmem %s0, %s353
        %p355 = pneg %p46
        %p356 = pneg %p43
        %p357 = scmp.lt.s32.totalorder %s25, 1
        %s358 = scalar_select %p357, %s25, 1
        %s359 = scalar_lea.vmem %s1, %s358
        %p360 = pneg %p72
        %p361 = pneg %p69
        %p362 = scmp.lt.s32.totalorder %s25, 1
        %s363 = scalar_select %p362, %s25, 1
        %s364 = scalar_lea.vmem %s2, %s363
        %p365 = pneg %p98
        %p366 = pneg %p95
        %p367 = pneg %p119
        %p368 = pneg %p116
        %p369 = pneg %p140
        %p370 = pneg %p137
        %p371 = pneg %p161
        %p372 = pneg %p158
        %p373 = pneg %p182
        %p374 = pneg %p179
        %p375 = pneg %p203
        %p376 = pneg %p200
        %p377 = pneg %p224
        %p378 = pneg %p221
        %p379 = pneg %p245
        %p380 = pneg %p242
        %p381 = pneg %p271
        %p382 = pneg %p268
        %s383 = sand.u32 %s258, 1
        %s384 = scalar_lea.sflag [#allocation4], %s383
        %s385 = sand.u32 %s258, 1
        %s386 = scalar_lea.vmem [#allocation5], %s385
        %p387 = scmp.lt.s32.totalorder %s25, 1
        %s388 = scalar_select %p387, %s25, 1
        %s389 = smul.addr %s388, 8
        %s390 = scalar_lea.vmem %s0, %s389
        %p391 = scmp.lt.s32.totalorder %s25, 1
        %s392 = scalar_select %p391, %s25, 1
        %s393 = scalar_lea.vmem %s1, %s392
        %p394 = scmp.lt.s32.totalorder %s25, 1
        %s395 = scalar_select %p394, %s25, 1
        %s396 = scalar_lea.vmem %s2, %s395
        %v398 = vld [vmem:[%s390] sm:$0xff]
        %v399 = vld [vmem:[%s393] sm:$0x1]
        %vm400 = vcmp.gt.f32.partialorder %v399, 0.5
        %v401 = vld [vmem:[%s8] sm:$0xff]
        %v402 = vpack.c.bf16 %v398, %v398
        %v403 = vld [vmem:[%s3] sm:$0xff]
        %v404 = vld [vmem:[%s3 + $0x8] sm:$0xff]
        %v405 = vld [vmem:[%s3 + $0x10] sm:$0xff]
        %v406 = vld [vmem:[%s3 + $0x18] sm:$0xff]
        %v407 = vld [vmem:[%s3 + $0x20] sm:$0xff]
        %v408 = vld [vmem:[%s3 + $0x28] sm:$0xff]
        %v409 = vld [vmem:[%s3 + $0x30] sm:$0xff]
        %v410 = vld [vmem:[%s3 + $0x38] sm:$0xff]
        %v411 = vld [vmem:[#allocation2] sm:$0x3]
        %v413 = vlaneseq
        %v414 = vshrl.u32 %v413, 7
        %v415 = vsub.s32 0, %v414
        %v416 = vrot.slane %v411, %v415
        %v417 = vlaneseq
        %v418 = vshrl.u32 %v417, 7
        %v419 = vsub.s32 1, %v418
        %v420 = vrot.slane %v411, %v419
        %v431 = vunpack.c.l.b16 %v403
        %v432 = vunpack.c.h.b16 %v403
        %v433 = vunpack.c.l.b16 %v404
        %v434 = vunpack.c.h.b16 %v404
        %v435 = vunpack.c.l.b16 %v405
        %v436 = vunpack.c.h.b16 %v405
        %v437 = vunpack.c.l.b16 %v406
        %v438 = vunpack.c.h.b16 %v406
        %v439 = vunpack.c.l.b16 %v407
        %v440 = vunpack.c.h.b16 %v407
        %v441 = vunpack.c.l.b16 %v408
        %v442 = vunpack.c.h.b16 %v408
        %v443 = vunpack.c.l.b16 %v409
        %v444 = vunpack.c.h.b16 %v409
        %v445 = vunpack.c.l.b16 %v410
        %v446 = vunpack.c.h.b16 %v410
        %v447 = vpack.c.b16 %v433, %v431
        %v448 = vpack.c.b16 %v434, %v432
        %v449 = vpack.c.b16 %v437, %v435
        %v450 = vpack.c.b16 %v438, %v436
        %v451 = vpack.c.b16 %v441, %v439
        %v452 = vpack.c.b16 %v442, %v440
        %v453 = vpack.c.b16 %v445, %v443
        %v454 = vpack.c.b16 %v446, %v444
        %vm463 = vcmask 523264
        %v465 = vsel %vm463, %v402, 0
        %467 = vmatprep.subr.bf16.mxu0 0
        %468 = vmatpush1.bf16.msra.mxu0 0
        %469 = vmatprep.subr.bf16.mxu0 0
        %470 = vmatpush1.bf16.msra.mxu0 0
        %471 = vmatprep.subr.bf16.mxu0 0
        %472 = vmatpush1.bf16.msra.mxu0 0
        %473 = vmatprep.subr.bf16.mxu0 0
        %474 = vmatpush1.bf16.msra.mxu0 0
        %475 = vmatprep.subr.bf16.mxu0 %v454
        %476 = vmatpush1.bf16.msra.mxu0 %v453
        %477 = vmatprep.subr.bf16.mxu0 %v452
        %478 = vmatpush1.bf16.msra.mxu0 %v451
        %479 = vmatprep.subr.bf16.mxu0 %v450
        %480 = vmatpush1.bf16.msra.mxu0 %v449
        %481 = vmatprep.subr.bf16.mxu0 %v448
        %482 = vmatpush1.bf16.msra.mxu0 %v447
        %483 = vmatprep.subr.bf16.mxu0 0
        %484 = vmatpush2.bf16.msra.mxu0 0
        %485 = vmatprep.subr.bf16.mxu0 0
        %486 = vmatpush2.bf16.msra.mxu0 0
        %487 = vmatprep.subr.bf16.mxu0 0
        %488 = vmatpush2.bf16.msra.mxu0 0
        %489 = vmatprep.subr.bf16.mxu0 0
        %490 = vmatpush2.bf16.msra.mxu0 0
        %491 = vmatprep.subr.bf16.mxu0 0
        %492 = vmatpush2.bf16.msra.mxu0 0
        %493 = vmatprep.subr.bf16.mxu0 0
        %494 = vmatpush2.bf16.msra.mxu0 0
        %495 = vmatprep.subr.bf16.mxu0 0
        %496 = vmatpush2.bf16.msra.mxu0 0
        %497 = vmatprep.subr.bf16.mxu0 0
        %498 = vmatpush2.bf16.msra.mxu0 0
        %499 = vmatprep.mubr.bf16.mxu0 0
        %500 = vmatmul.mubr.bf16.gmra.mxu0 %v465
        %v501 = vpop.f32.mrf.mxu0
        %v502 = vadd.f32 %v416, %v501
        %v503 = vpop.f32.mrf.mxu0
        %v504 = vadd.f32 %v420, %v503
        %v505 = vpop.f32.mrf.mxu0
        %v506 = vpop.f32.mrf.mxu0
        %507 = vdwg.mxu0
        %v508 = vpack.c.bf16 %v502, %v502
        %v509 = vpack.c.bf16 %v504, %v504
        %511 = vrot.lane.b32.xlu0 %v508, 64
        %v512 = vpop.permute.xlu0 %511
        %vm513 = vcmask 130048
        %v515 = vsel %vm513, %v508, 0
        %v518 = vsel %vm513, %v512, 0
        %520 = vmatprep.subr.bf16.mxu0 0
        %521 = vmatpush1.bf16.xpose.msra.mxu0 0
        %522 = vmatprep.subr.bf16.mxu0 0
        %523 = vmatpush1.bf16.xpose.msra.mxu0 0
        %524 = vmatprep.subr.bf16.mxu0 0
        %525 = vmatpush1.bf16.xpose.msra.mxu0 0
        %526 = vmatprep.subr.bf16.mxu0 0
        %527 = vmatpush1.bf16.xpose.msra.mxu0 0
        %528 = vmatprep.subr.bf16.mxu0 0
        %529 = vmatpush1.bf16.xpose.msra.mxu0 0
        %530 = vmatprep.subr.bf16.mxu0 0
        %531 = vmatpush1.bf16.xpose.msra.mxu0 0
        %532 = vmatprep.subr.bf16.mxu0 0
        %533 = vmatpush1.bf16.xpose.msra.mxu0 0
        %534 = vmatprep.subr.bf16.mxu0 0
        %535 = vmatpush1.bf16.xpose.msra.mxu0 %v518
        %536 = vmatprep.subr.bf16.mxu0 0
        %537 = vmatpush2.bf16.xpose.msra.mxu0 0
        %538 = vmatprep.subr.bf16.mxu0 0
        %539 = vmatpush2.bf16.xpose.msra.mxu0 0
        %540 = vmatprep.subr.bf16.mxu0 0
        %541 = vmatpush2.bf16.xpose.msra.mxu0 0
        %542 = vmatprep.subr.bf16.mxu0 0
        %543 = vmatpush2.bf16.xpose.msra.mxu0 0
        %544 = vmatprep.subr.bf16.mxu0 0
        %545 = vmatpush2.bf16.xpose.msra.mxu0 0
        %546 = vmatprep.subr.bf16.mxu0 0
        %547 = vmatpush2.bf16.xpose.msra.mxu0 0
        %548 = vmatprep.subr.bf16.mxu0 0
        %549 = vmatpush2.bf16.xpose.msra.mxu0 0
        %550 = vmatprep.subr.bf16.mxu0 0
        %551 = vmatpush2.bf16.xpose.msra.mxu0 0
        %552 = vmatprep.mubr.bf16.mxu0 0
        %553 = vmatmul.mubr.bf16.gmra.mxu0 %v515
        %v554 = vpop.f32.mrf.mxu0
        %v555 = vadd.f32 0.0, %v554
        %v556 = vpop.f32.mrf.mxu0
        %v557 = vpop.f32.mrf.mxu0
        %v558 = vpop.f32.mrf.mxu0
        %559 = vdwg.mxu0
        %v560 = vsel %vm400, 1, 0
        %v561 = vlaneseq
        %v562 = vshrl.u32 %v561, 7
        %v563 = vsub.s32 0, %v562
        %v564 = vrot.slane %v560, %v563
        %vm565 = vcmp.eq.s32.totalorder %v564, 1
        %v566 = vsel %vm565, %v555, -1e+30
        %vm567 = vcmask 64512
        %v568 = vsel %vm567, %v566, -inf
        %569 = vmax.xlane.f32.xlu0 %v568
        %v570 = vpop.xlane.xlu0 %569
        %v571 = vsub.f32 %v566, %v570
        %v572 = vmul.f32 %v571, 1.442695
        %v573 = vpow.pop %v572
        %v574 = vsel %vm567, %v573, 0.0
        %575 = vadd.xlane.f32.xlu0 %v574
        %v576 = vpop.xlane.xlu0 %575
        %v577 = vrcp.pop %v576
        %v578 = vmul.f32 %v573, %v577
        %v579 = vpack.c.bf16 %v578, %v578
        %v581 = vsel %vm567, %v579, 0
        %vm583 = vcmask 1043456
        %v585 = vsel %vm583, %v509, 0
        %587 = vmatprep.subr.bf16.mxu0 0
        %588 = vmatpush1.bf16.msra.mxu0 0
        %589 = vmatprep.subr.bf16.mxu0 0
        %590 = vmatpush1.bf16.msra.mxu0 0
        %591 = vmatprep.subr.bf16.mxu0 0
        %592 = vmatpush1.bf16.msra.mxu0 0
        %593 = vmatprep.subr.bf16.mxu0 0
        %594 = vmatpush1.bf16.msra.mxu0 0
        %595 = vmatprep.subr.bf16.mxu0 0
        %596 = vmatpush1.bf16.msra.mxu0 0
        %597 = vmatprep.subr.bf16.mxu0 0
        %598 = vmatpush1.bf16.msra.mxu0 0
        %599 = vmatprep.subr.bf16.mxu0 0
        %600 = vmatpush1.bf16.msra.mxu0 0
        %601 = vmatprep.subr.bf16.mxu0 0
        %602 = vmatpush1.bf16.msra.mxu0 %v585
        %603 = vmatprep.subr.bf16.mxu0 0
        %604 = vmatpush2.bf16.msra.mxu0 0
        %605 = vmatprep.subr.bf16.mxu0 0
        %606 = vmatpush2.bf16.msra.mxu0 0
        %607 = vmatprep.subr.bf16.mxu0 0
        %608 = vmatpush2.bf16.msra.mxu0 0
        %609 = vmatprep.subr.bf16.mxu0 0
        %610 = vmatpush2.bf16.msra.mxu0 0
        %611 = vmatprep.subr.bf16.mxu0 0
        %612 = vmatpush2.bf16.msra.mxu0 0
        %613 = vmatprep.subr.bf16.mxu0 0
        %614 = vmatpush2.bf16.msra.mxu0 0
        %615 = vmatprep.subr.bf16.mxu0 0
        %616 = vmatpush2.bf16.msra.mxu0 0
        %617 = vmatprep.subr.bf16.mxu0 0
        %618 = vmatpush2.bf16.msra.mxu0 0
        %619 = vmatprep.mubr.bf16.mxu0 0
        %620 = vmatmul.mubr.bf16.gmra.mxu0 %v581
        %v621 = vpop.f32.mrf.mxu0
        %v622 = vadd.f32 0.0, %v621
        %v623 = vpop.f32.mrf.mxu0
        %v624 = vpop.f32.mrf.mxu0
        %v625 = vpop.f32.mrf.mxu0
        %626 = vdwg.mxu0
        %627 = vrot.lane.b32.xlu0 %v508, 112
        %v628 = vpop.permute.xlu0 %627
        %629 = vrot.lane.b32.xlu0 %v508, 48
        %v630 = vpop.permute.xlu0 %629
        %v632 = vsel %vm513, %v628, 0
        %v635 = vsel %vm513, %v630, 0
        %637 = vmatprep.subr.bf16.mxu0 0
        %638 = vmatpush1.bf16.xpose.msra.mxu0 0
        %639 = vmatprep.subr.bf16.mxu0 0
        %640 = vmatpush1.bf16.xpose.msra.mxu0 0
        %641 = vmatprep.subr.bf16.mxu0 0
        %642 = vmatpush1.bf16.xpose.msra.mxu0 0
        %643 = vmatprep.subr.bf16.mxu0 0
        %644 = vmatpush1.bf16.xpose.msra.mxu0 0
        %645 = vmatprep.subr.bf16.mxu0 0
        %646 = vmatpush1.bf16.xpose.msra.mxu0 0
        %647 = vmatprep.subr.bf16.mxu0 0
        %648 = vmatpush1.bf16.xpose.msra.mxu0 0
        %649 = vmatprep.subr.bf16.mxu0 0
        %650 = vmatpush1.bf16.xpose.msra.mxu0 0
        %651 = vmatprep.subr.bf16.mxu0 0
        %652 = vmatpush1.bf16.xpose.msra.mxu0 %v635
        %653 = vmatprep.subr.bf16.mxu0 0
        %654 = vmatpush2.bf16.xpose.msra.mxu0 0
        %655 = vmatprep.subr.bf16.mxu0 0
        %656 = vmatpush2.bf16.xpose.msra.mxu0 0
        %657 = vmatprep.subr.bf16.mxu0 0
        %658 = vmatpush2.bf16.xpose.msra.mxu0 0
        %659 = vmatprep.subr.bf16.mxu0 0
        %660 = vmatpush2.bf16.xpose.msra.mxu0 0
        %661 = vmatprep.subr.bf16.mxu0 0
        %662 = vmatpush2.bf16.xpose.msra.mxu0 0
        %663 = vmatprep.subr.bf16.mxu0 0
        %664 = vmatpush2.bf16.xpose.msra.mxu0 0
        %665 = vmatprep.subr.bf16.mxu0 0
        %666 = vmatpush2.bf16.xpose.msra.mxu0 0
        %667 = vmatprep.subr.bf16.mxu0 0
        %668 = vmatpush2.bf16.xpose.msra.mxu0 0
        %669 = vmatprep.mubr.bf16.mxu0 0
        %670 = vmatmul.mubr.bf16.gmra.mxu0 %v632
        %v671 = vpop.f32.mrf.mxu0
        %v672 = vadd.f32 0.0, %v671
        %v673 = vpop.f32.mrf.mxu0
        %v674 = vpop.f32.mrf.mxu0
        %v675 = vpop.f32.mrf.mxu0
        %676 = vdwg.mxu0
        %v677 = vsel %vm565, %v672, -1e+30
        %v678 = vsel %vm567, %v677, -inf
        %679 = vmax.xlane.f32.xlu0 %v678
        %v680 = vpop.xlane.xlu0 %679
        %v681 = vsub.f32 %v677, %v680
        %v682 = vmul.f32 %v681, 1.442695
        %v683 = vpow.pop %v682
        %v684 = vsel %vm567, %v683, 0.0
        %685 = vadd.xlane.f32.xlu0 %v684
        %v686 = vpop.xlane.xlu0 %685
        %v687 = vrcp.pop %v686
        %v688 = vmul.f32 %v683, %v687
        %v689 = vpack.c.bf16 %v688, %v688
        %691 = vrot.lane.b32.xlu0 %v509, 112
        %v692 = vpop.permute.xlu0 %691
        %v694 = vsel %vm567, %v689, 0
        %v697 = vsel %vm583, %v692, 0
        %699 = vmatprep.subr.bf16.mxu0 0
        %700 = vmatpush1.bf16.msra.mxu0 0
        %701 = vmatprep.subr.bf16.mxu0 0
        %702 = vmatpush1.bf16.msra.mxu0 0
        %703 = vmatprep.subr.bf16.mxu0 0
        %704 = vmatpush1.bf16.msra.mxu0 0
        %705 = vmatprep.subr.bf16.mxu0 0
        %706 = vmatpush1.bf16.msra.mxu0 0
        %707 = vmatprep.subr.bf16.mxu0 0
        %708 = vmatpush1.bf16.msra.mxu0 0
        %709 = vmatprep.subr.bf16.mxu0 0
        %710 = vmatpush1.bf16.msra.mxu0 0
        %711 = vmatprep.subr.bf16.mxu0 0
        %712 = vmatpush1.bf16.msra.mxu0 0
        %713 = vmatprep.subr.bf16.mxu0 0
        %714 = vmatpush1.bf16.msra.mxu0 %v697
        %715 = vmatprep.subr.bf16.mxu0 0
        %716 = vmatpush2.bf16.msra.mxu0 0
        %717 = vmatprep.subr.bf16.mxu0 0
        %718 = vmatpush2.bf16.msra.mxu0 0
        %719 = vmatprep.subr.bf16.mxu0 0
        %720 = vmatpush2.bf16.msra.mxu0 0
        %721 = vmatprep.subr.bf16.mxu0 0
        %722 = vmatpush2.bf16.msra.mxu0 0
        %723 = vmatprep.subr.bf16.mxu0 0
        %724 = vmatpush2.bf16.msra.mxu0 0
        %725 = vmatprep.subr.bf16.mxu0 0
        %726 = vmatpush2.bf16.msra.mxu0 0
        %727 = vmatprep.subr.bf16.mxu0 0
        %728 = vmatpush2.bf16.msra.mxu0 0
        %729 = vmatprep.subr.bf16.mxu0 0
        %730 = vmatpush2.bf16.msra.mxu0 0
        %731 = vmatprep.mubr.bf16.mxu0 0
        %732 = vmatmul.mubr.bf16.gmra.mxu0 %v694
        %v733 = vpop.f32.mrf.mxu0
        %v734 = vadd.f32 0.0, %v733
        %v735 = vpop.f32.mrf.mxu0
        %v736 = vpop.f32.mrf.mxu0
        %v737 = vpop.f32.mrf.mxu0
        %738 = vdwg.mxu0
        %739 = vrot.lane.b32.xlu0 %v508, 96
        %v740 = vpop.permute.xlu0 %739
        %741 = vrot.lane.b32.xlu0 %v508, 32
        %v742 = vpop.permute.xlu0 %741
        %v744 = vsel %vm513, %v740, 0
        %v747 = vsel %vm513, %v742, 0
        %749 = vmatprep.subr.bf16.mxu0 0
        %750 = vmatpush1.bf16.xpose.msra.mxu0 0
        %751 = vmatprep.subr.bf16.mxu0 0
        %752 = vmatpush1.bf16.xpose.msra.mxu0 0
        %753 = vmatprep.subr.bf16.mxu0 0
        %754 = vmatpush1.bf16.xpose.msra.mxu0 0
        %755 = vmatprep.subr.bf16.mxu0 0
        %756 = vmatpush1.bf16.xpose.msra.mxu0 0
        %757 = vmatprep.subr.bf16.mxu0 0
        %758 = vmatpush1.bf16.xpose.msra.mxu0 0
        %759 = vmatprep.subr.bf16.mxu0 0
        %760 = vmatpush1.bf16.xpose.msra.mxu0 0
        %761 = vmatprep.subr.bf16.mxu0 0
        %762 = vmatpush1.bf16.xpose.msra.mxu0 0
        %763 = vmatprep.subr.bf16.mxu0 0
        %764 = vmatpush1.bf16.xpose.msra.mxu0 %v747
        %765 = vmatprep.subr.bf16.mxu0 0
        %766 = vmatpush2.bf16.xpose.msra.mxu0 0
        %767 = vmatprep.subr.bf16.mxu0 0
        %768 = vmatpush2.bf16.xpose.msra.mxu0 0
        %769 = vmatprep.subr.bf16.mxu0 0
        %770 = vmatpush2.bf16.xpose.msra.mxu0 0
        %771 = vmatprep.subr.bf16.mxu0 0
        %772 = vmatpush2.bf16.xpose.msra.mxu0 0
        %773 = vmatprep.subr.bf16.mxu0 0
        %774 = vmatpush2.bf16.xpose.msra.mxu0 0
        %775 = vmatprep.subr.bf16.mxu0 0
        %776 = vmatpush2.bf16.xpose.msra.mxu0 0
        %777 = vmatprep.subr.bf16.mxu0 0
        %778 = vmatpush2.bf16.xpose.msra.mxu0 0
        %779 = vmatprep.subr.bf16.mxu0 0
        %780 = vmatpush2.bf16.xpose.msra.mxu0 0
        %781 = vmatprep.mubr.bf16.mxu0 0
        %782 = vmatmul.mubr.bf16.gmra.mxu0 %v744
        %v783 = vpop.f32.mrf.mxu0
        %v784 = vadd.f32 0.0, %v783
        %v785 = vpop.f32.mrf.mxu0
        %v786 = vpop.f32.mrf.mxu0
        %v787 = vpop.f32.mrf.mxu0
        %788 = vdwg.mxu0
        %v789 = vsel %vm565, %v784, -1e+30
        %v790 = vsel %vm567, %v789, -inf
        %791 = vmax.xlane.f32.xlu0 %v790
        %v792 = vpop.xlane.xlu0 %791
        %v793 = vsub.f32 %v789, %v792
        %v794 = vmul.f32 %v793, 1.442695
        %v795 = vpow.pop %v794
        %v796 = vsel %vm567, %v795, 0.0
        %797 = vadd.xlane.f32.xlu0 %v796
        %v798 = vpop.xlane.xlu0 %797
        %v799 = vrcp.pop %v798
        %v800 = vmul.f32 %v795, %v799
        %v801 = vpack.c.bf16 %v800, %v800
        %802 = vrot.lane.b32.xlu0 %v509, 96
        %v803 = vpop.permute.xlu0 %802
        %v805 = vsel %vm567, %v801, 0
        %v808 = vsel %vm583, %v803, 0
        %810 = vmatprep.subr.bf16.mxu0 0
        %811 = vmatpush1.bf16.msra.mxu0 0
        %812 = vmatprep.subr.bf16.mxu0 0
        %813 = vmatpush1.bf16.msra.mxu0 0
        %814 = vmatprep.subr.bf16.mxu0 0
        %815 = vmatpush1.bf16.msra.mxu0 0
        %816 = vmatprep.subr.bf16.mxu0 0
        %817 = vmatpush1.bf16.msra.mxu0 0
        %818 = vmatprep.subr.bf16.mxu0 0
        %819 = vmatpush1.bf16.msra.mxu0 0
        %820 = vmatprep.subr.bf16.mxu0 0
        %821 = vmatpush1.bf16.msra.mxu0 0
        %822 = vmatprep.subr.bf16.mxu0 0
        %823 = vmatpush1.bf16.msra.mxu0 0
        %824 = vmatprep.subr.bf16.mxu0 0
        %825 = vmatpush1.bf16.msra.mxu0 %v808
        %826 = vmatprep.subr.bf16.mxu0 0
        %827 = vmatpush2.bf16.msra.mxu0 0
        %828 = vmatprep.subr.bf16.mxu0 0
        %829 = vmatpush2.bf16.msra.mxu0 0
        %830 = vmatprep.subr.bf16.mxu0 0
        %831 = vmatpush2.bf16.msra.mxu0 0
        %832 = vmatprep.subr.bf16.mxu0 0
        %833 = vmatpush2.bf16.msra.mxu0 0
        %834 = vmatprep.subr.bf16.mxu0 0
        %835 = vmatpush2.bf16.msra.mxu0 0
        %836 = vmatprep.subr.bf16.mxu0 0
        %837 = vmatpush2.bf16.msra.mxu0 0
        %838 = vmatprep.subr.bf16.mxu0 0
        %839 = vmatpush2.bf16.msra.mxu0 0
        %840 = vmatprep.subr.bf16.mxu0 0
        %841 = vmatpush2.bf16.msra.mxu0 0
        %842 = vmatprep.mubr.bf16.mxu0 0
        %843 = vmatmul.mubr.bf16.gmra.mxu0 %v805
        %v844 = vpop.f32.mrf.mxu0
        %v845 = vadd.f32 0.0, %v844
        %v846 = vpop.f32.mrf.mxu0
        %v847 = vpop.f32.mrf.mxu0
        %v848 = vpop.f32.mrf.mxu0
        %849 = vdwg.mxu0
        %850 = vrot.lane.b32.xlu0 %v508, 80
        %v851 = vpop.permute.xlu0 %850
        %852 = vrot.lane.b32.xlu0 %v508, 16
        %v853 = vpop.permute.xlu0 %852
        %v855 = vsel %vm513, %v851, 0
        %v858 = vsel %vm513, %v853, 0
        %860 = vmatprep.subr.bf16.mxu0 0
        %861 = vmatpush1.bf16.xpose.msra.mxu0 0
        %862 = vmatprep.subr.bf16.mxu0 0
        %863 = vmatpush1.bf16.xpose.msra.mxu0 0
        %864 = vmatprep.subr.bf16.mxu0 0
        %865 = vmatpush1.bf16.xpose.msra.mxu0 0
        %866 = vmatprep.subr.bf16.mxu0 0
        %867 = vmatpush1.bf16.xpose.msra.mxu0 0
        %868 = vmatprep.subr.bf16.mxu0 0
        %869 = vmatpush1.bf16.xpose.msra.mxu0 0
        %870 = vmatprep.subr.bf16.mxu0 0
        %871 = vmatpush1.bf16.xpose.msra.mxu0 0
        %872 = vmatprep.subr.bf16.mxu0 0
        %873 = vmatpush1.bf16.xpose.msra.mxu0 0
        %874 = vmatprep.subr.bf16.mxu0 0
        %875 = vmatpush1.bf16.xpose.msra.mxu0 %v858
        %876 = vmatprep.subr.bf16.mxu0 0
        %877 = vmatpush2.bf16.xpose.msra.mxu0 0
        %878 = vmatprep.subr.bf16.mxu0 0
        %879 = vmatpush2.bf16.xpose.msra.mxu0 0
        %880 = vmatprep.subr.bf16.mxu0 0
        %881 = vmatpush2.bf16.xpose.msra.mxu0 0
        %882 = vmatprep.subr.bf16.mxu0 0
        %883 = vmatpush2.bf16.xpose.msra.mxu0 0
        %884 = vmatprep.subr.bf16.mxu0 0
        %885 = vmatpush2.bf16.xpose.msra.mxu0 0
        %886 = vmatprep.subr.bf16.mxu0 0
        %887 = vmatpush2.bf16.xpose.msra.mxu0 0
        %888 = vmatprep.subr.bf16.mxu0 0
        %889 = vmatpush2.bf16.xpose.msra.mxu0 0
        %890 = vmatprep.subr.bf16.mxu0 0
        %891 = vmatpush2.bf16.xpose.msra.mxu0 0
        %892 = vmatprep.mubr.bf16.mxu0 0
        %893 = vmatmul.mubr.bf16.gmra.mxu0 %v855
        %v894 = vpop.f32.mrf.mxu0
        %v895 = vadd.f32 0.0, %v894
        %v896 = vpop.f32.mrf.mxu0
        %v897 = vpop.f32.mrf.mxu0
        %v898 = vpop.f32.mrf.mxu0
        %899 = vdwg.mxu0
        %v900 = vsel %vm565, %v895, -1e+30
        %v901 = vsel %vm567, %v900, -inf
        %902 = vmax.xlane.f32.xlu0 %v901
        %v903 = vpop.xlane.xlu0 %902
        %v904 = vsub.f32 %v900, %v903
        %v905 = vmul.f32 %v904, 1.442695
        %v906 = vpow.pop %v905
        %v907 = vsel %vm567, %v906, 0.0
        %908 = vadd.xlane.f32.xlu0 %v907
        %v909 = vpop.xlane.xlu0 %908
        %v910 = vrcp.pop %v909
        %v911 = vmul.f32 %v906, %v910
        %v912 = vpack.c.bf16 %v911, %v911
        %913 = vrot.lane.b32.xlu0 %v509, 80
        %v914 = vpop.permute.xlu0 %913
        %v916 = vsel %vm567, %v912, 0
        %v919 = vsel %vm583, %v914, 0
        %921 = vmatprep.subr.bf16.mxu0 0
        %922 = vmatpush1.bf16.msra.mxu0 0
        %923 = vmatprep.subr.bf16.mxu0 0
        %924 = vmatpush1.bf16.msra.mxu0 0
        %925 = vmatprep.subr.bf16.mxu0 0
        %926 = vmatpush1.bf16.msra.mxu0 0
        %927 = vmatprep.subr.bf16.mxu0 0
        %928 = vmatpush1.bf16.msra.mxu0 0
        %929 = vmatprep.subr.bf16.mxu0 0
        %930 = vmatpush1.bf16.msra.mxu0 0
        %931 = vmatprep.subr.bf16.mxu0 0
        %932 = vmatpush1.bf16.msra.mxu0 0
        %933 = vmatprep.subr.bf16.mxu0 0
        %934 = vmatpush1.bf16.msra.mxu0 0
        %935 = vmatprep.subr.bf16.mxu0 0
        %936 = vmatpush1.bf16.msra.mxu0 %v919
        %937 = vmatprep.subr.bf16.mxu0 0
        %938 = vmatpush2.bf16.msra.mxu0 0
        %939 = vmatprep.subr.bf16.mxu0 0
        %940 = vmatpush2.bf16.msra.mxu0 0
        %941 = vmatprep.subr.bf16.mxu0 0
        %942 = vmatpush2.bf16.msra.mxu0 0
        %943 = vmatprep.subr.bf16.mxu0 0
        %944 = vmatpush2.bf16.msra.mxu0 0
        %945 = vmatprep.subr.bf16.mxu0 0
        %946 = vmatpush2.bf16.msra.mxu0 0
        %947 = vmatprep.subr.bf16.mxu0 0
        %948 = vmatpush2.bf16.msra.mxu0 0
        %949 = vmatprep.subr.bf16.mxu0 0
        %950 = vmatpush2.bf16.msra.mxu0 0
        %951 = vmatprep.subr.bf16.mxu0 0
        %952 = vmatpush2.bf16.msra.mxu0 0
        %953 = vmatprep.mubr.bf16.mxu0 0
        %954 = vmatmul.mubr.bf16.gmra.mxu0 %v916
        %v955 = vpop.f32.mrf.mxu0
        %v956 = vadd.f32 0.0, %v955
        %v957 = vpop.f32.mrf.mxu0
        %v958 = vpop.f32.mrf.mxu0
        %v959 = vpop.f32.mrf.mxu0
        %960 = vdwg.mxu0
        %962 = vrot.lane.b32.xlu0 %v734, 16
        %v963 = vpop.permute.xlu0 %962
        %966 = vrot.lane.b32.xlu0 %v845, 32
        %v967 = vpop.permute.xlu0 %966
        %970 = vrot.lane.b32.xlu0 %v956, 48
        %v971 = vpop.permute.xlu0 %970
        %v973 = vsel %vm513, %v622, %v963
        %vm974 = vcmask 261120
        %v975 = vsel %vm974, %v973, %v967
        %vm976 = vcmask 392192
        %v977 = vsel %vm976, %v975, %v971
        %v978 = vpack.c.bf16 %v977, %v977
        %v979 = vld [vmem:[%s5] sm:$0xf]
        %v980 = vld [vmem:[%s5 + $0x4] sm:$0xf]
        %v981 = vld [vmem:[%s5 + $0x8] sm:$0xf]
        %v982 = vld [vmem:[%s5 + $0xc] sm:$0xf]
        %v983 = vld [vmem:[%s5 + $0x10] sm:$0xf]
        %v984 = vld [vmem:[%s5 + $0x14] sm:$0xf]
        %v985 = vld [vmem:[%s5 + $0x18] sm:$0xf]
        %v986 = vld [vmem:[%s5 + $0x1c] sm:$0xf]
        %v987 = vlaneseq
        %v988 = vshrl.u32 %v987, 7
        %v989 = vsub.s32 0, %v988
        %v990 = vrot.slane %v401, %v989
        %v999 = vunpack.c.l.b16 %v979
        %v1000 = vunpack.c.l.b16 %v980
        %v1001 = vunpack.c.l.b16 %v981
        %v1002 = vunpack.c.l.b16 %v982
        %v1003 = vunpack.c.l.b16 %v983
        %v1004 = vunpack.c.l.b16 %v984
        %v1005 = vunpack.c.l.b16 %v985
        %v1006 = vunpack.c.l.b16 %v986
        %v1007 = vpack.c.b16 %v1000, %v999
        %v1008 = vpack.c.b16 %v1002, %v1001
        %v1009 = vpack.c.b16 %v1004, %v1003
        %v1010 = vpack.c.b16 %v1006, %v1005
        %v1016 = vsel %vm463, %v978, 0
        %1018 = vmatprep.subr.bf16.mxu0 0
        %1019 = vmatpush1.bf16.msra.mxu0 0
        %1020 = vmatprep.subr.bf16.mxu0 0
        %1021 = vmatpush1.bf16.msra.mxu0 0
        %1022 = vmatprep.subr.bf16.mxu0 0
        %1023 = vmatpush1.bf16.msra.mxu0 0
        %1024 = vmatprep.subr.bf16.mxu0 0
        %1025 = vmatpush1.bf16.msra.mxu0 0
        %1026 = vmatprep.subr.bf16.mxu0 0
        %1027 = vmatpush1.bf16.msra.mxu0 %v1010
        %1028 = vmatprep.subr.bf16.mxu0 0
        %1029 = vmatpush1.bf16.msra.mxu0 %v1009
        %1030 = vmatprep.subr.bf16.mxu0 0
        %1031 = vmatpush1.bf16.msra.mxu0 %v1008
        %1032 = vmatprep.subr.bf16.mxu0 0
        %1033 = vmatpush1.bf16.msra.mxu0 %v1007
        %1034 = vmatprep.subr.bf16.mxu0 0
        %1035 = vmatpush2.bf16.msra.mxu0 0
        %1036 = vmatprep.subr.bf16.mxu0 0
        %1037 = vmatpush2.bf16.msra.mxu0 0
        %1038 = vmatprep.subr.bf16.mxu0 0
        %1039 = vmatpush2.bf16.msra.mxu0 0
        %1040 = vmatprep.subr.bf16.mxu0 0
        %1041 = vmatpush2.bf16.msra.mxu0 0
        %1042 = vmatprep.subr.bf16.mxu0 0
        %1043 = vmatpush2.bf16.msra.mxu0 0
        %1044 = vmatprep.subr.bf16.mxu0 0
        %1045 = vmatpush2.bf16.msra.mxu0 0
        %1046 = vmatprep.subr.bf16.mxu0 0
        %1047 = vmatpush2.bf16.msra.mxu0 0
        %1048 = vmatprep.subr.bf16.mxu0 0
        %1049 = vmatpush2.bf16.msra.mxu0 0
        %1050 = vmatprep.mubr.bf16.mxu0 0
        %1051 = vmatmul.mubr.bf16.gmra.mxu0 %v1016
        %v1052 = vpop.f32.mrf.mxu0
        %v1053 = vadd.f32 %v990, %v1052
        %v1054 = vpop.f32.mrf.mxu0
        %v1055 = vpop.f32.mrf.mxu0
        %v1056 = vpop.f32.mrf.mxu0
        %1057 = vdwg.mxu0
        %v1058 = vadd.f32 %v398, %v1053
        %v1059 = vsel %vm463, %v1058, 0.0
        %1060 = vadd.xlane.f32.xlu0 %v1059
        %v1061 = vpop.xlane.xlu0 %1060
        %v1062 = vrcp.pop 64.0
        %v1063 = vmul.f32 %v1061, %v1062
        %v1064 = vsub.f32 %v1058, %v1063
        %v1065 = vmul.f32 %v1064, %v1064
        %v1066 = vsel %vm463, %v1065, 0.0
        %1067 = vadd.xlane.f32.xlu0 %v1066
        %v1068 = vpop.xlane.xlu0 %1067
        %v1069 = vmul.f32 %v1068, %v1062
        %v1070 = vadd.f32 %v1069, 1e-05
        %v1071 = vrsqrt.pop %v1070
        %v1072 = vmul.f32 %v1064, %v1071
        %v1073 = vlaneseq
        %v1074 = vshrl.u32 %v1073, 7
        %v1075 = vsub.s32 1, %v1074
        %v1076 = vrot.slane %v401, %v1075
        %v1077 = vmul.f32 %v1072, %v1076
        %v1078 = vlaneseq
        %v1079 = vshrl.u32 %v1078, 7
        %v1080 = vsub.s32 2, %v1079
        %v1081 = vrot.slane %v401, %v1080
        %v1082 = vadd.f32 %v1077, %v1081
        %v1083 = vpack.c.bf16 %v1082, %v1082
        %v1084 = vld [vmem:[%s6] sm:$0xf]
        %v1085 = vld [vmem:[%s6 + $0x4] sm:$0xf]
        %v1086 = vld [vmem:[%s6 + $0x8] sm:$0xf]
        %v1087 = vld [vmem:[%s6 + $0xc] sm:$0xf]
        %v1088 = vld [vmem:[%s6 + $0x10] sm:$0xf]
        %v1089 = vld [vmem:[%s6 + $0x14] sm:$0xf]
        %v1090 = vld [vmem:[%s6 + $0x18] sm:$0xf]
        %v1091 = vld [vmem:[%s6 + $0x1c] sm:$0xf]
        %v1092 = vlaneseq
        %v1093 = vshrl.u32 %v1092, 7
        %v1094 = vsub.s32 3, %v1093
        %v1095 = vrot.slane %v401, %v1094
        %v1104 = vunpack.c.l.b16 %v1084
        %v1105 = vunpack.c.l.b16 %v1085
        %v1106 = vunpack.c.l.b16 %v1086
        %v1107 = vunpack.c.l.b16 %v1087
        %v1108 = vunpack.c.l.b16 %v1088
        %v1109 = vunpack.c.l.b16 %v1089
        %v1110 = vunpack.c.l.b16 %v1090
        %v1111 = vunpack.c.l.b16 %v1091
        %v1112 = vpack.c.b16 %v1105, %v1104
        %v1113 = vpack.c.b16 %v1107, %v1106
        %v1114 = vpack.c.b16 %v1109, %v1108
        %v1115 = vpack.c.b16 %v1111, %v1110
        %v1121 = vsel %vm463, %v1083, 0
        %1123 = vmatprep.subr.bf16.mxu0 0
        %1124 = vmatpush1.bf16.msra.mxu0 0
        %1125 = vmatprep.subr.bf16.mxu0 0
        %1126 = vmatpush1.bf16.msra.mxu0 0
        %1127 = vmatprep.subr.bf16.mxu0 0
        %1128 = vmatpush1.bf16.msra.mxu0 0
        %1129 = vmatprep.subr.bf16.mxu0 0
        %1130 = vmatpush1.bf16.msra.mxu0 0
        %1131 = vmatprep.subr.bf16.mxu0 0
        %1132 = vmatpush1.bf16.msra.mxu0 %v1115
        %1133 = vmatprep.subr.bf16.mxu0 0
        %1134 = vmatpush1.bf16.msra.mxu0 %v1114
        %1135 = vmatprep.subr.bf16.mxu0 0
        %1136 = vmatpush1.bf16.msra.mxu0 %v1113
        %1137 = vmatprep.subr.bf16.mxu0 0
        %1138 = vmatpush1.bf16.msra.mxu0 %v1112
        %1139 = vmatprep.subr.bf16.mxu0 0
        %1140 = vmatpush2.bf16.msra.mxu0 0
        %1141 = vmatprep.subr.bf16.mxu0 0
        %1142 = vmatpush2.bf16.msra.mxu0 0
        %1143 = vmatprep.subr.bf16.mxu0 0
        %1144 = vmatpush2.bf16.msra.mxu0 0
        %1145 = vmatprep.subr.bf16.mxu0 0
        %1146 = vmatpush2.bf16.msra.mxu0 0
        %1147 = vmatprep.subr.bf16.mxu0 0
        %1148 = vmatpush2.bf16.msra.mxu0 0
        %1149 = vmatprep.subr.bf16.mxu0 0
        %1150 = vmatpush2.bf16.msra.mxu0 0
        %1151 = vmatprep.subr.bf16.mxu0 0
        %1152 = vmatpush2.bf16.msra.mxu0 0
        %1153 = vmatprep.subr.bf16.mxu0 0
        %1154 = vmatpush2.bf16.msra.mxu0 0
        %1155 = vmatprep.mubr.bf16.mxu0 0
        %1156 = vmatmul.mubr.bf16.gmra.mxu0 %v1121
        %v1157 = vpop.f32.mrf.mxu0
        %v1158 = vadd.f32 %v1095, %v1157
        %v1159 = vpop.f32.mrf.mxu0
        %v1160 = vpop.f32.mrf.mxu0
        %v1161 = vpop.f32.mrf.mxu0
        %1162 = vdwg.mxu0
        %v1163 = vmax.f32 %v1158, 0.0
        %v1164 = vpack.c.bf16 %v1163, %v1163
        %v1165 = vld [vmem:[%s7] sm:$0xf]
        %v1166 = vld [vmem:[%s7 + $0x4] sm:$0xf]
        %v1167 = vld [vmem:[%s7 + $0x8] sm:$0xf]
        %v1168 = vld [vmem:[%s7 + $0xc] sm:$0xf]
        %v1169 = vld [vmem:[%s7 + $0x10] sm:$0xf]
        %v1170 = vld [vmem:[%s7 + $0x14] sm:$0xf]
        %v1171 = vld [vmem:[%s7 + $0x18] sm:$0xf]
        %v1172 = vld [vmem:[%s7 + $0x1c] sm:$0xf]
        %v1173 = vld [vmem:[%s7 + $0x20] sm:$0xf]
        %v1174 = vld [vmem:[%s7 + $0x24] sm:$0xf]
        %v1175 = vld [vmem:[%s7 + $0x28] sm:$0xf]
        %v1176 = vld [vmem:[%s7 + $0x2c] sm:$0xf]
        %v1177 = vld [vmem:[%s7 + $0x30] sm:$0xf]
        %v1178 = vld [vmem:[%s7 + $0x34] sm:$0xf]
        %v1179 = vld [vmem:[%s7 + $0x38] sm:$0xf]
        %v1180 = vld [vmem:[%s7 + $0x3c] sm:$0xf]
        %v1181 = vlaneseq
        %v1182 = vshrl.u32 %v1181, 7
        %v1183 = vsub.s32 4, %v1182
        %v1184 = vrot.slane %v401, %v1183
        %v1201 = vunpack.c.l.b16 %v1165
        %v1202 = vunpack.c.l.b16 %v1166
        %v1203 = vunpack.c.l.b16 %v1167
        %v1204 = vunpack.c.l.b16 %v1168
        %v1205 = vunpack.c.l.b16 %v1169
        %v1206 = vunpack.c.l.b16 %v1170
        %v1207 = vunpack.c.l.b16 %v1171
        %v1208 = vunpack.c.l.b16 %v1172
        %v1209 = vunpack.c.l.b16 %v1173
        %v1210 = vunpack.c.l.b16 %v1174
        %v1211 = vunpack.c.l.b16 %v1175
        %v1212 = vunpack.c.l.b16 %v1176
        %v1213 = vunpack.c.l.b16 %v1177
        %v1214 = vunpack.c.l.b16 %v1178
        %v1215 = vunpack.c.l.b16 %v1179
        %v1216 = vunpack.c.l.b16 %v1180
        %v1217 = vpack.c.b16 %v1202, %v1201
        %v1218 = vpack.c.b16 %v1204, %v1203
        %v1219 = vpack.c.b16 %v1206, %v1205
        %v1220 = vpack.c.b16 %v1208, %v1207
        %v1221 = vpack.c.b16 %v1210, %v1209
        %v1222 = vpack.c.b16 %v1212, %v1211
        %v1223 = vpack.c.b16 %v1214, %v1213
        %v1224 = vpack.c.b16 %v1216, %v1215
        %1233 = vmatprep.subr.bf16.mxu0 0
        %1234 = vmatpush1.bf16.msra.mxu0 %v1224
        %1235 = vmatprep.subr.bf16.mxu0 0
        %1236 = vmatpush1.bf16.msra.mxu0 %v1223
        %1237 = vmatprep.subr.bf16.mxu0 0
        %1238 = vmatpush1.bf16.msra.mxu0 %v1222
        %1239 = vmatprep.subr.bf16.mxu0 0
        %1240 = vmatpush1.bf16.msra.mxu0 %v1221
        %1241 = vmatprep.subr.bf16.mxu0 0
        %1242 = vmatpush1.bf16.msra.mxu0 %v1220
        %1243 = vmatprep.subr.bf16.mxu0 0
        %1244 = vmatpush1.bf16.msra.mxu0 %v1219
        %1245 = vmatprep.subr.bf16.mxu0 0
        %1246 = vmatpush1.bf16.msra.mxu0 %v1218
        %1247 = vmatprep.subr.bf16.mxu0 0
        %1248 = vmatpush1.bf16.msra.mxu0 %v1217
        %1249 = vmatprep.subr.bf16.mxu0 0
        %1250 = vmatpush2.bf16.msra.mxu0 0
        %1251 = vmatprep.subr.bf16.mxu0 0
        %1252 = vmatpush2.bf16.msra.mxu0 0
        %1253 = vmatprep.subr.bf16.mxu0 0
        %1254 = vmatpush2.bf16.msra.mxu0 0
        %1255 = vmatprep.subr.bf16.mxu0 0
        %1256 = vmatpush2.bf16.msra.mxu0 0
        %1257 = vmatprep.subr.bf16.mxu0 0
        %1258 = vmatpush2.bf16.msra.mxu0 0
        %1259 = vmatprep.subr.bf16.mxu0 0
        %1260 = vmatpush2.bf16.msra.mxu0 0
        %1261 = vmatprep.subr.bf16.mxu0 0
        %1262 = vmatpush2.bf16.msra.mxu0 0
        %1263 = vmatprep.subr.bf16.mxu0 0
        %1264 = vmatpush2.bf16.msra.mxu0 0
        %1265 = vmatprep.mubr.bf16.mxu0 0
        %1266 = vmatmul.mubr.bf16.gmra.mxu0 %v1164
        %v1267 = vpop.f32.mrf.mxu0
        %v1268 = vadd.f32 %v1184, %v1267
        %v1269 = vpop.f32.mrf.mxu0
        %v1270 = vpop.f32.mrf.mxu0
        %v1271 = vpop.f32.mrf.mxu0
        %1272 = vdwg.mxu0
        %v1273 = vadd.f32 %v1082, %v1268
        %v1274 = vsel %vm463, %v1273, 0.0
        %1275 = vadd.xlane.f32.xlu0 %v1274
        %v1276 = vpop.xlane.xlu0 %1275
        %v1277 = vmul.f32 %v1276, %v1062
        %v1278 = vsub.f32 %v1273, %v1277
        %v1279 = vmul.f32 %v1278, %v1278
        %v1280 = vsel %vm463, %v1279, 0.0
        %1281 = vadd.xlane.f32.xlu0 %v1280
        %v1282 = vpop.xlane.xlu0 %1281
        %v1283 = vmul.f32 %v1282, %v1062
        %v1284 = vadd.f32 %v1283, 1e-05
        %v1285 = vrsqrt.pop %v1284
        %v1286 = vmul.f32 %v1278, %v1285
        %v1287 = vlaneseq
        %v1288 = vshrl.u32 %v1287, 7
        %v1289 = vsub.s32 5, %v1288
        %v1290 = vrot.slane %v401, %v1289
        %v1291 = vmul.f32 %v1286, %v1290
        %v1292 = vlaneseq
        %v1293 = vshrl.u32 %v1292, 7
        %v1294 = vsub.s32 6, %v1293
        %v1295 = vrot.slane %v401, %v1294
        %v1296 = vadd.f32 %v1291, %v1295
        %s1297 = scalar_lea.vmem %s8, 8
        %v1298 = vld [vmem:[%s1297] sm:$0xff]
        %v1299 = vpack.c.bf16 %v1296, %v1296
        %s1300 = scalar_lea.vmem %s3, 64
        %v1301 = vld [vmem:[%s1300] sm:$0xff]
        %v1302 = vld [vmem:[%s1300 + $0x8] sm:$0xff]
        %v1303 = vld [vmem:[%s1300 + $0x10] sm:$0xff]
        %v1304 = vld [vmem:[%s1300 + $0x18] sm:$0xff]
        %v1305 = vld [vmem:[%s1300 + $0x20] sm:$0xff]
        %v1306 = vld [vmem:[%s1300 + $0x28] sm:$0xff]
        %v1307 = vld [vmem:[%s1300 + $0x30] sm:$0xff]
        %v1308 = vld [vmem:[%s1300 + $0x38] sm:$0xff]
        %s1309 = scalar_lea.vmem [#allocation2], 2
        %v1310 = vld [vmem:[%s1309] sm:$0x3]
        %v1312 = vlaneseq
        %v1313 = vshrl.u32 %v1312, 7
        %v1314 = vsub.s32 0, %v1313
        %v1315 = vrot.slane %v1310, %v1314
        %v1316 = vlaneseq
        %v1317 = vshrl.u32 %v1316, 7
        %v1318 = vsub.s32 1, %v1317
        %v1319 = vrot.slane %v1310, %v1318
        %v1330 = vunpack.c.l.b16 %v1301
        %v1331 = vunpack.c.h.b16 %v1301
        %v1332 = vunpack.c.l.b16 %v1302
        %v1333 = vunpack.c.h.b16 %v1302
        %v1334 = vunpack.c.l.b16 %v1303
        %v1335 = vunpack.c.h.b16 %v1303
        %v1336 = vunpack.c.l.b16 %v1304
        %v1337 = vunpack.c.h.b16 %v1304
        %v1338 = vunpack.c.l.b16 %v1305
        %v1339 = vunpack.c.h.b16 %v1305
        %v1340 = vunpack.c.l.b16 %v1306
        %v1341 = vunpack.c.h.b16 %v1306
        %v1342 = vunpack.c.l.b16 %v1307
        %v1343 = vunpack.c.h.b16 %v1307
        %v1344 = vunpack.c.l.b16 %v1308
        %v1345 = vunpack.c.h.b16 %v1308
        %v1346 = vpack.c.b16 %v1332, %v1330
        %v1347 = vpack.c.b16 %v1333, %v1331
        %v1348 = vpack.c.b16 %v1336, %v1334
        %v1349 = vpack.c.b16 %v1337, %v1335
        %v1350 = vpack.c.b16 %v1340, %v1338
        %v1351 = vpack.c.b16 %v1341, %v1339
        %v1352 = vpack.c.b16 %v1344, %v1342
        %v1353 = vpack.c.b16 %v1345, %v1343
        %v1363 = vsel %vm463, %v1299, 0
        %1365 = vmatprep.subr.bf16.mxu0 0
        %1366 = vmatpush1.bf16.msra.mxu0 0
        %1367 = vmatprep.subr.bf16.mxu0 0
        %1368 = vmatpush1.bf16.msra.mxu0 0
        %1369 = vmatprep.subr.bf16.mxu0 0
        %1370 = vmatpush1.bf16.msra.mxu0 0
        %1371 = vmatprep.subr.bf16.mxu0 0
        %1372 = vmatpush1.bf16.msra.mxu0 0
        %1373 = vmatprep.subr.bf16.mxu0 %v1353
        %1374 = vmatpush1.bf16.msra.mxu0 %v1352
        %1375 = vmatprep.subr.bf16.mxu0 %v1351
        %1376 = vmatpush1.bf16.msra.mxu0 %v1350
        %1377 = vmatprep.subr.bf16.mxu0 %v1349
        %1378 = vmatpush1.bf16.msra.mxu0 %v1348
        %1379 = vmatprep.subr.bf16.mxu0 %v1347
        %1380 = vmatpush1.bf16.msra.mxu0 %v1346
        %1381 = vmatprep.subr.bf16.mxu0 0
        %1382 = vmatpush2.bf16.msra.mxu0 0
        %1383 = vmatprep.subr.bf16.mxu0 0
        %1384 = vmatpush2.bf16.msra.mxu0 0
        %1385 = vmatprep.subr.bf16.mxu0 0
        %1386 = vmatpush2.bf16.msra.mxu0 0
        %1387 = vmatprep.subr.bf16.mxu0 0
        %1388 = vmatpush2.bf16.msra.mxu0 0
        %1389 = vmatprep.subr.bf16.mxu0 0
        %1390 = vmatpush2.bf16.msra.mxu0 0
        %1391 = vmatprep.subr.bf16.mxu0 0
        %1392 = vmatpush2.bf16.msra.mxu0 0
        %1393 = vmatprep.subr.bf16.mxu0 0
        %1394 = vmatpush2.bf16.msra.mxu0 0
        %1395 = vmatprep.subr.bf16.mxu0 0
        %1396 = vmatpush2.bf16.msra.mxu0 0
        %1397 = vmatprep.mubr.bf16.mxu0 0
        %1398 = vmatmul.mubr.bf16.gmra.mxu0 %v1363
        %v1399 = vpop.f32.mrf.mxu0
        %v1400 = vadd.f32 %v1315, %v1399
        %v1401 = vpop.f32.mrf.mxu0
        %v1402 = vadd.f32 %v1319, %v1401
        %v1403 = vpop.f32.mrf.mxu0
        %v1404 = vpop.f32.mrf.mxu0
        %1405 = vdwg.mxu0
        %v1406 = vpack.c.bf16 %v1400, %v1400
        %v1407 = vpack.c.bf16 %v1402, %v1402
        %1409 = vrot.lane.b32.xlu0 %v1406, 64
        %v1410 = vpop.permute.xlu0 %1409
        %v1412 = vsel %vm513, %v1406, 0
        %v1415 = vsel %vm513, %v1410, 0
        %1417 = vmatprep.subr.bf16.mxu0 0
        %1418 = vmatpush1.bf16.xpose.msra.mxu0 0
        %1419 = vmatprep.subr.bf16.mxu0 0
        %1420 = vmatpush1.bf16.xpose.msra.mxu0 0
        %1421 = vmatprep.subr.bf16.mxu0 0
        %1422 = vmatpush1.bf16.xpose.msra.mxu0 0
        %1423 = vmatprep.subr.bf16.mxu0 0
        %1424 = vmatpush1.bf16.xpose.msra.mxu0 0
        %1425 = vmatprep.subr.bf16.mxu0 0
        %1426 = vmatpush1.bf16.xpose.msra.mxu0 0
        %1427 = vmatprep.subr.bf16.mxu0 0
        %1428 = vmatpush1.bf16.xpose.msra.mxu0 0
        %1429 = vmatprep.subr.bf16.mxu0 0
        %1430 = vmatpush1.bf16.xpose.msra.mxu0 0
        %1431 = vmatprep.subr.bf16.mxu0 0
        %1432 = vmatpush1.bf16.xpose.msra.mxu0 %v1415
        %1433 = vmatprep.subr.bf16.mxu0 0
        %1434 = vmatpush2.bf16.xpose.msra.mxu0 0
        %1435 = vmatprep.subr.bf16.mxu0 0
        %1436 = vmatpush2.bf16.xpose.msra.mxu0 0
        %1437 = vmatprep.subr.bf16.mxu0 0
        %1438 = vmatpush2.bf16.xpose.msra.mxu0 0
        %1439 = vmatprep.subr.bf16.mxu0 0
        %1440 = vmatpush2.bf16.xpose.msra.mxu0 0
        %1441 = vmatprep.subr.bf16.mxu0 0
        %1442 = vmatpush2.bf16.xpose.msra.mxu0 0
        %1443 = vmatprep.subr.bf16.mxu0 0
        %1444 = vmatpush2.bf16.xpose.msra.mxu0 0
        %1445 = vmatprep.subr.bf16.mxu0 0
        %1446 = vmatpush2.bf16.xpose.msra.mxu0 0
        %1447 = vmatprep.subr.bf16.mxu0 0
        %1448 = vmatpush2.bf16.xpose.msra.mxu0 0
        %1449 = vmatprep.mubr.bf16.mxu0 0
        %1450 = vmatmul.mubr.bf16.gmra.mxu0 %v1412
        %v1451 = vpop.f32.mrf.mxu0
        %v1452 = vadd.f32 0.0, %v1451
        %v1453 = vpop.f32.mrf.mxu0
        %v1454 = vpop.f32.mrf.mxu0
        %v1455 = vpop.f32.mrf.mxu0
        %1456 = vdwg.mxu0
        %v1457 = vsel %vm565, %v1452, -1e+30
        %v1458 = vsel %vm567, %v1457, -inf
        %1459 = vmax.xlane.f32.xlu0 %v1458
        %v1460 = vpop.xlane.xlu0 %1459
        %v1461 = vsub.f32 %v1457, %v1460
        %v1462 = vmul.f32 %v1461, 1.442695
        %v1463 = vpow.pop %v1462
        %v1464 = vsel %vm567, %v1463, 0.0
        %1465 = vadd.xlane.f32.xlu0 %v1464
        %v1466 = vpop.xlane.xlu0 %1465
        %v1467 = vrcp.pop %v1466
        %v1468 = vmul.f32 %v1463, %v1467
        %v1469 = vpack.c.bf16 %v1468, %v1468
        %v1471 = vsel %vm567, %v1469, 0
        %v1474 = vsel %vm583, %v1407, 0
        %1476 = vmatprep.subr.bf16.mxu0 0
        %1477 = vmatpush1.bf16.msra.mxu0 0
        %1478 = vmatprep.subr.bf16.mxu0 0
        %1479 = vmatpush1.bf16.msra.mxu0 0
        %1480 = vmatprep.subr.bf16.mxu0 0
        %1481 = vmatpush1.bf16.msra.mxu0 0
        %1482 = vmatprep.subr.bf16.mxu0 0
        %1483 = vmatpush1.bf16.msra.mxu0 0
        %1484 = vmatprep.subr.bf16.mxu0 0
        %1485 = vmatpush1.bf16.msra.mxu0 0
        %1486 = vmatprep.subr.bf16.mxu0 0
        %1487 = vmatpush1.bf16.msra.mxu0 0
        %1488 = vmatprep.subr.bf16.mxu0 0
        %1489 = vmatpush1.bf16.msra.mxu0 0
        %1490 = vmatprep.subr.bf16.mxu0 0
        %1491 = vmatpush1.bf16.msra.mxu0 %v1474
        %1492 = vmatprep.subr.bf16.mxu0 0
        %1493 = vmatpush2.bf16.msra.mxu0 0
        %1494 = vmatprep.subr.bf16.mxu0 0
        %1495 = vmatpush2.bf16.msra.mxu0 0
        %1496 = vmatprep.subr.bf16.mxu0 0
        %1497 = vmatpush2.bf16.msra.mxu0 0
        %1498 = vmatprep.subr.bf16.mxu0 0
        %1499 = vmatpush2.bf16.msra.mxu0 0
        %1500 = vmatprep.subr.bf16.mxu0 0
        %1501 = vmatpush2.bf16.msra.mxu0 0
        %1502 = vmatprep.subr.bf16.mxu0 0
        %1503 = vmatpush2.bf16.msra.mxu0 0
        %1504 = vmatprep.subr.bf16.mxu0 0
        %1505 = vmatpush2.bf16.msra.mxu0 0
        %1506 = vmatprep.subr.bf16.mxu0 0
        %1507 = vmatpush2.bf16.msra.mxu0 0
        %1508 = vmatprep.mubr.bf16.mxu0 0
        %1509 = vmatmul.mubr.bf16.gmra.mxu0 %v1471
        %v1510 = vpop.f32.mrf.mxu0
        %v1511 = vadd.f32 0.0, %v1510
        %v1512 = vpop.f32.mrf.mxu0
        %v1513 = vpop.f32.mrf.mxu0
        %v1514 = vpop.f32.mrf.mxu0
        %1515 = vdwg.mxu0
        %1516 = vrot.lane.b32.xlu0 %v1406, 112
        %v1517 = vpop.permute.xlu0 %1516
        %1518 = vrot.lane.b32.xlu0 %v1406, 48
        %v1519 = vpop.permute.xlu0 %1518
        %v1521 = vsel %vm513, %v1517, 0
        %v1524 = vsel %vm513, %v1519, 0
        %1526 = vmatprep.subr.bf16.mxu0 0
        %1527 = vmatpush1.bf16.xpose.msra.mxu0 0
        %1528 = vmatprep.subr.bf16.mxu0 0
        %1529 = vmatpush1.bf16.xpose.msra.mxu0 0
        %1530 = vmatprep.subr.bf16.mxu0 0
        %1531 = vmatpush1.bf16.xpose.msra.mxu0 0
        %1532 = vmatprep.subr.bf16.mxu0 0
        %1533 = vmatpush1.bf16.xpose.msra.mxu0 0
        %1534 = vmatprep.subr.bf16.mxu0 0
        %1535 = vmatpush1.bf16.xpose.msra.mxu0 0
        %1536 = vmatprep.subr.bf16.mxu0 0
        %1537 = vmatpush1.bf16.xpose.msra.mxu0 0
        %1538 = vmatprep.subr.bf16.mxu0 0
        %1539 = vmatpush1.bf16.xpose.msra.mxu0 0
        %1540 = vmatprep.subr.bf16.mxu0 0
        %1541 = vmatpush1.bf16.xpose.msra.mxu0 %v1524
        %1542 = vmatprep.subr.bf16.mxu0 0
        %1543 = vmatpush2.bf16.xpose.msra.mxu0 0
        %1544 = vmatprep.subr.bf16.mxu0 0
        %1545 = vmatpush2.bf16.xpose.msra.mxu0 0
        %1546 = vmatprep.subr.bf16.mxu0 0
        %1547 = vmatpush2.bf16.xpose.msra.mxu0 0
        %1548 = vmatprep.subr.bf16.mxu0 0
        %1549 = vmatpush2.bf16.xpose.msra.mxu0 0
        %1550 = vmatprep.subr.bf16.mxu0 0
        %1551 = vmatpush2.bf16.xpose.msra.mxu0 0
        %1552 = vmatprep.subr.bf16.mxu0 0
        %1553 = vmatpush2.bf16.xpose.msra.mxu0 0
        %1554 = vmatprep.subr.bf16.mxu0 0
        %1555 = vmatpush2.bf16.xpose.msra.mxu0 0
        %1556 = vmatprep.subr.bf16.mxu0 0
        %1557 = vmatpush2.bf16.xpose.msra.mxu0 0
        %1558 = vmatprep.mubr.bf16.mxu0 0
        %1559 = vmatmul.mubr.bf16.gmra.mxu0 %v1521
        %v1560 = vpop.f32.mrf.mxu0
        %v1561 = vadd.f32 0.0, %v1560
        %v1562 = vpop.f32.mrf.mxu0
        %v1563 = vpop.f32.mrf.mxu0
        %v1564 = vpop.f32.mrf.mxu0
        %1565 = vdwg.mxu0
        %v1566 = vsel %vm565, %v1561, -1e+30
        %v1567 = vsel %vm567, %v1566, -inf
        %1568 = vmax.xlane.f32.xlu0 %v1567
        %v1569 = vpop.xlane.xlu0 %1568
        %v1570 = vsub.f32 %v1566, %v1569
        %v1571 = vmul.f32 %v1570, 1.442695
        %v1572 = vpow.pop %v1571
        %v1573 = vsel %vm567, %v1572, 0.0
        %1574 = vadd.xlane.f32.xlu0 %v1573
        %v1575 = vpop.xlane.xlu0 %1574
        %v1576 = vrcp.pop %v1575
        %v1577 = vmul.f32 %v1572, %v1576
        %v1578 = vpack.c.bf16 %v1577, %v1577
        %1580 = vrot.lane.b32.xlu0 %v1407, 112
        %v1581 = vpop.permute.xlu0 %1580
        %v1583 = vsel %vm567, %v1578, 0
        %v1586 = vsel %vm583, %v1581, 0
        %1588 = vmatprep.subr.bf16.mxu0 0
        %1589 = vmatpush1.bf16.msra.mxu0 0
        %1590 = vmatprep.subr.bf16.mxu0 0
        %1591 = vmatpush1.bf16.msra.mxu0 0
        %1592 = vmatprep.subr.bf16.mxu0 0
        %1593 = vmatpush1.bf16.msra.mxu0 0
        %1594 = vmatprep.subr.bf16.mxu0 0
        %1595 = vmatpush1.bf16.msra.mxu0 0
        %1596 = vmatprep.subr.bf16.mxu0 0
        %1597 = vmatpush1.bf16.msra.mxu0 0
        %1598 = vmatprep.subr.bf16.mxu0 0
        %1599 = vmatpush1.bf16.msra.mxu0 0
        %1600 = vmatprep.subr.bf16.mxu0 0
        %1601 = vmatpush1.bf16.msra.mxu0 0
        %1602 = vmatprep.subr.bf16.mxu0 0
        %1603 = vmatpush1.bf16.msra.mxu0 %v1586
        %1604 = vmatprep.subr.bf16.mxu0 0
        %1605 = vmatpush2.bf16.msra.mxu0 0
        %1606 = vmatprep.subr.bf16.mxu0 0
        %1607 = vmatpush2.bf16.msra.mxu0 0
        %1608 = vmatprep.subr.bf16.mxu0 0
        %1609 = vmatpush2.bf16.msra.mxu0 0
        %1610 = vmatprep.subr.bf16.mxu0 0
        %1611 = vmatpush2.bf16.msra.mxu0 0
        %1612 = vmatprep.subr.bf16.mxu0 0
        %1613 = vmatpush2.bf16.msra.mxu0 0
        %1614 = vmatprep.subr.bf16.mxu0 0
        %1615 = vmatpush2.bf16.msra.mxu0 0
        %1616 = vmatprep.subr.bf16.mxu0 0
        %1617 = vmatpush2.bf16.msra.mxu0 0
        %1618 = vmatprep.subr.bf16.mxu0 0
        %1619 = vmatpush2.bf16.msra.mxu0 0
        %1620 = vmatprep.mubr.bf16.mxu0 0
        %1621 = vmatmul.mubr.bf16.gmra.mxu0 %v1583
        %v1622 = vpop.f32.mrf.mxu0
        %v1623 = vadd.f32 0.0, %v1622
        %v1624 = vpop.f32.mrf.mxu0
        %v1625 = vpop.f32.mrf.mxu0
        %v1626 = vpop.f32.mrf.mxu0
        %1627 = vdwg.mxu0
        %1628 = vrot.lane.b32.xlu0 %v1406, 96
        %v1629 = vpop.permute.xlu0 %1628
        %1630 = vrot.lane.b32.xlu0 %v1406, 32
        %v1631 = vpop.permute.xlu0 %1630
        %v1633 = vsel %vm513, %v1629, 0
        %v1636 = vsel %vm513, %v1631, 0
        %1638 = vmatprep.subr.bf16.mxu0 0
        %1639 = vmatpush1.bf16.xpose.msra.mxu0 0
        %1640 = vmatprep.subr.bf16.mxu0 0
        %1641 = vmatpush1.bf16.xpose.msra.mxu0 0
        %1642 = vmatprep.subr.bf16.mxu0 0
        %1643 = vmatpush1.bf16.xpose.msra.mxu0 0
        %1644 = vmatprep.subr.bf16.mxu0 0
        %1645 = vmatpush1.bf16.xpose.msra.mxu0 0
        %1646 = vmatprep.subr.bf16.mxu0 0
        %1647 = vmatpush1.bf16.xpose.msra.mxu0 0
        %1648 = vmatprep.subr.bf16.mxu0 0
        %1649 = vmatpush1.bf16.xpose.msra.mxu0 0
        %1650 = vmatprep.subr.bf16.mxu0 0
        %1651 = vmatpush1.bf16.xpose.msra.mxu0 0
        %1652 = vmatprep.subr.bf16.mxu0 0
        %1653 = vmatpush1.bf16.xpose.msra.mxu0 %v1636
        %1654 = vmatprep.subr.bf16.mxu0 0
        %1655 = vmatpush2.bf16.xpose.msra.mxu0 0
        %1656 = vmatprep.subr.bf16.mxu0 0
        %1657 = vmatpush2.bf16.xpose.msra.mxu0 0
        %1658 = vmatprep.subr.bf16.mxu0 0
        %1659 = vmatpush2.bf16.xpose.msra.mxu0 0
        %1660 = vmatprep.subr.bf16.mxu0 0
        %1661 = vmatpush2.bf16.xpose.msra.mxu0 0
        %1662 = vmatprep.subr.bf16.mxu0 0
        %1663 = vmatpush2.bf16.xpose.msra.mxu0 0
        %1664 = vmatprep.subr.bf16.mxu0 0
        %1665 = vmatpush2.bf16.xpose.msra.mxu0 0
        %1666 = vmatprep.subr.bf16.mxu0 0
        %1667 = vmatpush2.bf16.xpose.msra.mxu0 0
        %1668 = vmatprep.subr.bf16.mxu0 0
        %1669 = vmatpush2.bf16.xpose.msra.mxu0 0
        %1670 = vmatprep.mubr.bf16.mxu0 0
        %1671 = vmatmul.mubr.bf16.gmra.mxu0 %v1633
        %v1672 = vpop.f32.mrf.mxu0
        %v1673 = vadd.f32 0.0, %v1672
        %v1674 = vpop.f32.mrf.mxu0
        %v1675 = vpop.f32.mrf.mxu0
        %v1676 = vpop.f32.mrf.mxu0
        %1677 = vdwg.mxu0
        %v1678 = vsel %vm565, %v1673, -1e+30
        %v1679 = vsel %vm567, %v1678, -inf
        %1680 = vmax.xlane.f32.xlu0 %v1679
        %v1681 = vpop.xlane.xlu0 %1680
        %v1682 = vsub.f32 %v1678, %v1681
        %v1683 = vmul.f32 %v1682, 1.442695
        %v1684 = vpow.pop %v1683
        %v1685 = vsel %vm567, %v1684, 0.0
        %1686 = vadd.xlane.f32.xlu0 %v1685
        %v1687 = vpop.xlane.xlu0 %1686
        %v1688 = vrcp.pop %v1687
        %v1689 = vmul.f32 %v1684, %v1688
        %v1690 = vpack.c.bf16 %v1689, %v1689
        %1691 = vrot.lane.b32.xlu0 %v1407, 96
        %v1692 = vpop.permute.xlu0 %1691
        %v1694 = vsel %vm567, %v1690, 0
        %v1697 = vsel %vm583, %v1692, 0
        %1699 = vmatprep.subr.bf16.mxu0 0
        %1700 = vmatpush1.bf16.msra.mxu0 0
        %1701 = vmatprep.subr.bf16.mxu0 0
        %1702 = vmatpush1.bf16.msra.mxu0 0
        %1703 = vmatprep.subr.bf16.mxu0 0
        %1704 = vmatpush1.bf16.msra.mxu0 0
        %1705 = vmatprep.subr.bf16.mxu0 0
        %1706 = vmatpush1.bf16.msra.mxu0 0
        %1707 = vmatprep.subr.bf16.mxu0 0
        %1708 = vmatpush1.bf16.msra.mxu0 0
        %1709 = vmatprep.subr.bf16.mxu0 0
        %1710 = vmatpush1.bf16.msra.mxu0 0
        %1711 = vmatprep.subr.bf16.mxu0 0
        %1712 = vmatpush1.bf16.msra.mxu0 0
        %1713 = vmatprep.subr.bf16.mxu0 0
        %1714 = vmatpush1.bf16.msra.mxu0 %v1697
        %1715 = vmatprep.subr.bf16.mxu0 0
        %1716 = vmatpush2.bf16.msra.mxu0 0
        %1717 = vmatprep.subr.bf16.mxu0 0
        %1718 = vmatpush2.bf16.msra.mxu0 0
        %1719 = vmatprep.subr.bf16.mxu0 0
        %1720 = vmatpush2.bf16.msra.mxu0 0
        %1721 = vmatprep.subr.bf16.mxu0 0
        %1722 = vmatpush2.bf16.msra.mxu0 0
        %1723 = vmatprep.subr.bf16.mxu0 0
        %1724 = vmatpush2.bf16.msra.mxu0 0
        %1725 = vmatprep.subr.bf16.mxu0 0
        %1726 = vmatpush2.bf16.msra.mxu0 0
        %1727 = vmatprep.subr.bf16.mxu0 0
        %1728 = vmatpush2.bf16.msra.mxu0 0
        %1729 = vmatprep.subr.bf16.mxu0 0
        %1730 = vmatpush2.bf16.msra.mxu0 0
        %1731 = vmatprep.mubr.bf16.mxu0 0
        %1732 = vmatmul.mubr.bf16.gmra.mxu0 %v1694
        %v1733 = vpop.f32.mrf.mxu0
        %v1734 = vadd.f32 0.0, %v1733
        %v1735 = vpop.f32.mrf.mxu0
        %v1736 = vpop.f32.mrf.mxu0
        %v1737 = vpop.f32.mrf.mxu0
        %1738 = vdwg.mxu0
        %1739 = vrot.lane.b32.xlu0 %v1406, 80
        %v1740 = vpop.permute.xlu0 %1739
        %1741 = vrot.lane.b32.xlu0 %v1406, 16
        %v1742 = vpop.permute.xlu0 %1741
        %v1744 = vsel %vm513, %v1740, 0
        %v1747 = vsel %vm513, %v1742, 0
        %1749 = vmatprep.subr.bf16.mxu0 0
        %1750 = vmatpush1.bf16.xpose.msra.mxu0 0
        %1751 = vmatprep.subr.bf16.mxu0 0
        %1752 = vmatpush1.bf16.xpose.msra.mxu0 0
        %1753 = vmatprep.subr.bf16.mxu0 0
        %1754 = vmatpush1.bf16.xpose.msra.mxu0 0
        %1755 = vmatprep.subr.bf16.mxu0 0
        %1756 = vmatpush1.bf16.xpose.msra.mxu0 0
        %1757 = vmatprep.subr.bf16.mxu0 0
        %1758 = vmatpush1.bf16.xpose.msra.mxu0 0
        %1759 = vmatprep.subr.bf16.mxu0 0
        %1760 = vmatpush1.bf16.xpose.msra.mxu0 0
        %1761 = vmatprep.subr.bf16.mxu0 0
        %1762 = vmatpush1.bf16.xpose.msra.mxu0 0
        %1763 = vmatprep.subr.bf16.mxu0 0
        %1764 = vmatpush1.bf16.xpose.msra.mxu0 %v1747
        %1765 = vmatprep.subr.bf16.mxu0 0
        %1766 = vmatpush2.bf16.xpose.msra.mxu0 0
        %1767 = vmatprep.subr.bf16.mxu0 0
        %1768 = vmatpush2.bf16.xpose.msra.mxu0 0
        %1769 = vmatprep.subr.bf16.mxu0 0
        %1770 = vmatpush2.bf16.xpose.msra.mxu0 0
        %1771 = vmatprep.subr.bf16.mxu0 0
        %1772 = vmatpush2.bf16.xpose.msra.mxu0 0
        %1773 = vmatprep.subr.bf16.mxu0 0
        %1774 = vmatpush2.bf16.xpose.msra.mxu0 0
        %1775 = vmatprep.subr.bf16.mxu0 0
        %1776 = vmatpush2.bf16.xpose.msra.mxu0 0
        %1777 = vmatprep.subr.bf16.mxu0 0
        %1778 = vmatpush2.bf16.xpose.msra.mxu0 0
        %1779 = vmatprep.subr.bf16.mxu0 0
        %1780 = vmatpush2.bf16.xpose.msra.mxu0 0
        %1781 = vmatprep.mubr.bf16.mxu0 0
        %1782 = vmatmul.mubr.bf16.gmra.mxu0 %v1744
        %v1783 = vpop.f32.mrf.mxu0
        %v1784 = vadd.f32 0.0, %v1783
        %v1785 = vpop.f32.mrf.mxu0
        %v1786 = vpop.f32.mrf.mxu0
        %v1787 = vpop.f32.mrf.mxu0
        %1788 = vdwg.mxu0
        %v1789 = vsel %vm565, %v1784, -1e+30
        %v1790 = vsel %vm567, %v1789, -inf
        %1791 = vmax.xlane.f32.xlu0 %v1790
        %v1792 = vpop.xlane.xlu0 %1791
        %v1793 = vsub.f32 %v1789, %v1792
        %v1794 = vmul.f32 %v1793, 1.442695
        %v1795 = vpow.pop %v1794
        %v1796 = vsel %vm567, %v1795, 0.0
        %1797 = vadd.xlane.f32.xlu0 %v1796
        %v1798 = vpop.xlane.xlu0 %1797
        %v1799 = vrcp.pop %v1798
        %v1800 = vmul.f32 %v1795, %v1799
        %v1801 = vpack.c.bf16 %v1800, %v1800
        %1802 = vrot.lane.b32.xlu0 %v1407, 80
        %v1803 = vpop.permute.xlu0 %1802
        %v1805 = vsel %vm567, %v1801, 0
        %v1808 = vsel %vm583, %v1803, 0
        %1810 = vmatprep.subr.bf16.mxu0 0
        %1811 = vmatpush1.bf16.msra.mxu0 0
        %1812 = vmatprep.subr.bf16.mxu0 0
        %1813 = vmatpush1.bf16.msra.mxu0 0
        %1814 = vmatprep.subr.bf16.mxu0 0
        %1815 = vmatpush1.bf16.msra.mxu0 0
        %1816 = vmatprep.subr.bf16.mxu0 0
        %1817 = vmatpush1.bf16.msra.mxu0 0
        %1818 = vmatprep.subr.bf16.mxu0 0
        %1819 = vmatpush1.bf16.msra.mxu0 0
        %1820 = vmatprep.subr.bf16.mxu0 0
        %1821 = vmatpush1.bf16.msra.mxu0 0
        %1822 = vmatprep.subr.bf16.mxu0 0
        %1823 = vmatpush1.bf16.msra.mxu0 0
        %1824 = vmatprep.subr.bf16.mxu0 0
        %1825 = vmatpush1.bf16.msra.mxu0 %v1808
        %1826 = vmatprep.subr.bf16.mxu0 0
        %1827 = vmatpush2.bf16.msra.mxu0 0
        %1828 = vmatprep.subr.bf16.mxu0 0
        %1829 = vmatpush2.bf16.msra.mxu0 0
        %1830 = vmatprep.subr.bf16.mxu0 0
        %1831 = vmatpush2.bf16.msra.mxu0 0
        %1832 = vmatprep.subr.bf16.mxu0 0
        %1833 = vmatpush2.bf16.msra.mxu0 0
        %1834 = vmatprep.subr.bf16.mxu0 0
        %1835 = vmatpush2.bf16.msra.mxu0 0
        %1836 = vmatprep.subr.bf16.mxu0 0
        %1837 = vmatpush2.bf16.msra.mxu0 0
        %1838 = vmatprep.subr.bf16.mxu0 0
        %1839 = vmatpush2.bf16.msra.mxu0 0
        %1840 = vmatprep.subr.bf16.mxu0 0
        %1841 = vmatpush2.bf16.msra.mxu0 0
        %1842 = vmatprep.mubr.bf16.mxu0 0
        %1843 = vmatmul.mubr.bf16.gmra.mxu0 %v1805
        %v1844 = vpop.f32.mrf.mxu0
        %v1845 = vadd.f32 0.0, %v1844
        %v1846 = vpop.f32.mrf.mxu0
        %v1847 = vpop.f32.mrf.mxu0
        %v1848 = vpop.f32.mrf.mxu0
        %1849 = vdwg.mxu0
        %1851 = vrot.lane.b32.xlu0 %v1623, 16
        %v1852 = vpop.permute.xlu0 %1851
        %1855 = vrot.lane.b32.xlu0 %v1734, 32
        %v1856 = vpop.permute.xlu0 %1855
        %1859 = vrot.lane.b32.xlu0 %v1845, 48
        %v1860 = vpop.permute.xlu0 %1859
        %v1862 = vsel %vm513, %v1511, %v1852
        %v1863 = vsel %vm974, %v1862, %v1856
        %v1864 = vsel %vm976, %v1863, %v1860
        %v1865 = vpack.c.bf16 %v1864, %v1864
        %s1866 = scalar_lea.vmem %s5, 32
        %v1867 = vld [vmem:[%s1866] sm:$0xf]
        %v1868 = vld [vmem:[%s1866 + $0x4] sm:$0xf]
        %v1869 = vld [vmem:[%s1866 + $0x8] sm:$0xf]
        %v1870 = vld [vmem:[%s1866 + $0xc] sm:$0xf]
        %v1871 = vld [vmem:[%s1866 + $0x10] sm:$0xf]
        %v1872 = vld [vmem:[%s1866 + $0x14] sm:$0xf]
        %v1873 = vld [vmem:[%s1866 + $0x18] sm:$0xf]
        %v1874 = vld [vmem:[%s1866 + $0x1c] sm:$0xf]
        %v1875 = vlaneseq
        %v1876 = vshrl.u32 %v1875, 7
        %v1877 = vsub.s32 0, %v1876
        %v1878 = vrot.slane %v1298, %v1877
        %v1887 = vunpack.c.l.b16 %v1867
        %v1888 = vunpack.c.l.b16 %v1868
        %v1889 = vunpack.c.l.b16 %v1869
        %v1890 = vunpack.c.l.b16 %v1870
        %v1891 = vunpack.c.l.b16 %v1871
        %v1892 = vunpack.c.l.b16 %v1872
        %v1893 = vunpack.c.l.b16 %v1873
        %v1894 = vunpack.c.l.b16 %v1874
        %v1895 = vpack.c.b16 %v1888, %v1887
        %v1896 = vpack.c.b16 %v1890, %v1889
        %v1897 = vpack.c.b16 %v1892, %v1891
        %v1898 = vpack.c.b16 %v1894, %v1893
        %v1904 = vsel %vm463, %v1865, 0
        %1906 = vmatprep.subr.bf16.mxu0 0
        %1907 = vmatpush1.bf16.msra.mxu0 0
        %1908 = vmatprep.subr.bf16.mxu0 0
        %1909 = vmatpush1.bf16.msra.mxu0 0
        %1910 = vmatprep.subr.bf16.mxu0 0
        %1911 = vmatpush1.bf16.msra.mxu0 0
        %1912 = vmatprep.subr.bf16.mxu0 0
        %1913 = vmatpush1.bf16.msra.mxu0 0
        %1914 = vmatprep.subr.bf16.mxu0 0
        %1915 = vmatpush1.bf16.msra.mxu0 %v1898
        %1916 = vmatprep.subr.bf16.mxu0 0
        %1917 = vmatpush1.bf16.msra.mxu0 %v1897
        %1918 = vmatprep.subr.bf16.mxu0 0
        %1919 = vmatpush1.bf16.msra.mxu0 %v1896
        %1920 = vmatprep.subr.bf16.mxu0 0
        %1921 = vmatpush1.bf16.msra.mxu0 %v1895
        %1922 = vmatprep.subr.bf16.mxu0 0
        %1923 = vmatpush2.bf16.msra.mxu0 0
        %1924 = vmatprep.subr.bf16.mxu0 0
        %1925 = vmatpush2.bf16.msra.mxu0 0
        %1926 = vmatprep.subr.bf16.mxu0 0
        %1927 = vmatpush2.bf16.msra.mxu0 0
        %1928 = vmatprep.subr.bf16.mxu0 0
        %1929 = vmatpush2.bf16.msra.mxu0 0
        %1930 = vmatprep.subr.bf16.mxu0 0
        %1931 = vmatpush2.bf16.msra.mxu0 0
        %1932 = vmatprep.subr.bf16.mxu0 0
        %1933 = vmatpush2.bf16.msra.mxu0 0
        %1934 = vmatprep.subr.bf16.mxu0 0
        %1935 = vmatpush2.bf16.msra.mxu0 0
        %1936 = vmatprep.subr.bf16.mxu0 0
        %1937 = vmatpush2.bf16.msra.mxu0 0
        %1938 = vmatprep.mubr.bf16.mxu0 0
        %1939 = vmatmul.mubr.bf16.gmra.mxu0 %v1904
        %v1940 = vpop.f32.mrf.mxu0
        %v1941 = vadd.f32 %v1878, %v1940
        %v1942 = vpop.f32.mrf.mxu0
        %v1943 = vpop.f32.mrf.mxu0
        %v1944 = vpop.f32.mrf.mxu0
        %1945 = vdwg.mxu0
        %v1946 = vadd.f32 %v1296, %v1941
        %v1947 = vsel %vm463, %v1946, 0.0
        %1948 = vadd.xlane.f32.xlu0 %v1947
        %v1949 = vpop.xlane.xlu0 %1948
        %v1950 = vmul.f32 %v1949, %v1062
        %v1951 = vsub.f32 %v1946, %v1950
        %v1952 = vmul.f32 %v1951, %v1951
        %v1953 = vsel %vm463, %v1952, 0.0
        %1954 = vadd.xlane.f32.xlu0 %v1953
        %v1955 = vpop.xlane.xlu0 %1954
        %v1956 = vmul.f32 %v1955, %v1062
        %v1957 = vadd.f32 %v1956, 1e-05
        %v1958 = vrsqrt.pop %v1957
        %v1959 = vmul.f32 %v1951, %v1958
        %v1960 = vlaneseq
        %v1961 = vshrl.u32 %v1960, 7
        %v1962 = vsub.s32 1, %v1961
        %v1963 = vrot.slane %v1298, %v1962
        %v1964 = vmul.f32 %v1959, %v1963
        %v1965 = vlaneseq
        %v1966 = vshrl.u32 %v1965, 7
        %v1967 = vsub.s32 2, %v1966
        %v1968 = vrot.slane %v1298, %v1967
        %v1969 = vadd.f32 %v1964, %v1968
        %v1970 = vpack.c.bf16 %v1969, %v1969
        %s1971 = scalar_lea.vmem %s6, 32
        %v1972 = vld [vmem:[%s1971] sm:$0xf]
        %v1973 = vld [vmem:[%s1971 + $0x4] sm:$0xf]
        %v1974 = vld [vmem:[%s1971 + $0x8] sm:$0xf]
        %v1975 = vld [vmem:[%s1971 + $0xc] sm:$0xf]
        %v1976 = vld [vmem:[%s1971 + $0x10] sm:$0xf]
        %v1977 = vld [vmem:[%s1971 + $0x14] sm:$0xf]
        %v1978 = vld [vmem:[%s1971 + $0x18] sm:$0xf]
        %v1979 = vld [vmem:[%s1971 + $0x1c] sm:$0xf]
        %v1980 = vlaneseq
        %v1981 = vshrl.u32 %v1980, 7
        %v1982 = vsub.s32 3, %v1981
        %v1983 = vrot.slane %v1298, %v1982
        %v1992 = vunpack.c.l.b16 %v1972
        %v1993 = vunpack.c.l.b16 %v1973
        %v1994 = vunpack.c.l.b16 %v1974
        %v1995 = vunpack.c.l.b16 %v1975
        %v1996 = vunpack.c.l.b16 %v1976
        %v1997 = vunpack.c.l.b16 %v1977
        %v1998 = vunpack.c.l.b16 %v1978
        %v1999 = vunpack.c.l.b16 %v1979
        %v2000 = vpack.c.b16 %v1993, %v1992
        %v2001 = vpack.c.b16 %v1995, %v1994
        %v2002 = vpack.c.b16 %v1997, %v1996
        %v2003 = vpack.c.b16 %v1999, %v1998
        %v2009 = vsel %vm463, %v1970, 0
        %2011 = vmatprep.subr.bf16.mxu0 0
        %2012 = vmatpush1.bf16.msra.mxu0 0
        %2013 = vmatprep.subr.bf16.mxu0 0
        %2014 = vmatpush1.bf16.msra.mxu0 0
        %2015 = vmatprep.subr.bf16.mxu0 0
        %2016 = vmatpush1.bf16.msra.mxu0 0
        %2017 = vmatprep.subr.bf16.mxu0 0
        %2018 = vmatpush1.bf16.msra.mxu0 0
        %2019 = vmatprep.subr.bf16.mxu0 0
        %2020 = vmatpush1.bf16.msra.mxu0 %v2003
        %2021 = vmatprep.subr.bf16.mxu0 0
        %2022 = vmatpush1.bf16.msra.mxu0 %v2002
        %2023 = vmatprep.subr.bf16.mxu0 0
        %2024 = vmatpush1.bf16.msra.mxu0 %v2001
        %2025 = vmatprep.subr.bf16.mxu0 0
        %2026 = vmatpush1.bf16.msra.mxu0 %v2000
        %2027 = vmatprep.subr.bf16.mxu0 0
        %2028 = vmatpush2.bf16.msra.mxu0 0
        %2029 = vmatprep.subr.bf16.mxu0 0
        %2030 = vmatpush2.bf16.msra.mxu0 0
        %2031 = vmatprep.subr.bf16.mxu0 0
        %2032 = vmatpush2.bf16.msra.mxu0 0
        %2033 = vmatprep.subr.bf16.mxu0 0
        %2034 = vmatpush2.bf16.msra.mxu0 0
        %2035 = vmatprep.subr.bf16.mxu0 0
        %2036 = vmatpush2.bf16.msra.mxu0 0
        %2037 = vmatprep.subr.bf16.mxu0 0
        %2038 = vmatpush2.bf16.msra.mxu0 0
        %2039 = vmatprep.subr.bf16.mxu0 0
        %2040 = vmatpush2.bf16.msra.mxu0 0
        %2041 = vmatprep.subr.bf16.mxu0 0
        %2042 = vmatpush2.bf16.msra.mxu0 0
        %2043 = vmatprep.mubr.bf16.mxu0 0
        %2044 = vmatmul.mubr.bf16.gmra.mxu0 %v2009
        %v2045 = vpop.f32.mrf.mxu0
        %v2046 = vadd.f32 %v1983, %v2045
        %v2047 = vpop.f32.mrf.mxu0
        %v2048 = vpop.f32.mrf.mxu0
        %v2049 = vpop.f32.mrf.mxu0
        %2050 = vdwg.mxu0
        %v2051 = vmax.f32 %v2046, 0.0
        %v2052 = vpack.c.bf16 %v2051, %v2051
        %s2053 = scalar_lea.vmem %s7, 64
        %v2054 = vld [vmem:[%s2053] sm:$0xf]
        %v2055 = vld [vmem:[%s2053 + $0x4] sm:$0xf]
        %v2056 = vld [vmem:[%s2053 + $0x8] sm:$0xf]
        %v2057 = vld [vmem:[%s2053 + $0xc] sm:$0xf]
        %v2058 = vld [vmem:[%s2053 + $0x10] sm:$0xf]
        %v2059 = vld [vmem:[%s2053 + $0x14] sm:$0xf]
        %v2060 = vld [vmem:[%s2053 + $0x18] sm:$0xf]
        %v2061 = vld [vmem:[%s2053 + $0x1c] sm:$0xf]
        %v2062 = vld [vmem:[%s2053 + $0x20] sm:$0xf]
        %v2063 = vld [vmem:[%s2053 + $0x24] sm:$0xf]
        %v2064 = vld [vmem:[%s2053 + $0x28] sm:$0xf]
        %v2065 = vld [vmem:[%s2053 + $0x2c] sm:$0xf]
        %v2066 = vld [vmem:[%s2053 + $0x30] sm:$0xf]
        %v2067 = vld [vmem:[%s2053 + $0x34] sm:$0xf]
        %v2068 = vld [vmem:[%s2053 + $0x38] sm:$0xf]
        %v2069 = vld [vmem:[%s2053 + $0x3c] sm:$0xf]
        %v2070 = vlaneseq
        %v2071 = vshrl.u32 %v2070, 7
        %v2072 = vsub.s32 4, %v2071
        %v2073 = vrot.slane %v1298, %v2072
        %v2090 = vunpack.c.l.b16 %v2054
        %v2091 = vunpack.c.l.b16 %v2055
        %v2092 = vunpack.c.l.b16 %v2056
        %v2093 = vunpack.c.l.b16 %v2057
        %v2094 = vunpack.c.l.b16 %v2058
        %v2095 = vunpack.c.l.b16 %v2059
        %v2096 = vunpack.c.l.b16 %v2060
        %v2097 = vunpack.c.l.b16 %v2061
        %v2098 = vunpack.c.l.b16 %v2062
        %v2099 = vunpack.c.l.b16 %v2063
        %v2100 = vunpack.c.l.b16 %v2064
        %v2101 = vunpack.c.l.b16 %v2065
        %v2102 = vunpack.c.l.b16 %v2066
        %v2103 = vunpack.c.l.b16 %v2067
        %v2104 = vunpack.c.l.b16 %v2068
        %v2105 = vunpack.c.l.b16 %v2069
        %v2106 = vpack.c.b16 %v2091, %v2090
        %v2107 = vpack.c.b16 %v2093, %v2092
        %v2108 = vpack.c.b16 %v2095, %v2094
        %v2109 = vpack.c.b16 %v2097, %v2096
        %v2110 = vpack.c.b16 %v2099, %v2098
        %v2111 = vpack.c.b16 %v2101, %v2100
        %v2112 = vpack.c.b16 %v2103, %v2102
        %v2113 = vpack.c.b16 %v2105, %v2104
        %2122 = vmatprep.subr.bf16.mxu0 0
        %2123 = vmatpush1.bf16.msra.mxu0 %v2113
        %2124 = vmatprep.subr.bf16.mxu0 0
        %2125 = vmatpush1.bf16.msra.mxu0 %v2112
        %2126 = vmatprep.subr.bf16.mxu0 0
        %2127 = vmatpush1.bf16.msra.mxu0 %v2111
        %2128 = vmatprep.subr.bf16.mxu0 0
        %2129 = vmatpush1.bf16.msra.mxu0 %v2110
        %2130 = vmatprep.subr.bf16.mxu0 0
        %2131 = vmatpush1.bf16.msra.mxu0 %v2109
        %2132 = vmatprep.subr.bf16.mxu0 0
        %2133 = vmatpush1.bf16.msra.mxu0 %v2108
        %2134 = vmatprep.subr.bf16.mxu0 0
        %2135 = vmatpush1.bf16.msra.mxu0 %v2107
        %2136 = vmatprep.subr.bf16.mxu0 0
        %2137 = vmatpush1.bf16.msra.mxu0 %v2106
        %2138 = vmatprep.subr.bf16.mxu0 0
        %2139 = vmatpush2.bf16.msra.mxu0 0
        %2140 = vmatprep.subr.bf16.mxu0 0
        %2141 = vmatpush2.bf16.msra.mxu0 0
        %2142 = vmatprep.subr.bf16.mxu0 0
        %2143 = vmatpush2.bf16.msra.mxu0 0
        %2144 = vmatprep.subr.bf16.mxu0 0
        %2145 = vmatpush2.bf16.msra.mxu0 0
        %2146 = vmatprep.subr.bf16.mxu0 0
        %2147 = vmatpush2.bf16.msra.mxu0 0
        %2148 = vmatprep.subr.bf16.mxu0 0
        %2149 = vmatpush2.bf16.msra.mxu0 0
        %2150 = vmatprep.subr.bf16.mxu0 0
        %2151 = vmatpush2.bf16.msra.mxu0 0
        %2152 = vmatprep.subr.bf16.mxu0 0
        %2153 = vmatpush2.bf16.msra.mxu0 0
        %2154 = vmatprep.mubr.bf16.mxu0 0
        %2155 = vmatmul.mubr.bf16.gmra.mxu0 %v2052
        %v2156 = vpop.f32.mrf.mxu0
        %v2157 = vadd.f32 %v2073, %v2156
        %v2158 = vpop.f32.mrf.mxu0
        %v2159 = vpop.f32.mrf.mxu0
        %v2160 = vpop.f32.mrf.mxu0
        %2161 = vdwg.mxu0
        %v2162 = vadd.f32 %v1969, %v2157
        %v2163 = vsel %vm463, %v2162, 0.0
        %2164 = vadd.xlane.f32.xlu0 %v2163
        %v2165 = vpop.xlane.xlu0 %2164
        %v2166 = vmul.f32 %v2165, %v1062
        %v2167 = vsub.f32 %v2162, %v2166
        %v2168 = vmul.f32 %v2167, %v2167
        %v2169 = vsel %vm463, %v2168, 0.0
        %2170 = vadd.xlane.f32.xlu0 %v2169
        %v2171 = vpop.xlane.xlu0 %2170
        %v2172 = vmul.f32 %v2171, %v1062
        %v2173 = vadd.f32 %v2172, 1e-05
        %v2174 = vrsqrt.pop %v2173
        %v2175 = vmul.f32 %v2167, %v2174
        %v2176 = vlaneseq
        %v2177 = vshrl.u32 %v2176, 7
        %v2178 = vsub.s32 5, %v2177
        %v2179 = vrot.slane %v1298, %v2178
        %v2180 = vmul.f32 %v2175, %v2179
        %v2181 = vlaneseq
        %v2182 = vshrl.u32 %v2181, 7
        %v2183 = vsub.s32 6, %v2182
        %v2184 = vrot.slane %v1298, %v2183
        %v2185 = vadd.f32 %v2180, %v2184
        %v2187 = vsel %vm567, %v399, 0
        %2189 = vmatprep.subr.mxu0 0.0
        %2190 = vmatpush1.msra.mxu0 0.0
        %2191 = vmatprep.subr.mxu0 0.0
        %2192 = vmatpush1.msra.mxu0 0.0
        %2193 = vmatprep.subr.mxu0 0.0
        %2194 = vmatpush1.msra.mxu0 0.0
        %2195 = vmatprep.subr.mxu0 0.0
        %2196 = vmatpush1.msra.mxu0 0.0
        %2197 = vmatprep.subr.mxu0 0.0
        %2198 = vmatpush1.msra.mxu0 0.0
        %2199 = vmatprep.subr.mxu0 0.0
        %2200 = vmatpush1.msra.mxu0 0.0
        %2201 = vmatprep.subr.mxu0 0.0
        %2202 = vmatpush1.msra.mxu0 0.0
        %2203 = vmatprep.subr.mxu0 0.0
        %2204 = vmatpush1.msra.mxu0 0.0
        %2205 = vmatprep.subr.mxu0 0.0
        %2206 = vmatpush1.msra.mxu0 0.0
        %2207 = vmatprep.subr.mxu0 0.0
        %2208 = vmatpush1.msra.mxu0 0.0
        %2209 = vmatprep.subr.mxu0 0.0
        %2210 = vmatpush1.msra.mxu0 0.0
        %2211 = vmatprep.subr.mxu0 0.0
        %2212 = vmatpush1.msra.mxu0 0.0
        %2213 = vmatprep.subr.mxu0 0.0
        %2214 = vmatpush1.msra.mxu0 0.0
        %2215 = vmatprep.subr.mxu0 0.0
        %2216 = vmatpush1.msra.mxu0 0.0
        %2217 = vmatprep.subr.mxu0 0.0
        %2218 = vmatpush1.msra.mxu0 0.0
        %2219 = vmatprep.subr.mxu0 0.0
        %2220 = vmatpush1.msra.mxu0 %v2185
        %2221 = vmatprep.subr.mxu0 0.0
        %2222 = vmatpush2.msra.mxu0 0.0
        %2223 = vmatprep.subr.mxu0 0.0
        %2224 = vmatpush2.msra.mxu0 0.0
        %2225 = vmatprep.subr.mxu0 0.0
        %2226 = vmatpush2.msra.mxu0 0.0
        %2227 = vmatprep.subr.mxu0 0.0
        %2228 = vmatpush2.msra.mxu0 0.0
        %2229 = vmatprep.subr.mxu0 0.0
        %2230 = vmatpush2.msra.mxu0 0.0
        %2231 = vmatprep.subr.mxu0 0.0
        %2232 = vmatpush2.msra.mxu0 0.0
        %2233 = vmatprep.subr.mxu0 0.0
        %2234 = vmatpush2.msra.mxu0 0.0
        %2235 = vmatprep.subr.mxu0 0.0
        %2236 = vmatpush2.msra.mxu0 0.0
        %2237 = vmatprep.subr.mxu0 0.0
        %2238 = vmatpush2.msra.mxu0 0.0
        %2239 = vmatprep.subr.mxu0 0.0
        %2240 = vmatpush2.msra.mxu0 0.0
        %2241 = vmatprep.subr.mxu0 0.0
        %2242 = vmatpush2.msra.mxu0 0.0
        %2243 = vmatprep.subr.mxu0 0.0
        %2244 = vmatpush2.msra.mxu0 0.0
        %2245 = vmatprep.subr.mxu0 0.0
        %2246 = vmatpush2.msra.mxu0 0.0
        %2247 = vmatprep.subr.mxu0 0.0
        %2248 = vmatpush2.msra.mxu0 0.0
        %2249 = vmatprep.subr.mxu0 0.0
        %2250 = vmatpush2.msra.mxu0 0.0
        %2251 = vmatprep.subr.mxu0 0.0
        %2252 = vmatpush2.msra.mxu0 0.0
        %2253 = vmatprep.mubr.f32.mxu0 0.0
        %2254 = vmatmul.mubr.f32.gmra.mxu0 %v2187
        %v2255 = vpop.f32.mrf.mxu0
        %v2256 = vadd.f32 0.0, %v2255
        %v2257 = vpop.f32.mrf.mxu0
        %2258 = vdwg.mxu0
        %vm2259 = vcmask 57344
        %v2260 = vsel %vm2259, %v399, 0.0
        %2261 = vadd.xlane.f32.xlu0 %v2260
        %v2262 = vpop.xlane.xlu0 %2261
        %v2263 = vrcp.pop %v2262
        %v2264 = vmul.f32 %v2256, %v2263
        %v2265 = vld [vmem:[%s396] sm:$0x1]
        %v2266 = vld [vmem:[%s9] sm:$0xff]
        %v2267 = vld [vmem:[%s9 + $0x8] sm:$0x3]
        %v2268 = vld [vmem:[%s9 + $0xa] sm:$0x1]
        %vm2269 = vcmask 80896
        %v2271 = vsel %vm2269, %v2265, 0
        %vm2273 = vcmask 1041408
        %v2275 = vsel %vm2273, %v2267, 0
        %2277 = vmatprep.subr.mxu0 0.0
        %2278 = vmatpush1.msra.mxu0 0.0
        %2279 = vmatprep.subr.mxu0 0.0
        %2280 = vmatpush1.msra.mxu0 0.0
        %2281 = vmatprep.subr.mxu0 0.0
        %2282 = vmatpush1.msra.mxu0 0.0
        %2283 = vmatprep.subr.mxu0 0.0
        %2284 = vmatpush1.msra.mxu0 0.0
        %2285 = vmatprep.subr.mxu0 0.0
        %2286 = vmatpush1.msra.mxu0 0.0
        %2287 = vmatprep.subr.mxu0 0.0
        %2288 = vmatpush1.msra.mxu0 0.0
        %2289 = vmatprep.subr.mxu0 0.0
        %2290 = vmatpush1.msra.mxu0 0.0
        %2291 = vmatprep.subr.mxu0 0.0
        %2292 = vmatpush1.msra.mxu0 0.0
        %2293 = vmatprep.subr.mxu0 0.0
        %2294 = vmatpush1.msra.mxu0 0.0
        %2295 = vmatprep.subr.mxu0 0.0
        %2296 = vmatpush1.msra.mxu0 0.0
        %2297 = vmatprep.subr.mxu0 0.0
        %2298 = vmatpush1.msra.mxu0 0.0
        %2299 = vmatprep.subr.mxu0 0.0
        %2300 = vmatpush1.msra.mxu0 0.0
        %2301 = vmatprep.subr.mxu0 0.0
        %2302 = vmatpush1.msra.mxu0 0.0
        %2303 = vmatprep.subr.mxu0 0.0
        %2304 = vmatpush1.msra.mxu0 0.0
        %2305 = vmatprep.subr.mxu0 0.0
        %2306 = vmatpush1.msra.mxu0 %v2275
        %2307 = vmatprep.subr.mxu0 0.0
        %2308 = vmatpush1.msra.mxu0 %v2266
        %2309 = vmatprep.subr.mxu0 0.0
        %2310 = vmatpush2.msra.mxu0 0.0
        %2311 = vmatprep.subr.mxu0 0.0
        %2312 = vmatpush2.msra.mxu0 0.0
        %2313 = vmatprep.subr.mxu0 0.0
        %2314 = vmatpush2.msra.mxu0 0.0
        %2315 = vmatprep.subr.mxu0 0.0
        %2316 = vmatpush2.msra.mxu0 0.0
        %2317 = vmatprep.subr.mxu0 0.0
        %2318 = vmatpush2.msra.mxu0 0.0
        %2319 = vmatprep.subr.mxu0 0.0
        %2320 = vmatpush2.msra.mxu0 0.0
        %2321 = vmatprep.subr.mxu0 0.0
        %2322 = vmatpush2.msra.mxu0 0.0
        %2323 = vmatprep.subr.mxu0 0.0
        %2324 = vmatpush2.msra.mxu0 0.0
        %2325 = vmatprep.subr.mxu0 0.0
        %2326 = vmatpush2.msra.mxu0 0.0
        %2327 = vmatprep.subr.mxu0 0.0
        %2328 = vmatpush2.msra.mxu0 0.0
        %2329 = vmatprep.subr.mxu0 0.0
        %2330 = vmatpush2.msra.mxu0 0.0
        %2331 = vmatprep.subr.mxu0 0.0
        %2332 = vmatpush2.msra.mxu0 0.0
        %2333 = vmatprep.subr.mxu0 0.0
        %2334 = vmatpush2.msra.mxu0 0.0
        %2335 = vmatprep.subr.mxu0 0.0
        %2336 = vmatpush2.msra.mxu0 0.0
        %2337 = vmatprep.subr.mxu0 0.0
        %2338 = vmatpush2.msra.mxu0 0.0
        %2339 = vmatprep.subr.mxu0 0.0
        %2340 = vmatpush2.msra.mxu0 0.0
        %2341 = vmatprep.mubr.f32.mxu0 0.0
        %2342 = vmatmul.mubr.f32.gmra.mxu0 %v2271
        %v2343 = vpop.f32.mrf.mxu0
        %v2344 = vadd.f32 %v2268, %v2343
        %v2345 = vpop.f32.mrf.mxu0
        %2346 = vdwg.mxu0
        %v2347 = vmax.f32 %v2344, 0.0
        %v2348 = vld [vmem:[%s9 + $0xb] sm:$0xff]
        %v2349 = vld [vmem:[%s9 + $0x13] sm:$0xff]
        %v2350 = vld [vmem:[%s9 + $0x1b] sm:$0xff]
        %v2351 = vld [vmem:[%s9 + $0x23] sm:$0xff]
        %v2352 = vld [vmem:[%s9 + $0x2b] sm:$0x1]
        %v2354 = vsel %vm974, %v2347, 0
        %2356 = vmatprep.subr.mxu0 0.0
        %2357 = vmatpush1.msra.mxu0 0.0
        %2358 = vmatprep.subr.mxu0 0.0
        %2359 = vmatpush1.msra.mxu0 0.0
        %2360 = vmatprep.subr.mxu0 0.0
        %2361 = vmatpush1.msra.mxu0 0.0
        %2362 = vmatprep.subr.mxu0 0.0
        %2363 = vmatpush1.msra.mxu0 0.0
        %2364 = vmatprep.subr.mxu0 0.0
        %2365 = vmatpush1.msra.mxu0 0.0
        %2366 = vmatprep.subr.mxu0 0.0
        %2367 = vmatpush1.msra.mxu0 0.0
        %2368 = vmatprep.subr.mxu0 0.0
        %2369 = vmatpush1.msra.mxu0 0.0
        %2370 = vmatprep.subr.mxu0 0.0
        %2371 = vmatpush1.msra.mxu0 0.0
        %2372 = vmatprep.subr.mxu0 0.0
        %2373 = vmatpush1.msra.mxu0 0.0
        %2374 = vmatprep.subr.mxu0 0.0
        %2375 = vmatpush1.msra.mxu0 0.0
        %2376 = vmatprep.subr.mxu0 0.0
        %2377 = vmatpush1.msra.mxu0 0.0
        %2378 = vmatprep.subr.mxu0 0.0
        %2379 = vmatpush1.msra.mxu0 0.0
        %2380 = vmatprep.subr.mxu0 0.0
        %2381 = vmatpush1.msra.mxu0 %v2351
        %2382 = vmatprep.subr.mxu0 0.0
        %2383 = vmatpush1.msra.mxu0 %v2350
        %2384 = vmatprep.subr.mxu0 0.0
        %2385 = vmatpush1.msra.mxu0 %v2349
        %2386 = vmatprep.subr.mxu0 0.0
        %2387 = vmatpush1.msra.mxu0 %v2348
        %2388 = vmatprep.subr.mxu0 0.0
        %2389 = vmatpush2.msra.mxu0 0.0
        %2390 = vmatprep.subr.mxu0 0.0
        %2391 = vmatpush2.msra.mxu0 0.0
        %2392 = vmatprep.subr.mxu0 0.0
        %2393 = vmatpush2.msra.mxu0 0.0
        %2394 = vmatprep.subr.mxu0 0.0
        %2395 = vmatpush2.msra.mxu0 0.0
        %2396 = vmatprep.subr.mxu0 0.0
        %2397 = vmatpush2.msra.mxu0 0.0
        %2398 = vmatprep.subr.mxu0 0.0
        %2399 = vmatpush2.msra.mxu0 0.0
        %2400 = vmatprep.subr.mxu0 0.0
        %2401 = vmatpush2.msra.mxu0 0.0
        %2402 = vmatprep.subr.mxu0 0.0
        %2403 = vmatpush2.msra.mxu0 0.0
        %2404 = vmatprep.subr.mxu0 0.0
        %2405 = vmatpush2.msra.mxu0 0.0
        %2406 = vmatprep.subr.mxu0 0.0
        %2407 = vmatpush2.msra.mxu0 0.0
        %2408 = vmatprep.subr.mxu0 0.0
        %2409 = vmatpush2.msra.mxu0 0.0
        %2410 = vmatprep.subr.mxu0 0.0
        %2411 = vmatpush2.msra.mxu0 0.0
        %2412 = vmatprep.subr.mxu0 0.0
        %2413 = vmatpush2.msra.mxu0 0.0
        %2414 = vmatprep.subr.mxu0 0.0
        %2415 = vmatpush2.msra.mxu0 0.0
        %2416 = vmatprep.subr.mxu0 0.0
        %2417 = vmatpush2.msra.mxu0 0.0
        %2418 = vmatprep.subr.mxu0 0.0
        %2419 = vmatpush2.msra.mxu0 0.0
        %2420 = vmatprep.mubr.f32.mxu0 0.0
        %2421 = vmatmul.mubr.f32.gmra.mxu0 %v2354
        %v2422 = vpop.f32.mrf.mxu0
        %v2423 = vadd.f32 %v2352, %v2422
        %v2424 = vpop.f32.mrf.mxu0
        %2425 = vdwg.mxu0
        %v2426 = vld [vmem:[%s9 + $0x2c] sm:$0xff]
        %v2427 = vld [vmem:[%s9 + $0x34] sm:$0xff]
        %v2428 = vld [vmem:[%s9 + $0x3c] sm:$0xff]
        %v2429 = vld [vmem:[%s9 + $0x44] sm:$0xff]
        %v2430 = vld [vmem:[%s9 + $0x4c] sm:$0xff]
        %v2431 = vld [vmem:[%s9 + $0x54] sm:$0xff]
        %v2432 = vld [vmem:[%s9 + $0x5c] sm:$0xff]
        %v2433 = vld [vmem:[%s9 + $0x64] sm:$0xff]
        %v2434 = vld [vmem:[%s9 + $0x6c] sm:$0xff]
        %v2435 = vld [vmem:[%s9 + $0x74] sm:$0xff]
        %v2436 = vld [vmem:[%s9 + $0x7c] sm:$0xff]
        %v2437 = vld [vmem:[%s9 + $0x84] sm:$0xff]
        %v2439 = vsel %vm974, %v2423, 0
        %2441 = vmatprep.subr.mxu0 0.0
        %2442 = vmatpush1.msra.mxu0 0.0
        %2443 = vmatprep.subr.mxu0 0.0
        %2444 = vmatpush1.msra.mxu0 0.0
        %2445 = vmatprep.subr.mxu0 0.0
        %2446 = vmatpush1.msra.mxu0 0.0
        %2447 = vmatprep.subr.mxu0 0.0
        %2448 = vmatpush1.msra.mxu0 0.0
        %2449 = vmatprep.subr.mxu0 0.0
        %2450 = vmatpush1.msra.mxu0 0.0
        %2451 = vmatprep.subr.mxu0 0.0
        %2452 = vmatpush1.msra.mxu0 0.0
        %2453 = vmatprep.subr.mxu0 0.0
        %2454 = vmatpush1.msra.mxu0 0.0
        %2455 = vmatprep.subr.mxu0 0.0
        %2456 = vmatpush1.msra.mxu0 0.0
        %2457 = vmatprep.subr.mxu0 0.0
        %2458 = vmatpush1.msra.mxu0 0.0
        %2459 = vmatprep.subr.mxu0 0.0
        %2460 = vmatpush1.msra.mxu0 0.0
        %2461 = vmatprep.subr.mxu0 0.0
        %2462 = vmatpush1.msra.mxu0 0.0
        %2463 = vmatprep.subr.mxu0 0.0
        %2464 = vmatpush1.msra.mxu0 0.0
        %2465 = vmatprep.subr.mxu0 0.0
        %2466 = vmatpush1.msra.mxu0 %v2437
        %2467 = vmatprep.subr.mxu0 0.0
        %2468 = vmatpush1.msra.mxu0 %v2436
        %2469 = vmatprep.subr.mxu0 0.0
        %2470 = vmatpush1.msra.mxu0 %v2435
        %2471 = vmatprep.subr.mxu0 0.0
        %2472 = vmatpush1.msra.mxu0 %v2434
        %2473 = vmatprep.subr.mxu0 0.0
        %2474 = vmatpush2.msra.mxu0 0.0
        %2475 = vmatprep.subr.mxu0 0.0
        %2476 = vmatpush2.msra.mxu0 0.0
        %2477 = vmatprep.subr.mxu0 0.0
        %2478 = vmatpush2.msra.mxu0 0.0
        %2479 = vmatprep.subr.mxu0 0.0
        %2480 = vmatpush2.msra.mxu0 0.0
        %2481 = vmatprep.subr.mxu0 0.0
        %2482 = vmatpush2.msra.mxu0 0.0
        %2483 = vmatprep.subr.mxu0 0.0
        %2484 = vmatpush2.msra.mxu0 0.0
        %2485 = vmatprep.subr.mxu0 0.0
        %2486 = vmatpush2.msra.mxu0 0.0
        %2487 = vmatprep.subr.mxu0 0.0
        %2488 = vmatpush2.msra.mxu0 0.0
        %2489 = vmatprep.subr.mxu0 0.0
        %2490 = vmatpush2.msra.mxu0 0.0
        %2491 = vmatprep.subr.mxu0 0.0
        %2492 = vmatpush2.msra.mxu0 0.0
        %2493 = vmatprep.subr.mxu0 0.0
        %2494 = vmatpush2.msra.mxu0 0.0
        %2495 = vmatprep.subr.mxu0 0.0
        %2496 = vmatpush2.msra.mxu0 0.0
        %2497 = vmatprep.subr.mxu0 0.0
        %2498 = vmatpush2.msra.mxu0 0.0
        %2499 = vmatprep.subr.mxu0 0.0
        %2500 = vmatpush2.msra.mxu0 0.0
        %2501 = vmatprep.subr.mxu0 0.0
        %2502 = vmatpush2.msra.mxu0 0.0
        %2503 = vmatprep.subr.mxu0 0.0
        %2504 = vmatpush2.msra.mxu0 0.0
        %2505 = vmatprep.mubr.f32.mxu0 0.0
        %2506 = vmatmul.mubr.f32.gmra.mxu0 %v2439
        %v2507 = vpop.f32.mrf.mxu0
        %v2508 = vadd.f32 0.0, %v2507
        %v2509 = vpop.f32.mrf.mxu0
        %2510 = vdwg.mxu0
        %v2512 = vsel %vm463, %v2264, 0
        %2514 = vmatprep.subr.mxu0 0.0
        %2515 = vmatpush1.msra.mxu0 0.0
        %2516 = vmatprep.subr.mxu0 0.0
        %2517 = vmatpush1.msra.mxu0 0.0
        %2518 = vmatprep.subr.mxu0 0.0
        %2519 = vmatpush1.msra.mxu0 0.0
        %2520 = vmatprep.subr.mxu0 0.0
        %2521 = vmatpush1.msra.mxu0 0.0
        %2522 = vmatprep.subr.mxu0 0.0
        %2523 = vmatpush1.msra.mxu0 0.0
        %2524 = vmatprep.subr.mxu0 0.0
        %2525 = vmatpush1.msra.mxu0 0.0
        %2526 = vmatprep.subr.mxu0 0.0
        %2527 = vmatpush1.msra.mxu0 0.0
        %2528 = vmatprep.subr.mxu0 0.0
        %2529 = vmatpush1.msra.mxu0 0.0
        %2530 = vmatprep.subr.mxu0 0.0
        %2531 = vmatpush1.msra.mxu0 %v2433
        %2532 = vmatprep.subr.mxu0 0.0
        %2533 = vmatpush1.msra.mxu0 %v2432
        %2534 = vmatprep.subr.mxu0 0.0
        %2535 = vmatpush1.msra.mxu0 %v2431
        %2536 = vmatprep.subr.mxu0 0.0
        %2537 = vmatpush1.msra.mxu0 %v2430
        %2538 = vmatprep.subr.mxu0 0.0
        %2539 = vmatpush1.msra.mxu0 %v2429
        %2540 = vmatprep.subr.mxu0 0.0
        %2541 = vmatpush1.msra.mxu0 %v2428
        %2542 = vmatprep.subr.mxu0 0.0
        %2543 = vmatpush1.msra.mxu0 %v2427
        %2544 = vmatprep.subr.mxu0 0.0
        %2545 = vmatpush1.msra.mxu0 %v2426
        %2546 = vmatprep.subr.mxu0 0.0
        %2547 = vmatpush2.msra.mxu0 0.0
        %2548 = vmatprep.subr.mxu0 0.0
        %2549 = vmatpush2.msra.mxu0 0.0
        %2550 = vmatprep.subr.mxu0 0.0
        %2551 = vmatpush2.msra.mxu0 0.0
        %2552 = vmatprep.subr.mxu0 0.0
        %2553 = vmatpush2.msra.mxu0 0.0
        %2554 = vmatprep.subr.mxu0 0.0
        %2555 = vmatpush2.msra.mxu0 0.0
        %2556 = vmatprep.subr.mxu0 0.0
        %2557 = vmatpush2.msra.mxu0 0.0
        %2558 = vmatprep.subr.mxu0 0.0
        %2559 = vmatpush2.msra.mxu0 0.0
        %2560 = vmatprep.subr.mxu0 0.0
        %2561 = vmatpush2.msra.mxu0 0.0
        %2562 = vmatprep.subr.mxu0 0.0
        %2563 = vmatpush2.msra.mxu0 0.0
        %2564 = vmatprep.subr.mxu0 0.0
        %2565 = vmatpush2.msra.mxu0 0.0
        %2566 = vmatprep.subr.mxu0 0.0
        %2567 = vmatpush2.msra.mxu0 0.0
        %2568 = vmatprep.subr.mxu0 0.0
        %2569 = vmatpush2.msra.mxu0 0.0
        %2570 = vmatprep.subr.mxu0 0.0
        %2571 = vmatpush2.msra.mxu0 0.0
        %2572 = vmatprep.subr.mxu0 0.0
        %2573 = vmatpush2.msra.mxu0 0.0
        %2574 = vmatprep.subr.mxu0 0.0
        %2575 = vmatpush2.msra.mxu0 0.0
        %2576 = vmatprep.subr.mxu0 0.0
        %2577 = vmatpush2.msra.mxu0 0.0
        %2578 = vmatprep.mubr.f32.mxu0 0.0
        %2579 = vmatmul.mubr.f32.gmra.mxu0 %v2512
        %v2580 = vpop.f32.mrf.mxu0
        %v2581 = vadd.f32 %v2508, %v2580
        %v2582 = vpop.f32.mrf.mxu0
        %2583 = vdwg.mxu0
        %v2584 = vld [vmem:[%s9 + $0x8c] sm:$0x1]
        %v2585 = vadd.f32 %v2581, %v2584
        %v2586 = vmax.f32 %v2585, 0.0
        %v2587 = vld [vmem:[%s9 + $0x8d] sm:$0xff]
        %v2588 = vld [vmem:[%s9 + $0x95] sm:$0xff]
        %v2589 = vld [vmem:[%s9 + $0x9d] sm:$0xff]
        %v2590 = vld [vmem:[%s9 + $0xa5] sm:$0xff]
        %v2591 = vld [vmem:[%s9 + $0xad] sm:$0xff]
        %v2592 = vld [vmem:[%s9 + $0xb5] sm:$0xff]
        %v2593 = vld [vmem:[%s9 + $0xbd] sm:$0xff]
        %v2594 = vld [vmem:[%s9 + $0xc5] sm:$0xff]
        %v2595 = vld [vmem:[%s9 + $0xcd] sm:$0x1]
        %v2597 = vsel %vm463, %v2586, 0
        %2599 = vmatprep.subr.mxu0 0.0
        %2600 = vmatpush1.msra.mxu0 0.0
        %2601 = vmatprep.subr.mxu0 0.0
        %2602 = vmatpush1.msra.mxu0 0.0
        %2603 = vmatprep.subr.mxu0 0.0
        %2604 = vmatpush1.msra.mxu0 0.0
        %2605 = vmatprep.subr.mxu0 0.0
        %2606 = vmatpush1.msra.mxu0 0.0
        %2607 = vmatprep.subr.mxu0 0.0
        %2608 = vmatpush1.msra.mxu0 0.0
        %2609 = vmatprep.subr.mxu0 0.0
        %2610 = vmatpush1.msra.mxu0 0.0
        %2611 = vmatprep.subr.mxu0 0.0
        %2612 = vmatpush1.msra.mxu0 0.0
        %2613 = vmatprep.subr.mxu0 0.0
        %2614 = vmatpush1.msra.mxu0 0.0
        %2615 = vmatprep.subr.mxu0 0.0
        %2616 = vmatpush1.msra.mxu0 %v2594
        %2617 = vmatprep.subr.mxu0 0.0
        %2618 = vmatpush1.msra.mxu0 %v2593
        %2619 = vmatprep.subr.mxu0 0.0
        %2620 = vmatpush1.msra.mxu0 %v2592
        %2621 = vmatprep.subr.mxu0 0.0
        %2622 = vmatpush1.msra.mxu0 %v2591
        %2623 = vmatprep.subr.mxu0 0.0
        %2624 = vmatpush1.msra.mxu0 %v2590
        %2625 = vmatprep.subr.mxu0 0.0
        %2626 = vmatpush1.msra.mxu0 %v2589
        %2627 = vmatprep.subr.mxu0 0.0
        %2628 = vmatpush1.msra.mxu0 %v2588
        %2629 = vmatprep.subr.mxu0 0.0
        %2630 = vmatpush1.msra.mxu0 %v2587
        %2631 = vmatprep.subr.mxu0 0.0
        %2632 = vmatpush2.msra.mxu0 0.0
        %2633 = vmatprep.subr.mxu0 0.0
        %2634 = vmatpush2.msra.mxu0 0.0
        %2635 = vmatprep.subr.mxu0 0.0
        %2636 = vmatpush2.msra.mxu0 0.0
        %2637 = vmatprep.subr.mxu0 0.0
        %2638 = vmatpush2.msra.mxu0 0.0
        %2639 = vmatprep.subr.mxu0 0.0
        %2640 = vmatpush2.msra.mxu0 0.0
        %2641 = vmatprep.subr.mxu0 0.0
        %2642 = vmatpush2.msra.mxu0 0.0
        %2643 = vmatprep.subr.mxu0 0.0
        %2644 = vmatpush2.msra.mxu0 0.0
        %2645 = vmatprep.subr.mxu0 0.0
        %2646 = vmatpush2.msra.mxu0 0.0
        %2647 = vmatprep.subr.mxu0 0.0
        %2648 = vmatpush2.msra.mxu0 0.0
        %2649 = vmatprep.subr.mxu0 0.0
        %2650 = vmatpush2.msra.mxu0 0.0
        %2651 = vmatprep.subr.mxu0 0.0
        %2652 = vmatpush2.msra.mxu0 0.0
        %2653 = vmatprep.subr.mxu0 0.0
        %2654 = vmatpush2.msra.mxu0 0.0
        %2655 = vmatprep.subr.mxu0 0.0
        %2656 = vmatpush2.msra.mxu0 0.0
        %2657 = vmatprep.subr.mxu0 0.0
        %2658 = vmatpush2.msra.mxu0 0.0
        %2659 = vmatprep.subr.mxu0 0.0
        %2660 = vmatpush2.msra.mxu0 0.0
        %2661 = vmatprep.subr.mxu0 0.0
        %2662 = vmatpush2.msra.mxu0 0.0
        %2663 = vmatprep.mubr.f32.mxu0 0.0
        %2664 = vmatmul.mubr.f32.gmra.mxu0 %v2597
        %v2665 = vpop.f32.mrf.mxu0
        %v2666 = vadd.f32 %v2595, %v2665
        %v2667 = vpop.f32.mrf.mxu0
        %2668 = vdwg.mxu0
        %2669 = vst [vmem:[%s386] sm:$0x1] %v2666
        %s2670 = sand.u32 %s258, 1
        %s2671 = scalar_lea.sflag [#allocation4], %s2670
        %s2672 = sand.u32 %s258, 1
        %s2673 = scalar_lea.vmem [#allocation5], %s2672
        // Predicated region
        $region65: #{simplified_m3t_forward.1} parent=59 // pred_check
          %p2674 = pneg %p268
        $region66: #{simplified_m3t_forward.1} parent=59 // pred_check_branch
          %2676 = sbr.rel (%p2674) target = $region68
        $region67: #{simplified_m3t_forward.1} parent=59 // pred_region
          %s2678 = ssub.s32 16, 16
          %2679 = vsyncadd %s2671, %s2678
          %s2680 = smul.addr %s25, 16
          %s2681 = scalar_lea.hbm %s10, %s2680
          %s2683 = sshll.u32 %s2673, 4
          %s2684 = int_to_ptr.vmem [resolvable:$true] %s2683
          %2686 = dma.vmem_to_hbm [thread:$0]  %s2684, 16, %s2681, %s2671
        $region68: #{simplified_m3t_forward.1} parent=59 // pred_fallthru
          _
      $region60: #{simplified_m3t_forward.1} parent=5 // pred_fallthru
        _
      %p2687 = scmp.le.s32.totalorder 2, %s20
      // Predicated region
      $region69: #{simplified_m3t_forward.1} parent=5 // pred_check
        %p2688 = pneg %p2687
      $region70: #{simplified_m3t_forward.1} parent=5 // pred_check_branch
        %2690 = sbr.rel (%p2688) target = $region72
      $region71: #{simplified_m3t_forward.1} parent=5 // pred_region
        %s2691 = ssub.s32 %s20, 2
        // Predicated region
        $region73: #{simplified_m3t_forward.1} parent=71 // pred_check
          %p2692 = pneg %p274
        $region74: #{simplified_m3t_forward.1} parent=71 // pred_check_branch
          %2694 = sbr.rel (%p2692) target = $region76
        $region75: #{simplified_m3t_forward.1} parent=71 // pred_region
          %s2695 = sand.u32 %s259, 1
          %s2696 = scalar_lea.sflag [#allocation4], %s2695
          %s2697 = sand.u32 %s259, 1
          %s2698 = scalar_lea.vmem [#allocation5], %s2697
          %2699 = dma.done %s2696, 16
        $region76: #{simplified_m3t_forward.1} parent=71 // pred_fallthru
          _
      $region72: #{simplified_m3t_forward.1} parent=5 // pred_fallthru
        _
    $region6: #{simplified_m3t_forward.1} parent=1 // loop_footer
      %s24 = sadd.s32 1, %s20
    $region7: #{simplified_m3t_forward.1} parent=1 // loop_footer_branch
      %19 = sbr.rel target = $region3
    $region8: #{simplified_m3t_forward.1} parent=1 // loop_exit
      _
    %2700 = vsyncpa [#allocation3], 1
    %s2701 = scalar_lea.sflag [#allocation3], 1
    %2702 = vsyncpa %s2701, 1
    %2703 = vsyncpa [#allocation4], 1
    %s2704 = scalar_lea.sflag [#allocation4], 1
    %2705 = vsyncpa %s2704, 1

</llo_original>
